<compile_context>
chip_gen: v7x
topology: tpu7x:2x2x1
jax: 0.10.0
libtpu: 0.0.40
codegen_flags: <defaults>
</compile_context>

<pallas_src>
import functools

import jax
import jax.numpy as jnp
from jax.experimental import pallas as pl
from jax.experimental.pallas import tpu as pltpu


# ----------------------------- in-kernel math -----------------------------

def _layer_norm(x, g, b, eps=1e-5):
    mu = jnp.mean(x, axis=-1, keepdims=True)
    var = jnp.mean((x - mu) ** 2, axis=-1, keepdims=True)
    return (x - mu) * jax.lax.rsqrt(var + eps) * g + b


def _quick_gelu(x):
    # CLIP uses quick_gelu: x * sigmoid(1.702 * x)
    return x * jax.nn.sigmoid(1.702 * x)


def _default_vmem_limit_bytes(frac=0.85):
    """~85% of per-core VMEM; conservative 64 MiB (v7x) fallback if undetectable."""
    cap = 64 * 1024 * 1024
    try:
        cap = pltpu.get_tpu_info().vmem_capacity_bytes
    except Exception:
        pass
    return max(min(int(cap * frac), 112 * 1024 * 1024), 32 * 1024 * 1024)


# ----------------------------- fused kernel -----------------------------

# Packed small-param row layout in the (L, 9, D) array:
#   0: ln1_gamma  1: ln1_beta  2: bq*scale  3: bk  4: bv  5: bo
#   6: ln2_gamma  7: ln2_beta  8: b2

def fused_clip_layers_kernel(x_ref, wqkv_ref, wo_ref, w1_ref, w2_ref,
                             small_ref, b1_ref, fin_ref, o_ref, *, num_heads):
    """One CLIPEncoderLayer per (layer) grid step on a VMEM-resident carry.

    Grid = (batch_blocks, num_layers).  The output block index is constant across the
    layer axis, so o_ref is the residual-stream carry; at layer 0 it is seeded from
    x_ref, and the final LayerNorm is applied in place on the last layer.
    """
    l = pl.program_id(1)
    last = pl.num_programs(1) - 1

    @pl.when(l == 0)
    def _():
        o_ref[...] = x_ref[...]

    Bt, S, D = o_ref.shape
    H = num_heads
    hd = D // H
    M = Bt * S
    w_dtype = wqkv_ref.dtype                      # MXU input dtype (f32 or bf16)

    x = o_ref[...].reshape(M, D).astype(jnp.float32)       # residual stream (f32)

    small = small_ref[0]                          # (9, D) packed per-layer params
    ln1g, ln1b = small[0], small[1]
    bq, bk, bv, bo = small[2], small[3], small[4], small[5]
    ln2g, ln2b, b2 = small[6], small[7], small[8]

    # ---- self-attention block (residual around it) ----
    h = _layer_norm(x, ln1g, ln1b).astype(w_dtype)
    # fused QKV projection: one (M, D) @ (D, 3D) matmul; scale folded into Wq/bq
    qkv = jnp.dot(h, wqkv_ref[0], preferred_element_type=jnp.float32)   # (M, 3D)

    def heads_T(z):
        # (M, D) f32 -> (Bt*H, hd, S) in the matmul dtype, via one minor-dim
        # transpose; the reshapes are pure row-major regroups (layout no-ops).
        zT = jnp.swapaxes(z.astype(w_dtype).reshape(Bt, S, D), 1, 2)    # (Bt, D, S)
        return zT.reshape(Bt * H, hd, S)

    qT = heads_T(qkv[:, :D] + bq)
    kT = heads_T(qkv[:, D:2 * D] + bk)
    vT = heads_T(qkv[:, 2 * D:] + bv)
    qh = jnp.swapaxes(qT, 1, 2)                                         # (Bt*H, S, hd)

    # head-batched scores / softmax / context (single batch dim = Bt*H)
    s = jnp.einsum('bqd,bdk->bqk', qh, kT,
                   preferred_element_type=jnp.float32)                  # (Bt*H, S, S)
    qi = jax.lax.broadcasted_iota(jnp.int32, (S, S), 0)
    ki = jax.lax.broadcasted_iota(jnp.int32, (S, S), 1)
    s = jnp.where((ki <= qi)[None], s, -1e9)       # finite fill -> NaN-safe
    s = s - jnp.max(s, axis=-1, keepdims=True)
    p = jnp.exp(s)
    p = (p * pl.reciprocal(jnp.sum(p, axis=-1, keepdims=True), approx=True)
         ).astype(w_dtype)

    ctxT = jnp.einsum('bdk,bqk->bdq', vT, p,
                      preferred_element_type=jnp.float32)               # (Bt*H, hd, S)
    ctx = jnp.swapaxes(ctxT.reshape(Bt, D, S), 1, 2).reshape(M, D)      # (M, D)
    # single full-K output projection (no per-head matmuls / lane concat)
    attn = jnp.dot(ctx.astype(w_dtype), wo_ref[0],
                   preferred_element_type=jnp.float32) + bo
    x = x + attn

    # ---- MLP block (residual around it) ----
    h = _layer_norm(x, ln2g, ln2b).astype(w_dtype)
    h1 = jnp.dot(h, w1_ref[0], preferred_element_type=jnp.float32) + b1_ref[0, 0]
    h1 = _quick_gelu(h1)
    h2 = jnp.dot(h1.astype(w_dtype), w2_ref[0],
                 preferred_element_type=jnp.float32) + b2
    x = x + h2

    # exactly one carry store per layer
    @pl.when(l < last)
    def _():
        o_ref[...] = x.reshape(Bt, S, D)

    @pl.when(l == last)
    def _():
        o_ref[...] = _layer_norm(x, fin_ref[0], fin_ref[1]).reshape(Bt, S, D)


# ----------------------------- pallas_call wrapper -----------------------------

def clip_text_transformer(x, wqkv, wo, w1, w2, small, b1, final_ln,
                          *, num_heads, batch_block=None, weight_buffering=None,
                          vmem_limit_bytes=None):
    """x: (B, S, D) f32 embeddings -> last_hidden_state (B, S, D) f32."""
    B, S, D = x.shape
    L = wqkv.shape[0]

    # Pad S to a sublane multiple (CLIP S=77 -> 80) so in-kernel reshapes are free.
    # Causal masking keeps the real positions' outputs exact; padding is sliced off.
    S_pad = ((S + 7) // 8) * 8
    if S_pad != S:
        x = jnp.pad(x, ((0, 0), (0, S_pad - S), (0, 0)))

    Bt = B if batch_block is None else batch_block    # default: whole batch, weights
    assert B % Bt == 0                                # streamed from HBM exactly once
    grid = (B // Bt, L)

    mode = None if weight_buffering is None else pl.Buffered(weight_buffering)

    def layer_spec(a, deep=False):
        rest = a.shape[1:]
        imap = lambda b, l, n=len(rest): (l,) + (0,) * n
        if deep and mode is not None:                 # deeper buffering: v5e/v6e only
            return pl.BlockSpec((1,) + rest, imap, pipeline_mode=mode)
        return pl.BlockSpec((1,) + rest, imap)

    in_specs = [
        pl.BlockSpec((Bt, S_pad, D), lambda b, l: (b, 0, 0)),   # carry seed
        layer_spec(wqkv, deep=True),
        layer_spec(wo),
        layer_spec(w1, deep=True),
        layer_spec(w2, deep=True),
        layer_spec(small),
        layer_spec(b1),
        pl.BlockSpec(final_ln.shape, lambda b, l: (0, 0)),      # final LN params
    ]

    if vmem_limit_bytes is None:
        vmem_limit_bytes = _default_vmem_limit_bytes()

    out = pl.pallas_call(
        functools.partial(fused_clip_layers_kernel, num_heads=num_heads),
        out_shape=jax.ShapeDtypeStruct((B, S_pad, D), jnp.float32),
        grid=grid,
        in_specs=in_specs,
        out_specs=pl.BlockSpec((Bt, S_pad, D), lambda b, l: (b, 0, 0)),
        compiler_params=pltpu.CompilerParams(
            dimension_semantics=("parallel", "arbitrary"),
            vmem_limit_bytes=vmem_limit_bytes),
    )(x, wqkv, wo, w1, w2, small, b1, final_ln)

    return out[:, :S, :] if S_pad != S else out


# ----------------------------- model -----------------------------

class FrozenCLIPEmbedderPallas:
    """Frozen CLIP text encoder (synthetic weights).  forward(token_ids) -> last_hidden_state."""

    def __init__(self, vocab_size=1000, max_length=8, hidden=32, num_heads=4,
                 mlp_dim=128, num_layers=2, seed=0, weight_dtype=jnp.float32):
        assert hidden % num_heads == 0
        self.max_length = max_length
        self.hidden = hidden
        self.num_heads = num_heads
        self.num_layers = num_layers
        self.weight_dtype = weight_dtype

        key = jax.random.PRNGKey(seed)

        def nrm(k, shape, scale=0.02):
            return (scale * jax.random.normal(k, shape)).astype(jnp.float32)

        key, k_tok, k_pos = jax.random.split(key, 3)
        self.token_embedding = nrm(k_tok, (vocab_size, hidden))
        self.position_embedding = nrm(k_pos, (max_length, hidden))

        self.layers = []
        for _ in range(num_layers):
            key, *ks = jax.random.split(key, 7)
            lp = dict(
                ln1_g=jnp.ones((1, hidden), jnp.float32),
                ln1_b=jnp.zeros((1, hidden), jnp.float32),
                wq=nrm(ks[0], (hidden, hidden)), bq=jnp.zeros((1, hidden), jnp.float32),
                wk=nrm(ks[1], (hidden, hidden)), bk=jnp.zeros((1, hidden), jnp.float32),
                wv=nrm(ks[2], (hidden, hidden)), bv=jnp.zeros((1, hidden), jnp.float32),
                wo=nrm(ks[3], (hidden, hidden)), bo=jnp.zeros((1, hidden), jnp.float32),
                ln2_g=jnp.ones((1, hidden), jnp.float32),
                ln2_b=jnp.zeros((1, hidden), jnp.float32),
                w1=nrm(ks[4], (hidden, mlp_dim)), b1=jnp.zeros((1, mlp_dim), jnp.float32),
                w2=nrm(ks[5], (mlp_dim, hidden)), b2=jnp.zeros((1, hidden), jnp.float32),
            )
            self.layers.append(lp)

        self.final_ln_g = jnp.ones((1, hidden), jnp.float32)
        self.final_ln_b = jnp.zeros((1, hidden), jnp.float32)

        self._build_fused_params()

    def _build_fused_params(self):
        """Stack per-layer weights to leading-L arrays; fuse QKV; fold 1/sqrt(hd) into
        Wq/bq; pack all small per-layer vectors into one (L, 9, D) array."""
        hd = self.hidden // self.num_heads
        scale = float(hd) ** -0.5
        wd = self.weight_dtype

        def stack(fn, dtype=jnp.float32):
            return jnp.stack([fn(lp) for lp in self.layers], axis=0).astype(dtype)

        self.f_wqkv = stack(lambda lp: jnp.concatenate(
            [lp["wq"] * scale, lp["wk"], lp["wv"]], axis=1), wd)          # (L, D, 3D)
        self.f_wo = stack(lambda lp: lp["wo"], wd)                        # (L, D, D)
        self.f_w1 = stack(lambda lp: lp["w1"], wd)                        # (L, D, F)
        self.f_w2 = stack(lambda lp: lp["w2"], wd)                        # (L, F, D)
        self.f_small = stack(lambda lp: jnp.stack(                        # (L, 9, D)
            [lp["ln1_g"][0], lp["ln1_b"][0],
             lp["bq"][0] * scale, lp["bk"][0], lp["bv"][0], lp["bo"][0],
             lp["ln2_g"][0], lp["ln2_b"][0], lp["b2"][0]], axis=0))
        self.f_b1 = stack(lambda lp: lp["b1"])                            # (L, 1, F)
        self.f_final = jnp.stack([self.final_ln_g[0], self.final_ln_b[0]], axis=0)  # (2, D)

    def __call__(self, token_ids, batch_block=None, weight_buffering=None):
        # token_ids: (B, max_length) int32 (already padded/truncated to max_length)
        B, S = token_ids.shape
        assert S == self.max_length
        # embedding lookup + positional embedding (glue in plain JAX)
        x = jnp.take(self.token_embedding, token_ids, axis=0)          # (B, S, D)
        x = (x + self.position_embedding[None, :S, :]).astype(jnp.float32)
        return clip_text_transformer(
            x, self.f_wqkv, self.f_wo, self.f_w1, self.f_w2,
            self.f_small, self.f_b1, self.f_final,
            num_heads=self.num_heads, batch_block=batch_block,
            weight_buffering=weight_buffering)

    # pure-JAX reference for correctness check
    def reference(self, token_ids):
        B, S = token_ids.shape
        x = jnp.take(self.token_embedding, token_ids, axis=0) + self.position_embedding[None, :S, :]
        hd = self.hidden // self.num_heads
        scale = float(hd) ** -0.5
        mask = jnp.tril(jnp.ones((S, S), bool))
        for lp in self.layers:
            h = _layer_norm(x, lp["ln1_g"][0], lp["ln1_b"][0])
            q = h @ lp["wq"] + lp["bq"][0]
            k = h @ lp["wk"] + lp["bk"][0]
            v = h @ lp["wv"] + lp["bv"][0]
            q = q.reshape(B, S, self.num_heads, hd).transpose(0, 2, 1, 3) * scale
            k = k.reshape(B, S, self.num_heads, hd).transpose(0, 2, 1, 3)
            v = v.reshape(B, S, self.num_heads, hd).transpose(0, 2, 1, 3)
            s = jnp.einsum("bhqd,bhkd->bhqk", q, k)
            s = jnp.where(mask[None, None], s, -jnp.inf)
            p = jax.nn.softmax(s, axis=-1)
            ctx = jnp.einsum("bhqk,bhkd->bhqd", p, v)
            ctx = ctx.transpose(0, 2, 1, 3).reshape(B, S, self.hidden)
            x = x + (ctx @ lp["wo"] + lp["bo"][0])
            h = _layer_norm(x, lp["ln2_g"][0], lp["ln2_b"][0])
            h = _quick_gelu(h @ lp["w1"] + lp["b1"][0])
            x = x + (h @ lp["w2"] + lp["b2"][0])
        return _layer_norm(x, self.final_ln_g[0], self.final_ln_b[0])


if __name__ == "__main__":
    def run_and_check(model, tokens, tol, tag):
        z = jax.block_until_ready(model(tokens))
        z_ref = model.reference(tokens)
        assert z.shape == z_ref.shape and z.dtype == jnp.float32
        err = float(jnp.max(jnp.abs(z - z_ref)))
        assert jnp.allclose(z, z_ref, rtol=tol, atol=tol), f"{tag}: max abs err {err}"
        return z

    key = jax.random.PRNGKey(0)
    B, S = 2, 8

    # f32 path (S already a sublane multiple)
    model = FrozenCLIPEmbedderPallas(vocab_size=1000, max_length=S, hidden=32,
                                     num_heads=4, mlp_dim=128, num_layers=2, seed=0)
    key, k1 = jax.random.split(key)
    tokens = jax.random.randint(k1, (B, S), 0, 1000, dtype=jnp.int32)
    run_and_check(model, tokens, 5e-3, "f32")     # tolerance: pl.reciprocal(approx=True)

    # sequence length not a sublane multiple -> exercises host-side S padding (77->80 style)
    S2 = 7
    model_pad = FrozenCLIPEmbedderPallas(vocab_size=1000, max_length=S2, hidden=32,
                                         num_heads=4, mlp_dim=128, num_layers=2, seed=1)
    key, k2 = jax.random.split(key)
    tokens2 = jax.random.randint(k2, (B, S2), 0, 1000, dtype=jnp.int32)
    run_and_check(model_pad, tokens2, 5e-3, "f32-padded-seq")

    # bf16-weight path (the VMEM / MXU-throughput lever for real CLIP-L sizes, esp. v7x)
    model_bf16 = FrozenCLIPEmbedderPallas(vocab_size=1000, max_length=S, hidden=32,
                                          num_heads=4, mlp_dim=128, num_layers=2, seed=0,
                                          weight_dtype=jnp.bfloat16)
    run_and_check(model_bf16, tokens, 5e-2, "bf16")

    print("KERNEL_OK")
</pallas_src>

<mosaic_0001>
module attributes {stable_mosaic.version = 11 : i64} {
  func.func @fused_clip_layers_kernel(%arg0: i32, %arg1: i32, %arg2: memref<2x8x32xf32, #tpu.memory_space<vmem>>, %arg3: memref<1x32x96xf32, #tpu.memory_space<vmem>>, %arg4: memref<1x32x32xf32, #tpu.memory_space<vmem>>, %arg5: memref<1x32x128xf32, #tpu.memory_space<vmem>>, %arg6: memref<1x128x32xf32, #tpu.memory_space<vmem>>, %arg7: memref<1x9x32xf32, #tpu.memory_space<vmem>>, %arg8: memref<1x1x128xf32, #tpu.memory_space<vmem>>, %arg9: memref<2x32xf32, #tpu.memory_space<vmem>>, %arg10: memref<2x8x32xf32, #tpu.memory_space<vmem>>) attributes {dimension_semantics = [#tpu.dimension_semantics<parallel>, #tpu.dimension_semantics<arbitrary>], iteration_bounds = array<i64: 1, 2>, scalar_prefetch = 0 : i64, scratch_operands = 0 : i64, tpu.core_type = #tpu.core_type<tc>, window_params = [{transform_indices = @transform_0, window_bounds = array<i64: 2, 8, 32>}, {transform_indices = @transform_1, window_bounds = array<i64: 1, 32, 96>}, {transform_indices = @transform_2, window_bounds = array<i64: 1, 32, 32>}, {transform_indices = @transform_3, window_bounds = array<i64: 1, 32, 128>}, {transform_indices = @transform_4, window_bounds = array<i64: 1, 128, 32>}, {transform_indices = @transform_5, window_bounds = array<i64: 1, 9, 32>}, {transform_indices = @transform_6, window_bounds = array<i64: 1, 1, 128>}, {pipeline_mode = #tpu.pipeline_mode<synchronous>, transform_indices = @transform_7, window_bounds = array<i64: 2, 32>}, {transform_indices = @transform_8, window_bounds = array<i64: 2, 8, 32>}]} {
    %c0_i32 = arith.constant 0 : i32
    %0 = arith.cmpi eq, %arg1, %c0_i32 : i32
    %1 = arith.extui %0 : i1 to i32
    %c0_i32_0 = arith.constant 0 : i32
    %2 = arith.cmpi ne, %1, %c0_i32_0 : i32
    scf.if %2 {
      %c0_44 = arith.constant 0 : index
      %c0_45 = arith.constant 0 : index
      %c0_46 = arith.constant 0 : index
      %157 = vector.load %arg2[%c0_44, %c0_45, %c0_46] : memref<2x8x32xf32, #tpu.memory_space<vmem>>, vector<2x8x32xf32>
      %c0_47 = arith.constant 0 : index
      %c0_48 = arith.constant 0 : index
      %c0_49 = arith.constant 0 : index
      %158 = vector.load %arg10[%c0_47, %c0_48, %c0_49] : memref<2x8x32xf32, #tpu.memory_space<vmem>>, vector<2x8x32xf32>
      tpu.vector_store %arg10[%c0_47, %c0_48, %c0_49], %157 {strides = array<i32>} : memref<2x8x32xf32, #tpu.memory_space<vmem>>, vector<2x8x32xf32>,
    } else {
    }
    %c0 = arith.constant 0 : index
    %c0_1 = arith.constant 0 : index
    %c0_2 = arith.constant 0 : index
    %3 = vector.load %arg10[%c0, %c0_1, %c0_2] : memref<2x8x32xf32, #tpu.memory_space<vmem>>, vector<2x8x32xf32>
    %4 = vector.shape_cast %3 : vector<2x8x32xf32> to vector<16x32xf32>
    %c0_3 = arith.constant 0 : index
    %c0_4 = arith.constant 0 : index
    %c0_5 = arith.constant 0 : index
    %5 = vector.load %arg7[%c0_3, %c0_4, %c0_5] : memref<1x9x32xf32, #tpu.memory_space<vmem>>, vector<1x9x32xf32>
    %6 = vector.shape_cast %5 : vector<1x9x32xf32> to vector<9x32xf32>
    %7 = vector.extract_strided_slice %6 {offsets = [0, 0], sizes = [1, 32], strides = [1, 1]} : vector<9x32xf32> to vector<1x32xf32>
    %8 = vector.shape_cast %7 : vector<1x32xf32> to vector<32xf32>
    %9 = vector.extract_strided_slice %6 {offsets = [1, 0], sizes = [1, 32], strides = [1, 1]} : vector<9x32xf32> to vector<1x32xf32>
    %10 = vector.shape_cast %9 : vector<1x32xf32> to vector<32xf32>
    %11 = vector.extract_strided_slice %6 {offsets = [2, 0], sizes = [1, 32], strides = [1, 1]} : vector<9x32xf32> to vector<1x32xf32>
    %12 = vector.shape_cast %11 : vector<1x32xf32> to vector<32xf32>
    %13 = vector.extract_strided_slice %6 {offsets = [3, 0], sizes = [1, 32], strides = [1, 1]} : vector<9x32xf32> to vector<1x32xf32>
    %14 = vector.shape_cast %13 : vector<1x32xf32> to vector<32xf32>
    %15 = vector.extract_strided_slice %6 {offsets = [4, 0], sizes = [1, 32], strides = [1, 1]} : vector<9x32xf32> to vector<1x32xf32>
    %16 = vector.shape_cast %15 : vector<1x32xf32> to vector<32xf32>
    %17 = vector.extract_strided_slice %6 {offsets = [5, 0], sizes = [1, 32], strides = [1, 1]} : vector<9x32xf32> to vector<1x32xf32>
    %18 = vector.shape_cast %17 : vector<1x32xf32> to vector<32xf32>
    %19 = vector.extract_strided_slice %6 {offsets = [6, 0], sizes = [1, 32], strides = [1, 1]} : vector<9x32xf32> to vector<1x32xf32>
    %20 = vector.shape_cast %19 : vector<1x32xf32> to vector<32xf32>
    %21 = vector.extract_strided_slice %6 {offsets = [7, 0], sizes = [1, 32], strides = [1, 1]} : vector<9x32xf32> to vector<1x32xf32>
    %22 = vector.shape_cast %21 : vector<1x32xf32> to vector<32xf32>
    %23 = vector.extract_strided_slice %6 {offsets = [8, 0], sizes = [1, 32], strides = [1, 1]} : vector<9x32xf32> to vector<1x32xf32>
    %24 = vector.shape_cast %23 : vector<1x32xf32> to vector<32xf32>
    %cst = arith.constant dense<0.000000e+00> : vector<16xf32>
    %25 = vector.multi_reduction <add>, %4, %cst [1] : vector<16x32xf32> to vector<16xf32>
    %26 = vector.shape_cast %25 : vector<16xf32> to vector<16x1xf32>
    %cst_6 = arith.constant 3.200000e+01 : f32
    %27 = vector.broadcast %cst_6 : f32 to vector<16x1xf32>
    %28 = arith.divf %26, %27 : vector<16x1xf32>
    %29 = vector.broadcast %28 : vector<16x1xf32> to vector<16x32xf32>
    %30 = arith.subf %4, %29 : vector<16x32xf32>
    %31 = arith.mulf %30, %30 : vector<16x32xf32>
    %cst_7 = arith.constant dense<0.000000e+00> : vector<16xf32>
    %32 = vector.multi_reduction <add>, %31, %cst_7 [1] : vector<16x32xf32> to vector<16xf32>
    %33 = vector.shape_cast %32 : vector<16xf32> to vector<16x1xf32>
    %cst_8 = arith.constant 3.200000e+01 : f32
    %34 = vector.broadcast %cst_8 : f32 to vector<16x1xf32>
    %35 = arith.divf %33, %34 : vector<16x1xf32>
    %36 = vector.broadcast %28 : vector<16x1xf32> to vector<16x32xf32>
    %37 = arith.subf %4, %36 : vector<16x32xf32>
    %cst_9 = arith.constant 9.99999974E-6 : f32
    %38 = vector.broadcast %cst_9 : f32 to vector<16x1xf32>
    %39 = arith.addf %35, %38 : vector<16x1xf32>
    %40 = math.rsqrt %39 : vector<16x1xf32>
    %41 = vector.broadcast %40 : vector<16x1xf32> to vector<16x32xf32>
    %42 = arith.mulf %37, %41 : vector<16x32xf32>
    %43 = vector.shape_cast %8 : vector<32xf32> to vector<1x32xf32>
    %44 = vector.broadcast %43 : vector<1x32xf32> to vector<16x32xf32>
    %45 = arith.mulf %42, %44 : vector<16x32xf32>
    %46 = vector.shape_cast %10 : vector<32xf32> to vector<1x32xf32>
    %47 = vector.broadcast %46 : vector<1x32xf32> to vector<16x32xf32>
    %48 = arith.addf %45, %47 : vector<16x32xf32>
    %c0_10 = arith.constant 0 : index
    %c0_11 = arith.constant 0 : index
    %c0_12 = arith.constant 0 : index
    %49 = vector.load %arg3[%c0_10, %c0_11, %c0_12] : memref<1x32x96xf32, #tpu.memory_space<vmem>>, vector<1x32x96xf32>
    %50 = vector.shape_cast %49 : vector<1x32x96xf32> to vector<32x96xf32>
    %cst_13 = arith.constant dense<0.000000e+00> : vector<16x96xf32>
    %51 = tpu.matmul %48, %50, %cst_13 {dimension_numbers = #tpu.dot_dimension_numbers<[1], [0], [0], [1], [0, 0, 1, 1], [], []>} : vector<16x32xf32>, vector<32x96xf32>, vector<16x96xf32> -> vector<16x96xf32>
    %52 = vector.extract_strided_slice %51 {offsets = [0, 0], sizes = [16, 32], strides = [1, 1]} : vector<16x96xf32> to vector<16x32xf32>
    %53 = vector.shape_cast %12 : vector<32xf32> to vector<1x32xf32>
    %54 = vector.broadcast %53 : vector<1x32xf32> to vector<16x32xf32>
    %55 = arith.addf %52, %54 : vector<16x32xf32>
    %56 = vector.shape_cast %55 : vector<16x32xf32> to vector<2x8x32xf32>
    %57 = tpu.transpose %56, [0, 2, 1] : vector<2x8x32xf32> -> vector<2x32x8xf32>
    %58 = vector.shape_cast %57 : vector<2x32x8xf32> to vector<8x8x8xf32>
    %59 = vector.extract_strided_slice %51 {offsets = [0, 32], sizes = [16, 32], strides = [1, 1]} : vector<16x96xf32> to vector<16x32xf32>
    %60 = vector.shape_cast %14 : vector<32xf32> to vector<1x32xf32>
    %61 = vector.broadcast %60 : vector<1x32xf32> to vector<16x32xf32>
    %62 = arith.addf %59, %61 : vector<16x32xf32>
    %63 = vector.shape_cast %62 : vector<16x32xf32> to vector<2x8x32xf32>
    %64 = tpu.transpose %63, [0, 2, 1] : vector<2x8x32xf32> -> vector<2x32x8xf32>
    %65 = vector.shape_cast %64 : vector<2x32x8xf32> to vector<8x8x8xf32>
    %66 = vector.extract_strided_slice %51 {offsets = [0, 64], sizes = [16, 32], strides = [1, 1]} : vector<16x96xf32> to vector<16x32xf32>
    %67 = vector.shape_cast %16 : vector<32xf32> to vector<1x32xf32>
    %68 = vector.broadcast %67 : vector<1x32xf32> to vector<16x32xf32>
    %69 = arith.addf %66, %68 : vector<16x32xf32>
    %70 = vector.shape_cast %69 : vector<16x32xf32> to vector<2x8x32xf32>
    %71 = tpu.transpose %70, [0, 2, 1] : vector<2x8x32xf32> -> vector<2x32x8xf32>
    %72 = vector.shape_cast %71 : vector<2x32x8xf32> to vector<8x8x8xf32>
    %73 = tpu.transpose %58, [0, 2, 1] : vector<8x8x8xf32> -> vector<8x8x8xf32>
    "tpu.trace_start"() <{level = 10 : i32, message = "bqd,bdk->bqk"}> : () -> ()
    %cst_14 = arith.constant dense<0.000000e+00> : vector<8x8x8xf32>
    %74 = tpu.matmul %73, %65, %cst_14 {dimension_numbers = #tpu.dot_dimension_numbers<[2], [1], [1], [2], [0, 0, 0, 1, 1, 2], [0], [0]>} : vector<8x8x8xf32>, vector<8x8x8xf32>, vector<8x8x8xf32> -> vector<8x8x8xf32>
    "tpu.trace_stop"() : () -> ()
    %75 = tpu.iota {dimensions = array<i32: 0>} : vector<8x8xi32>
    %76 = tpu.iota {dimensions = array<i32: 1>} : vector<8x8xi32>
    %77 = arith.cmpi sle, %76, %75 : vector<8x8xi32>
    %78 = vector.shape_cast %77 : vector<8x8xi1> to vector<1x8x8xi1>
    %cst_15 = arith.constant -1.000000e+09 : f32
    %79 = vector.shape_cast %78 : vector<1x8x8xi1> to vector<1x8x8xi1>
    %80 = vector.broadcast %79 : vector<1x8x8xi1> to vector<8x8x8xi1>
    %81 = vector.broadcast %cst_15 : f32 to vector<8x8x8xf32>
    %82 = arith.select %80, %74, %81 : vector<8x8x8xi1>, vector<8x8x8xf32>
    %cst_16 = arith.constant dense<0xFF800000> : vector<8x8xf32>
    %83 = vector.multi_reduction <maximumf>, %82, %cst_16 [2] : vector<8x8x8xf32> to vector<8x8xf32>
    %84 = vector.shape_cast %83 : vector<8x8xf32> to vector<8x8x1xf32>
    %85 = vector.broadcast %84 : vector<8x8x1xf32> to vector<8x8x8xf32>
    %86 = arith.subf %82, %85 : vector<8x8x8xf32>
    %87 = math.exp %86 : vector<8x8x8xf32>
    %cst_17 = arith.constant dense<0.000000e+00> : vector<8x8xf32>
    %88 = vector.multi_reduction <add>, %87, %cst_17 [2] : vector<8x8x8xf32> to vector<8x8xf32>
    %89 = vector.shape_cast %88 : vector<8x8xf32> to vector<8x8x1xf32>
    %90 = tpu.reciprocal %89 {approx = true} : vector<8x8x1xf32> -> vector<8x8x1xf32>
    %91 = vector.broadcast %90 : vector<8x8x1xf32> to vector<8x8x8xf32>
    %92 = arith.mulf %87, %91 : vector<8x8x8xf32>
    "tpu.trace_start"() <{level = 10 : i32, message = "bdk,bqk->bdq"}> : () -> ()
    %cst_18 = arith.constant dense<0.000000e+00> : vector<8x8x8xf32>
    %93 = tpu.matmul %72, %92, %cst_18 {dimension_numbers = #tpu.dot_dimension_numbers<[2], [2], [1], [1], [0, 0, 0, 1, 1, 1], [0], [0]>} : vector<8x8x8xf32>, vector<8x8x8xf32>, vector<8x8x8xf32> -> vector<8x8x8xf32>
    "tpu.trace_stop"() : () -> ()
    %94 = vector.shape_cast %93 : vector<8x8x8xf32> to vector<2x32x8xf32>
    %95 = tpu.transpose %94, [0, 2, 1] : vector<2x32x8xf32> -> vector<2x8x32xf32>
    %96 = vector.shape_cast %95 : vector<2x8x32xf32> to vector<16x32xf32>
    %c0_19 = arith.constant 0 : index
    %c0_20 = arith.constant 0 : index
    %c0_21 = arith.constant 0 : index
    %97 = vector.load %arg4[%c0_19, %c0_20, %c0_21] : memref<1x32x32xf32, #tpu.memory_space<vmem>>, vector<1x32x32xf32>
    %98 = vector.shape_cast %97 : vector<1x32x32xf32> to vector<32x32xf32>
    %cst_22 = arith.constant dense<0.000000e+00> : vector<16x32xf32>
    %99 = tpu.matmul %96, %98, %cst_22 {dimension_numbers = #tpu.dot_dimension_numbers<[1], [0], [0], [1], [0, 0, 1, 1], [], []>} : vector<16x32xf32>, vector<32x32xf32>, vector<16x32xf32> -> vector<16x32xf32>
    %100 = vector.shape_cast %18 : vector<32xf32> to vector<1x32xf32>
    %101 = vector.broadcast %100 : vector<1x32xf32> to vector<16x32xf32>
    %102 = arith.addf %99, %101 : vector<16x32xf32>
    %103 = arith.addf %4, %102 : vector<16x32xf32>
    %cst_23 = arith.constant dense<0.000000e+00> : vector<16xf32>
    %104 = vector.multi_reduction <add>, %103, %cst_23 [1] : vector<16x32xf32> to vector<16xf32>
    %105 = vector.shape_cast %104 : vector<16xf32> to vector<16x1xf32>
    %cst_24 = arith.constant 3.200000e+01 : f32
    %106 = vector.broadcast %cst_24 : f32 to vector<16x1xf32>
    %107 = arith.divf %105, %106 : vector<16x1xf32>
    %108 = vector.broadcast %107 : vector<16x1xf32> to vector<16x32xf32>
    %109 = arith.subf %103, %108 : vector<16x32xf32>
    %110 = arith.mulf %109, %109 : vector<16x32xf32>
    %cst_25 = arith.constant dense<0.000000e+00> : vector<16xf32>
    %111 = vector.multi_reduction <add>, %110, %cst_25 [1] : vector<16x32xf32> to vector<16xf32>
    %112 = vector.shape_cast %111 : vector<16xf32> to vector<16x1xf32>
    %cst_26 = arith.constant 3.200000e+01 : f32
    %113 = vector.broadcast %cst_26 : f32 to vector<16x1xf32>
    %114 = arith.divf %112, %113 : vector<16x1xf32>
    %115 = vector.broadcast %107 : vector<16x1xf32> to vector<16x32xf32>
    %116 = arith.subf %103, %115 : vector<16x32xf32>
    %cst_27 = arith.constant 9.99999974E-6 : f32
    %117 = vector.broadcast %cst_27 : f32 to vector<16x1xf32>
    %118 = arith.addf %114, %117 : vector<16x1xf32>
    %119 = math.rsqrt %118 : vector<16x1xf32>
    %120 = vector.broadcast %119 : vector<16x1xf32> to vector<16x32xf32>
    %121 = arith.mulf %116, %120 : vector<16x32xf32>
    %122 = vector.shape_cast %20 : vector<32xf32> to vector<1x32xf32>
    %123 = vector.broadcast %122 : vector<1x32xf32> to vector<16x32xf32>
    %124 = arith.mulf %121, %123 : vector<16x32xf32>
    %125 = vector.shape_cast %22 : vector<32xf32> to vector<1x32xf32>
    %126 = vector.broadcast %125 : vector<1x32xf32> to vector<16x32xf32>
    %127 = arith.addf %124, %126 : vector<16x32xf32>
    %c0_28 = arith.constant 0 : index
    %c0_29 = arith.constant 0 : index
    %c0_30 = arith.constant 0 : index
    %128 = vector.load %arg5[%c0_28, %c0_29, %c0_30] : memref<1x32x128xf32, #tpu.memory_space<vmem>>, vector<1x32x128xf32>
    %129 = vector.shape_cast %128 : vector<1x32x128xf32> to vector<32x128xf32>
    %cst_31 = arith.constant dense<0.000000e+00> : vector<16x128xf32>
    %130 = tpu.matmul %127, %129, %cst_31 {dimension_numbers = #tpu.dot_dimension_numbers<[1], [0], [0], [1], [0, 0, 1, 1], [], []>} : vector<16x32xf32>, vector<32x128xf32>, vector<16x128xf32> -> vector<16x128xf32>
    %c0_32 = arith.constant 0 : index
    %c0_33 = arith.constant 0 : index
    %c0_34 = arith.constant 0 : index
    %131 = vector.load %arg8[%c0_32, %c0_33, %c0_34] : memref<1x1x128xf32, #tpu.memory_space<vmem>>, vector<1x1x128xf32>
    %132 = vector.shape_cast %131 : vector<1x1x128xf32> to vector<128xf32>
    %133 = vector.shape_cast %132 : vector<128xf32> to vector<1x128xf32>
    %134 = vector.broadcast %133 : vector<1x128xf32> to vector<16x128xf32>
    %135 = arith.addf %130, %134 : vector<16x128xf32>
    %cst_35 = arith.constant 1.702000e+00 : f32
    %136 = vector.broadcast %cst_35 : f32 to vector<16x128xf32>
    %137 = arith.mulf %136, %135 : vector<16x128xf32>
    %138 = arith.negf %137 : vector<16x128xf32>
    %139 = math.exp %138 : vector<16x128xf32>
    %cst_36 = arith.constant 1.000000e+00 : f32
    %140 = vector.broadcast %cst_36 : f32 to vector<16x128xf32>
    %141 = arith.addf %140, %139 : vector<16x128xf32>
    %142 = arith.divf %140, %141 : vector<16x128xf32>
    %143 = arith.mulf %135, %142 : vector<16x128xf32>
    %c0_37 = arith.constant 0 : index
    %c0_38 = arith.constant 0 : index
    %c0_39 = arith.constant 0 : index
    %144 = vector.load %arg6[%c0_37, %c0_38, %c0_39] : memref<1x128x32xf32, #tpu.memory_space<vmem>>, vector<1x128x32xf32>
    %145 = vector.shape_cast %144 : vector<1x128x32xf32> to vector<128x32xf32>
    %cst_40 = arith.constant dense<0.000000e+00> : vector<16x32xf32>
    %146 = tpu.matmul %143, %145, %cst_40 {dimension_numbers = #tpu.dot_dimension_numbers<[1], [0], [0], [1], [0, 0, 1, 1], [], []>} : vector<16x128xf32>, vector<128x32xf32>, vector<16x32xf32> -> vector<16x32xf32>
    %147 = vector.shape_cast %24 : vector<32xf32> to vector<1x32xf32>
    %148 = vector.broadcast %147 : vector<1x32xf32> to vector<16x32xf32>
    %149 = arith.addf %146, %148 : vector<16x32xf32>
    %150 = arith.addf %103, %149 : vector<16x32xf32>
    %c1_i32 = arith.constant 1 : i32
    %151 = arith.cmpi slt, %arg1, %c1_i32 : i32
    %152 = arith.extui %151 : i1 to i32
    %c0_i32_41 = arith.constant 0 : i32
    %153 = arith.cmpi ne, %152, %c0_i32_41 : i32
    scf.if %153 {
      %157 = vector.shape_cast %150 : vector<16x32xf32> to vector<2x8x32xf32>
      %c0_44 = arith.constant 0 : index
      %c0_45 = arith.constant 0 : index
      %c0_46 = arith.constant 0 : index
      %158 = vector.load %arg10[%c0_44, %c0_45, %c0_46] : memref<2x8x32xf32, #tpu.memory_space<vmem>>, vector<2x8x32xf32>
      tpu.vector_store %arg10[%c0_44, %c0_45, %c0_46], %157 {strides = array<i32>} : memref<2x8x32xf32, #tpu.memory_space<vmem>>, vector<2x8x32xf32>,
    } else {
    }
    %c1_i32_42 = arith.constant 1 : i32
    %154 = arith.cmpi eq, %arg1, %c1_i32_42 : i32
    %155 = arith.extui %154 : i1 to i32
    %c0_i32_43 = arith.constant 0 : i32
    %156 = arith.cmpi ne, %155, %c0_i32_43 : i32
    scf.if %156 {
      %c0_44 = arith.constant 0 : index
      %c0_45 = arith.constant 0 : index
      %157 = vector.load %arg9[%c0_44, %c0_45] : memref<2x32xf32, #tpu.memory_space<vmem>>, vector<1x32xf32>
      %158 = vector.shape_cast %157 : vector<1x32xf32> to vector<32xf32>
      %c1 = arith.constant 1 : index
      %c0_46 = arith.constant 0 : index
      %159 = vector.load %arg9[%c1, %c0_46] : memref<2x32xf32, #tpu.memory_space<vmem>>, vector<1x32xf32>
      %160 = vector.shape_cast %159 : vector<1x32xf32> to vector<32xf32>
      %cst_47 = arith.constant dense<0.000000e+00> : vector<16xf32>
      %161 = vector.multi_reduction <add>, %150, %cst_47 [1] : vector<16x32xf32> to vector<16xf32>
      %162 = vector.shape_cast %161 : vector<16xf32> to vector<16x1xf32>
      %cst_48 = arith.constant 3.200000e+01 : f32
      %163 = vector.broadcast %cst_48 : f32 to vector<16x1xf32>
      %164 = arith.divf %162, %163 : vector<16x1xf32>
      %165 = vector.broadcast %164 : vector<16x1xf32> to vector<16x32xf32>
      %166 = arith.subf %150, %165 : vector<16x32xf32>
      %167 = arith.mulf %166, %166 : vector<16x32xf32>
      %cst_49 = arith.constant dense<0.000000e+00> : vector<16xf32>
      %168 = vector.multi_reduction <add>, %167, %cst_49 [1] : vector<16x32xf32> to vector<16xf32>
      %169 = vector.shape_cast %168 : vector<16xf32> to vector<16x1xf32>
      %cst_50 = arith.constant 3.200000e+01 : f32
      %170 = vector.broadcast %cst_50 : f32 to vector<16x1xf32>
      %171 = arith.divf %169, %170 : vector<16x1xf32>
      %172 = vector.broadcast %164 : vector<16x1xf32> to vector<16x32xf32>
      %173 = arith.subf %150, %172 : vector<16x32xf32>
      %cst_51 = arith.constant 9.99999974E-6 : f32
      %174 = vector.broadcast %cst_51 : f32 to vector<16x1xf32>
      %175 = arith.addf %171, %174 : vector<16x1xf32>
      %176 = math.rsqrt %175 : vector<16x1xf32>
      %177 = vector.broadcast %176 : vector<16x1xf32> to vector<16x32xf32>
      %178 = arith.mulf %173, %177 : vector<16x32xf32>
      %179 = vector.shape_cast %158 : vector<32xf32> to vector<1x32xf32>
      %180 = vector.broadcast %179 : vector<1x32xf32> to vector<16x32xf32>
      %181 = arith.mulf %178, %180 : vector<16x32xf32>
      %182 = vector.shape_cast %160 : vector<32xf32> to vector<1x32xf32>
      %183 = vector.broadcast %182 : vector<1x32xf32> to vector<16x32xf32>
      %184 = arith.addf %181, %183 : vector<16x32xf32>
      %185 = vector.shape_cast %184 : vector<16x32xf32> to vector<2x8x32xf32>
      %c0_52 = arith.constant 0 : index
      %c0_53 = arith.constant 0 : index
      %c0_54 = arith.constant 0 : index
      %186 = vector.load %arg10[%c0_52, %c0_53, %c0_54] : memref<2x8x32xf32, #tpu.memory_space<vmem>>, vector<2x8x32xf32>
      tpu.vector_store %arg10[%c0_52, %c0_53, %c0_54], %185 {strides = array<i32>} : memref<2x8x32xf32, #tpu.memory_space<vmem>>, vector<2x8x32xf32>,
    } else {
    }
    return
  }
  func.func @transform_0(%arg0: i32, %arg1: i32) -> (i32, i32, i32) {
    %c0_i32 = arith.constant 0 : i32
    %c0_i32_0 = arith.constant 0 : i32
    %c0_i32_1 = arith.constant 0 : i32
    return %arg0, %c0_i32, %c0_i32_0 : i32, i32, i32
  }
  func.func @transform_1(%arg0: i32, %arg1: i32) -> (i32, i32, i32) {
    %c0_i32 = arith.constant 0 : i32
    %c0_i32_0 = arith.constant 0 : i32
    %c0_i32_1 = arith.constant 0 : i32
    return %arg1, %c0_i32, %c0_i32_0 : i32, i32, i32
  }
  func.func @transform_2(%arg0: i32, %arg1: i32) -> (i32, i32, i32) {
    %c0_i32 = arith.constant 0 : i32
    %c0_i32_0 = arith.constant 0 : i32
    %c0_i32_1 = arith.constant 0 : i32
    return %arg1, %c0_i32, %c0_i32_0 : i32, i32, i32
  }
  func.func @transform_3(%arg0: i32, %arg1: i32) -> (i32, i32, i32) {
    %c0_i32 = arith.constant 0 : i32
    %c0_i32_0 = arith.constant 0 : i32
    %c0_i32_1 = arith.constant 0 : i32
    return %arg1, %c0_i32, %c0_i32_0 : i32, i32, i32
  }
  func.func @transform_4(%arg0: i32, %arg1: i32) -> (i32, i32, i32) {
    %c0_i32 = arith.constant 0 : i32
    %c0_i32_0 = arith.constant 0 : i32
    %c0_i32_1 = arith.constant 0 : i32
    return %arg1, %c0_i32, %c0_i32_0 : i32, i32, i32
  }
  func.func @transform_5(%arg0: i32, %arg1: i32) -> (i32, i32, i32) {
    %c0_i32 = arith.constant 0 : i32
    %c0_i32_0 = arith.constant 0 : i32
    %c0_i32_1 = arith.constant 0 : i32
    return %arg1, %c0_i32, %c0_i32_0 : i32, i32, i32
  }
  func.func @transform_6(%arg0: i32, %arg1: i32) -> (i32, i32, i32) {
    %c0_i32 = arith.constant 0 : i32
    %c0_i32_0 = arith.constant 0 : i32
    %c0_i32_1 = arith.constant 0 : i32
    return %arg1, %c0_i32, %c0_i32_0 : i32, i32, i32
  }
  func.func @transform_7(%arg0: i32, %arg1: i32) -> (i32, i32) {
    %c0_i32 = arith.constant 0 : i32
    %c0_i32_0 = arith.constant 0 : i32
    %c0_i32_1 = arith.constant 0 : i32
    return %c0_i32, %c0_i32_0 : i32, i32
  }
  func.func @transform_8(%arg0: i32, %arg1: i32) -> (i32, i32, i32) {
    %c0_i32 = arith.constant 0 : i32
    %c0_i32_0 = arith.constant 0 : i32
    %c0_i32_1 = arith.constant 0 : i32
    return %arg0, %c0_i32, %c0_i32_0 : i32, i32, i32
  }
}

</mosaic_0001>

<llo_original>
// kernel: tpu_custom_call.1
$region0: #{tpu_custom_call.1}
  #allocation0 [shape = 'u32[]', space=smem, size = 0x4, offset = 0x4, fixed_abs, tag = 'smem constant byte address 0x4 - core index']
  #allocation1 [shape = 'u32[144,128]{1,0:T(1,128)}', space=vmem, size = 0x12000, scoped, tag = 'internal scratch']
  %s0 = inlined_call_operand.vmem [shape: f32[2,8,32], index: 0, kind: input, shape index: {}]
  %s1 = inlined_call_operand.vmem [shape: f32[2,32,96], index: 1, kind: input, shape index: {}]
  %s2 = inlined_call_operand.vmem [shape: f32[2,32,32], index: 2, kind: input, shape index: {}]
  %s3 = inlined_call_operand.vmem [shape: f32[2,32,128], index: 3, kind: input, shape index: {}]
  %s4 = inlined_call_operand.vmem [shape: f32[2,128,32], index: 4, kind: input, shape index: {}]
  %s5 = inlined_call_operand.vmem [shape: f32[2,9,32], index: 5, kind: input, shape index: {}]
  %s6 = inlined_call_operand.vmem [shape: f32[2,1,128], index: 6, kind: input, shape index: {}]
  %s7 = inlined_call_operand.vmem [shape: f32[2,32], index: 7, kind: input, shape index: {}]
  %s8 = inlined_call_operand.hbm [shape: f32[2,8,32], index: 8, kind: output, shape index: {}]
  %s9 = sld [smem:[#allocation0]]
  $region77: #{tpu_custom_call.1} parent=0
    _
  %s11 = ssub.s32 1, %s9
  %s12 = scalar_select 0, %s11, %s9
  $region1: #{tpu_custom_call.1} parent=0
    #allocation2 [shape = 'u8[8192]{0}', space=vmem, size = 0x2000, scoped, tag = 'output window, operand 0, single buffered']
    #allocation3 [shape = 's32[2]{0}', space=sflag, size = 0x8, scoped, tag = 'scoped memory for tpu_custom_call.1']
    %13 = vsyncpa [#allocation3], 0
    loop: start=0, step=1, limit=4
    $region2: #{tpu_custom_call.1} parent=1 // loop_pre_header
      _
    $region3: #{tpu_custom_call.1} parent=1 // loop_header
      %s15 = sphi 0, %s19
      %p16 = scmp.ge.s32.totalorder %s15, 4
      %s22 = sphi 0, %s34
      %s23 = sphi 0, %s30
      %s24 = sphi 0, %s22
      %s25 = sphi 0, %s23
      %s26 = sphi 0, %s24
      %s27 = sphi 0, %s25
      %s37 = sphi 0, %s39
      %s40 = sphi 0, %s37
      %s41 = sphi 0, %s40
      %s57 = sphi 0, %s41
      %s63 = sphi 0, %s65
      %s66 = sphi 0, %s63
      %s67 = sphi 0, %s66
      %s83 = sphi 0, %s67
      %s89 = sphi 0, %s91
      %s92 = sphi 0, %s89
      %s93 = sphi 0, %s92
      %s109 = sphi 0, %s93
      %s115 = sphi 0, %s117
      %s118 = sphi 0, %s115
      %s119 = sphi 0, %s118
      %s135 = sphi 0, %s119
      %s141 = sphi 0, %s143
      %s144 = sphi 0, %s141
      %s145 = sphi 0, %s144
      %s161 = sphi 0, %s145
      %s167 = sphi 0, %s169
      %s170 = sphi 0, %s167
      %s171 = sphi 0, %s170
      %s187 = sphi 0, %s171
      %s193 = sphi 0, %s195
      %s196 = sphi 0, %s193
      %s197 = sphi 0, %s196
      %s213 = sphi 0, %s197
      %s217 = sphi 0, %s217
      %s219 = sphi 0, %s217
      %s220 = sphi 0, %s219
      %s234 = sphi 0, %s220
      %s240 = sphi 0, %s242
      %s243 = sphi 0, %s240
      %s244 = sphi 0, %s243
      %s260 = sphi 0, %s244
    $region4: #{tpu_custom_call.1} parent=1 // loop_header_branch
      %18 = sbr.rel (%p16) target = $region8
    $region5: #{tpu_custom_call.1} parent=1 // loop_body
      %s20 = ssub.s32 %s15, 1
      %s21 = ssub.s32 %s15, 2
      %s28 = sadd.s32 1, %s23
      %p29 = scmp.ge.s32.totalorder %s28, 2
      %s30 = scalar_select %p29, 0, %s28
      %s31 = sadd.s32 1, %s22
      %s32 = scalar_select %p29, %s31, %s22
      %p33 = scmp.ge.s32.totalorder %s32, 1
      %s34 = scalar_select %p33, 0, %s32
      %s35 = ssub.s32 %s22, %s34
      %p36 = scmp.eq.s32.totalorder %s35, 0
      %s38 = sadd.s32 %s37, 1
      %s39 = scalar_select %p36, %s37, %s38
      %p42 = pneg %p36
      %p43 = scmp.eq.s32.totalorder %s15, 1
      %p44 = por %p42, %p43
      %p45 = scmp.ne.s32.totalorder %s37, %s40
      %p46 = scmp.eq.s32.totalorder %s15, 0
      %p47 = por %p45, %p46
      %p48 = scmp.ne.s32.totalorder %s37, %s40
      %p49 = scmp.eq.s32.totalorder %s20, 1
      %p50 = por %p48, %p49
      %p51 = scmp.ne.s32.totalorder %s40, %s41
      %p52 = scmp.eq.s32.totalorder %s20, 0
      %p53 = por %p51, %p52
      %p54 = scmp.ne.s32.totalorder %s40, %s41
      %p55 = scmp.eq.s32.totalorder %s21, 1
      %p56 = por %p54, %p55
      %p58 = scmp.ne.s32.totalorder %s41, %s57
      %p59 = scmp.eq.s32.totalorder %s21, 0
      %p60 = por %p58, %p59
      %s61 = ssub.s32 %s23, %s30
      %p62 = scmp.eq.s32.totalorder %s61, 0
      %s64 = sadd.s32 %s63, 1
      %s65 = scalar_select %p62, %s63, %s64
      %p68 = pneg %p62
      %p69 = scmp.eq.s32.totalorder %s15, 1
      %p70 = por %p68, %p69
      %p71 = scmp.ne.s32.totalorder %s63, %s66
      %p72 = scmp.eq.s32.totalorder %s15, 0
      %p73 = por %p71, %p72
      %p74 = scmp.ne.s32.totalorder %s63, %s66
      %p75 = scmp.eq.s32.totalorder %s20, 1
      %p76 = por %p74, %p75
      %p77 = scmp.ne.s32.totalorder %s66, %s67
      %p78 = scmp.eq.s32.totalorder %s20, 0
      %p79 = por %p77, %p78
      %p80 = scmp.ne.s32.totalorder %s66, %s67
      %p81 = scmp.eq.s32.totalorder %s21, 1
      %p82 = por %p80, %p81
      %p84 = scmp.ne.s32.totalorder %s67, %s83
      %p85 = scmp.eq.s32.totalorder %s21, 0
      %p86 = por %p84, %p85
      %s87 = ssub.s32 %s23, %s30
      %p88 = scmp.eq.s32.totalorder %s87, 0
      %s90 = sadd.s32 %s89, 1
      %s91 = scalar_select %p88, %s89, %s90
      %p94 = pneg %p88
      %p95 = scmp.eq.s32.totalorder %s15, 1
      %p96 = por %p94, %p95
      %p97 = scmp.ne.s32.totalorder %s89, %s92
      %p98 = scmp.eq.s32.totalorder %s15, 0
      %p99 = por %p97, %p98
      %p100 = scmp.ne.s32.totalorder %s89, %s92
      %p101 = scmp.eq.s32.totalorder %s20, 1
      %p102 = por %p100, %p101
      %p103 = scmp.ne.s32.totalorder %s92, %s93
      %p104 = scmp.eq.s32.totalorder %s20, 0
      %p105 = por %p103, %p104
      %p106 = scmp.ne.s32.totalorder %s92, %s93
      %p107 = scmp.eq.s32.totalorder %s21, 1
      %p108 = por %p106, %p107
      %p110 = scmp.ne.s32.totalorder %s93, %s109
      %p111 = scmp.eq.s32.totalorder %s21, 0
      %p112 = por %p110, %p111
      %s113 = ssub.s32 %s23, %s30
      %p114 = scmp.eq.s32.totalorder %s113, 0
      %s116 = sadd.s32 %s115, 1
      %s117 = scalar_select %p114, %s115, %s116
      %p120 = pneg %p114
      %p121 = scmp.eq.s32.totalorder %s15, 1
      %p122 = por %p120, %p121
      %p123 = scmp.ne.s32.totalorder %s115, %s118
      %p124 = scmp.eq.s32.totalorder %s15, 0
      %p125 = por %p123, %p124
      %p126 = scmp.ne.s32.totalorder %s115, %s118
      %p127 = scmp.eq.s32.totalorder %s20, 1
      %p128 = por %p126, %p127
      %p129 = scmp.ne.s32.totalorder %s118, %s119
      %p130 = scmp.eq.s32.totalorder %s20, 0
      %p131 = por %p129, %p130
      %p132 = scmp.ne.s32.totalorder %s118, %s119
      %p133 = scmp.eq.s32.totalorder %s21, 1
      %p134 = por %p132, %p133
      %p136 = scmp.ne.s32.totalorder %s119, %s135
      %p137 = scmp.eq.s32.totalorder %s21, 0
      %p138 = por %p136, %p137
      %s139 = ssub.s32 %s23, %s30
      %p140 = scmp.eq.s32.totalorder %s139, 0
      %s142 = sadd.s32 %s141, 1
      %s143 = scalar_select %p140, %s141, %s142
      %p146 = pneg %p140
      %p147 = scmp.eq.s32.totalorder %s15, 1
      %p148 = por %p146, %p147
      %p149 = scmp.ne.s32.totalorder %s141, %s144
      %p150 = scmp.eq.s32.totalorder %s15, 0
      %p151 = por %p149, %p150
      %p152 = scmp.ne.s32.totalorder %s141, %s144
      %p153 = scmp.eq.s32.totalorder %s20, 1
      %p154 = por %p152, %p153
      %p155 = scmp.ne.s32.totalorder %s144, %s145
      %p156 = scmp.eq.s32.totalorder %s20, 0
      %p157 = por %p155, %p156
      %p158 = scmp.ne.s32.totalorder %s144, %s145
      %p159 = scmp.eq.s32.totalorder %s21, 1
      %p160 = por %p158, %p159
      %p162 = scmp.ne.s32.totalorder %s145, %s161
      %p163 = scmp.eq.s32.totalorder %s21, 0
      %p164 = por %p162, %p163
      %s165 = ssub.s32 %s23, %s30
      %p166 = scmp.eq.s32.totalorder %s165, 0
      %s168 = sadd.s32 %s167, 1
      %s169 = scalar_select %p166, %s167, %s168
      %p172 = pneg %p166
      %p173 = scmp.eq.s32.totalorder %s15, 1
      %p174 = por %p172, %p173
      %p175 = scmp.ne.s32.totalorder %s167, %s170
      %p176 = scmp.eq.s32.totalorder %s15, 0
      %p177 = por %p175, %p176
      %p178 = scmp.ne.s32.totalorder %s167, %s170
      %p179 = scmp.eq.s32.totalorder %s20, 1
      %p180 = por %p178, %p179
      %p181 = scmp.ne.s32.totalorder %s170, %s171
      %p182 = scmp.eq.s32.totalorder %s20, 0
      %p183 = por %p181, %p182
      %p184 = scmp.ne.s32.totalorder %s170, %s171
      %p185 = scmp.eq.s32.totalorder %s21, 1
      %p186 = por %p184, %p185
      %p188 = scmp.ne.s32.totalorder %s171, %s187
      %p189 = scmp.eq.s32.totalorder %s21, 0
      %p190 = por %p188, %p189
      %s191 = ssub.s32 %s23, %s30
      %p192 = scmp.eq.s32.totalorder %s191, 0
      %s194 = sadd.s32 %s193, 1
      %s195 = scalar_select %p192, %s193, %s194
      %p198 = pneg %p192
      %p199 = scmp.eq.s32.totalorder %s15, 1
      %p200 = por %p198, %p199
      %p201 = scmp.ne.s32.totalorder %s193, %s196
      %p202 = scmp.eq.s32.totalorder %s15, 0
      %p203 = por %p201, %p202
      %p204 = scmp.ne.s32.totalorder %s193, %s196
      %p205 = scmp.eq.s32.totalorder %s20, 1
      %p206 = por %p204, %p205
      %p207 = scmp.ne.s32.totalorder %s196, %s197
      %p208 = scmp.eq.s32.totalorder %s20, 0
      %p209 = por %p207, %p208
      %p210 = scmp.ne.s32.totalorder %s196, %s197
      %p211 = scmp.eq.s32.totalorder %s21, 1
      %p212 = por %p210, %p211
      %p214 = scmp.ne.s32.totalorder %s197, %s213
      %p215 = scmp.eq.s32.totalorder %s21, 0
      %p216 = por %p214, %p215
      %s218 = sadd.s32 %s217, 1
      %p221 = scmp.eq.s32.totalorder %s15, 1
      %p222 = scmp.ne.s32.totalorder %s217, %s219
      %p223 = scmp.eq.s32.totalorder %s15, 0
      %p224 = por %p222, %p223
      %p225 = scmp.ne.s32.totalorder %s217, %s219
      %p226 = scmp.eq.s32.totalorder %s20, 1
      %p227 = por %p225, %p226
      %p228 = scmp.ne.s32.totalorder %s219, %s220
      %p229 = scmp.eq.s32.totalorder %s20, 0
      %p230 = por %p228, %p229
      %p231 = scmp.ne.s32.totalorder %s219, %s220
      %p232 = scmp.eq.s32.totalorder %s21, 1
      %p233 = por %p231, %p232
      %p235 = scmp.ne.s32.totalorder %s220, %s234
      %p236 = scmp.eq.s32.totalorder %s21, 0
      %p237 = por %p235, %p236
      %s238 = ssub.s32 %s22, %s34
      %p239 = scmp.eq.s32.totalorder %s238, 0
      %s241 = sadd.s32 %s240, 1
      %s242 = scalar_select %p239, %s240, %s241
      %p245 = pneg %p239
      %p246 = scmp.eq.s32.totalorder %s15, 1
      %p247 = por %p245, %p246
      %p248 = scmp.ne.s32.totalorder %s240, %s243
      %p249 = scmp.eq.s32.totalorder %s15, 0
      %p250 = por %p248, %p249
      %p251 = scmp.ne.s32.totalorder %s240, %s243
      %p252 = scmp.eq.s32.totalorder %s20, 1
      %p253 = por %p251, %p252
      %p254 = scmp.ne.s32.totalorder %s243, %s244
      %p255 = scmp.eq.s32.totalorder %s20, 0
      %p256 = por %p254, %p255
      %p257 = scmp.ne.s32.totalorder %s243, %s244
      %p258 = scmp.eq.s32.totalorder %s21, 1
      %p259 = por %p257, %p258
      %p261 = scmp.ne.s32.totalorder %s244, %s260
      %p262 = scmp.eq.s32.totalorder %s21, 0
      %p263 = por %p261, %p262
      %p264 = scmp.le.s32.totalorder 1, %s15
      %p265 = scmp.lt.s32.totalorder %s15, 3
      %p266 = pnand %p264, %p265
      %p267 = pneg %p266
      // Predicated region
      $region9: #{tpu_custom_call.1} parent=5 // pred_check
        _
      $region10: #{tpu_custom_call.1} parent=5 // pred_check_branch
        %269 = sbr.rel (%p266) target = $region12
      $region11: #{tpu_custom_call.1} parent=5 // pred_region
        %s270 = ssub.s32 %s15, 1
        // Predicated region
        $region13: #{tpu_custom_call.1} parent=11 // pred_check
          %p271 = pneg %p53
        $region14: #{tpu_custom_call.1} parent=11 // pred_check_branch
          %273 = sbr.rel (%p271) target = $region16
        $region15: #{tpu_custom_call.1} parent=11 // pred_region
          %s274 = smul.u32 2, %s24
          %p275 = scmp.lt.s32.totalorder %s274, 1
          %s276 = scalar_select %p275, %s274, 1
          %s277 = smul.addr %s276, 8
          %s278 = scalar_lea.vmem %s0, %s277
          %s279 = smul.u32 2, %s24
        $region16: #{tpu_custom_call.1} parent=11 // pred_fallthru
          _
        // Predicated region
        $region17: #{tpu_custom_call.1} parent=11 // pred_check
          %p280 = pneg %p230
        $region18: #{tpu_custom_call.1} parent=11 // pred_check_branch
          %282 = sbr.rel (%p280) target = $region20
        $region19: #{tpu_custom_call.1} parent=11 // pred_region
          _
        $region20: #{tpu_custom_call.1} parent=11 // pred_fallthru
          _
      $region12: #{tpu_custom_call.1} parent=5 // pred_fallthru
        _
      %p283 = scmp.lt.s32.totalorder %s15, 2
      // Predicated region
      $region21: #{tpu_custom_call.1} parent=5 // pred_check
        %p284 = pneg %p283
      $region22: #{tpu_custom_call.1} parent=5 // pred_check_branch
        %286 = sbr.rel (%p284) target = $region24
      $region23: #{tpu_custom_call.1} parent=5 // pred_region
        // Predicated region
        $region25: #{tpu_custom_call.1} parent=23 // pred_check
          %p287 = pneg %p73
        $region26: #{tpu_custom_call.1} parent=23 // pred_check_branch
          %289 = sbr.rel (%p287) target = $region28
        $region27: #{tpu_custom_call.1} parent=23 // pred_region
          %p290 = scmp.lt.s32.totalorder %s23, 1
          %s291 = scalar_select %p290, %s23, 1
          %s292 = smul.addr %s291, 4
          %s293 = smul.addr %s292, 8
          %s294 = scalar_lea.vmem %s1, %s293
        $region28: #{tpu_custom_call.1} parent=23 // pred_fallthru
          _
        // Predicated region
        $region29: #{tpu_custom_call.1} parent=23 // pred_check
          %p295 = pneg %p99
        $region30: #{tpu_custom_call.1} parent=23 // pred_check_branch
          %297 = sbr.rel (%p295) target = $region32
        $region31: #{tpu_custom_call.1} parent=23 // pred_region
          %p298 = scmp.lt.s32.totalorder %s23, 1
          %s299 = scalar_select %p298, %s23, 1
          %s300 = smul.addr %s299, 4
          %s301 = smul.addr %s300, 8
          %s302 = scalar_lea.vmem %s2, %s301
        $region32: #{tpu_custom_call.1} parent=23 // pred_fallthru
          _
        // Predicated region
        $region33: #{tpu_custom_call.1} parent=23 // pred_check
          %p303 = pneg %p125
        $region34: #{tpu_custom_call.1} parent=23 // pred_check_branch
          %305 = sbr.rel (%p303) target = $region36
        $region35: #{tpu_custom_call.1} parent=23 // pred_region
          %p306 = scmp.lt.s32.totalorder %s23, 1
          %s307 = scalar_select %p306, %s23, 1
          %s308 = smul.addr %s307, 4
          %s309 = smul.addr %s308, 8
          %s310 = scalar_lea.vmem %s3, %s309
        $region36: #{tpu_custom_call.1} parent=23 // pred_fallthru
          _
        // Predicated region
        $region37: #{tpu_custom_call.1} parent=23 // pred_check
          %p311 = pneg %p151
        $region38: #{tpu_custom_call.1} parent=23 // pred_check_branch
          %313 = sbr.rel (%p311) target = $region40
        $region39: #{tpu_custom_call.1} parent=23 // pred_region
          %p314 = scmp.lt.s32.totalorder %s23, 1
          %s315 = scalar_select %p314, %s23, 1
          %s316 = smul.addr %s315, 16
          %s317 = smul.addr %s316, 8
          %s318 = scalar_lea.vmem %s4, %s317
        $region40: #{tpu_custom_call.1} parent=23 // pred_fallthru
          _
        // Predicated region
        $region41: #{tpu_custom_call.1} parent=23 // pred_check
          %p319 = pneg %p177
        $region42: #{tpu_custom_call.1} parent=23 // pred_check_branch
          %321 = sbr.rel (%p319) target = $region44
        $region43: #{tpu_custom_call.1} parent=23 // pred_region
          %p322 = scmp.lt.s32.totalorder %s23, 1
          %s323 = scalar_select %p322, %s23, 1
          %s324 = smul.addr %s323, 2
          %s325 = smul.addr %s324, 8
          %s326 = scalar_lea.vmem %s5, %s325
        $region44: #{tpu_custom_call.1} parent=23 // pred_fallthru
          _
        // Predicated region
        $region45: #{tpu_custom_call.1} parent=23 // pred_check
          %p327 = pneg %p203
        $region46: #{tpu_custom_call.1} parent=23 // pred_check_branch
          %329 = sbr.rel (%p327) target = $region48
        $region47: #{tpu_custom_call.1} parent=23 // pred_region
          %p330 = scmp.lt.s32.totalorder %s23, 1
          %s331 = scalar_select %p330, %s23, 1
          %s332 = scalar_lea.vmem %s6, %s331
        $region48: #{tpu_custom_call.1} parent=23 // pred_fallthru
          _
      $region24: #{tpu_custom_call.1} parent=5 // pred_fallthru
        _
      %p333 = scmp.le.s32.totalorder 1, %s15
      %p334 = scmp.lt.s32.totalorder %s15, 3
      %p335 = pnand %p333, %p334
      %p336 = pneg %p335
      // Predicated region
      $region49: #{tpu_custom_call.1} parent=5 // pred_check
        _
      $region50: #{tpu_custom_call.1} parent=5 // pred_check_branch
        %338 = sbr.rel (%p335) target = $region52
      $region51: #{tpu_custom_call.1} parent=5 // pred_region
        %s339 = ssub.s32 %s15, 1
        %s340 = smul.u32 2, %s24
        %p341 = scmp.lt.s32.totalorder %s340, 1
        %s342 = scalar_select %p341, %s340, 1
        %s343 = smul.addr %s342, 8
        %s344 = scalar_lea.vmem %s0, %s343
        %p345 = pneg %p53
        %p346 = pneg %p50
        %p347 = scmp.lt.s32.totalorder %s25, 1
        %s348 = scalar_select %p347, %s25, 1
        %s349 = smul.addr %s348, 4
        %s350 = smul.addr %s349, 8
        %s351 = scalar_lea.vmem %s1, %s350
        %p352 = pneg %p79
        %p353 = pneg %p76
        %p354 = scmp.lt.s32.totalorder %s25, 1
        %s355 = scalar_select %p354, %s25, 1
        %s356 = smul.addr %s355, 4
        %s357 = smul.addr %s356, 8
        %s358 = scalar_lea.vmem %s2, %s357
        %p359 = pneg %p105
        %p360 = pneg %p102
        %p361 = scmp.lt.s32.totalorder %s25, 1
        %s362 = scalar_select %p361, %s25, 1
        %s363 = smul.addr %s362, 4
        %s364 = smul.addr %s363, 8
        %s365 = scalar_lea.vmem %s3, %s364
        %p366 = pneg %p131
        %p367 = pneg %p128
        %p368 = scmp.lt.s32.totalorder %s25, 1
        %s369 = scalar_select %p368, %s25, 1
        %s370 = smul.addr %s369, 16
        %s371 = smul.addr %s370, 8
        %s372 = scalar_lea.vmem %s4, %s371
        %p373 = pneg %p157
        %p374 = pneg %p154
        %p375 = scmp.lt.s32.totalorder %s25, 1
        %s376 = scalar_select %p375, %s25, 1
        %s377 = smul.addr %s376, 2
        %s378 = smul.addr %s377, 8
        %s379 = scalar_lea.vmem %s5, %s378
        %p380 = pneg %p183
        %p381 = pneg %p180
        %p382 = scmp.lt.s32.totalorder %s25, 1
        %s383 = scalar_select %p382, %s25, 1
        %s384 = scalar_lea.vmem %s6, %s383
        %p385 = pneg %p209
        %p386 = pneg %p206
        %p387 = pneg %p230
        %p388 = pneg %p227
        %p389 = pneg %p256
        %p390 = pneg %p253
        %s391 = smul.u32 2, %s24
        %p392 = scmp.lt.s32.totalorder %s391, 1
        %s393 = scalar_select %p392, %s391, 1
        %s394 = smul.addr %s393, 8
        %s395 = scalar_lea.vmem %s0, %s394
        %s396 = smul.u32 2, %s24
        %p397 = scmp.lt.s32.totalorder %s25, 1
        %s398 = scalar_select %p397, %s25, 1
        %s399 = smul.addr %s398, 4
        %s400 = smul.addr %s399, 8
        %s401 = scalar_lea.vmem %s1, %s400
        %p402 = scmp.lt.s32.totalorder %s25, 1
        %s403 = scalar_select %p402, %s25, 1
        %s404 = smul.addr %s403, 4
        %s405 = smul.addr %s404, 8
        %s406 = scalar_lea.vmem %s2, %s405
        %p407 = scmp.lt.s32.totalorder %s25, 1
        %s408 = scalar_select %p407, %s25, 1
        %s409 = smul.addr %s408, 4
        %s410 = smul.addr %s409, 8
        %s411 = scalar_lea.vmem %s3, %s410
        %p412 = scmp.lt.s32.totalorder %s25, 1
        %s413 = scalar_select %p412, %s25, 1
        %s414 = smul.addr %s413, 16
        %s415 = smul.addr %s414, 8
        %s416 = scalar_lea.vmem %s4, %s415
        %p417 = scmp.lt.s32.totalorder %s25, 1
        %s418 = scalar_select %p417, %s25, 1
        %s419 = smul.addr %s418, 2
        %s420 = smul.addr %s419, 8
        %s421 = scalar_lea.vmem %s5, %s420
        %p422 = scmp.lt.s32.totalorder %s25, 1
        %s423 = scalar_select %p422, %s25, 1
        %s424 = scalar_lea.vmem %s6, %s423
        %s425 = smul.u32 2, %s24
        %p426 = scmp.eq.s32.totalorder %s25, 0
        // Predicated region
        $region53: #{tpu_custom_call.1} parent=51 // pred_check
          %p427 = pneg %p426
        $region54: #{tpu_custom_call.1} parent=51 // pred_check_branch
          %429 = sbr.rel (%p427) target = $region56
        $region55: #{tpu_custom_call.1} parent=51 // pred_region
          %v430 = vld [vmem:[%s395] sm:$0xff]
          %v431 = vld [vmem:[%s395 + $0x8] sm:$0xff]
          %vm432 = vcmask 261120
          %433 = vst.msk [vmem:[#allocation2] sm:$0xff] %vm432, %v430
          %434 = vst.msk [vmem:[#allocation2 + $0x8] sm:$0xff] %vm432, %v431
        $region56: #{tpu_custom_call.1} parent=51 // pred_fallthru
          _
        %v435 = vld [vmem:[#allocation2] sm:$0xff]
        %v436 = vld [vmem:[#allocation2 + $0x8] sm:$0xff]
        %v437 = vld [vmem:[%s421] sm:$0xff]
        %v438 = vld [vmem:[%s421 + $0x8] sm:$0x1]
        %vm439 = vcmask 261120
        %v440 = vsel %vm439, %v435, 0.0
        %441 = vadd.xlane.f32.xlu0 %v440
        %v442 = vpop.xlane.xlu0 %441
        %v443 = vsel %vm439, %v436, 0.0
        %444 = vadd.xlane.f32.xlu0 %v443
        %v445 = vpop.xlane.xlu0 %444
        %v446 = vrcp.pop 32.0
        %v447 = vmul.f32 %v442, %v446
        %v448 = vmul.f32 %v445, %v446
        %v449 = vsub.f32 %v435, %v447
        %v450 = vsub.f32 %v436, %v448
        %v451 = vmul.f32 %v449, %v449
        %v452 = vmul.f32 %v450, %v450
        %v453 = vsel %vm439, %v451, 0.0
        %454 = vadd.xlane.f32.xlu0 %v453
        %v455 = vpop.xlane.xlu0 %454
        %v456 = vsel %vm439, %v452, 0.0
        %457 = vadd.xlane.f32.xlu0 %v456
        %v458 = vpop.xlane.xlu0 %457
        %v459 = vmul.f32 %v455, %v446
        %v460 = vmul.f32 %v458, %v446
        %v461 = vadd.f32 %v459, 1e-05
        %v462 = vadd.f32 %v460, 1e-05
        %v463 = vrsqrt.pop %v461
        %v464 = vrsqrt.pop %v462
        %v465 = vmul.f32 %v449, %v463
        %v466 = vmul.f32 %v450, %v464
        %v467 = vlaneseq
        %v468 = vshrl.u32 %v467, 7
        %v469 = vsub.s32 0, %v468
        %v470 = vrot.slane %v437, %v469
        %v471 = vmul.f32 %v465, %v470
        %v472 = vmul.f32 %v466, %v470
        %v473 = vlaneseq
        %v474 = vshrl.u32 %v473, 7
        %v475 = vsub.s32 1, %v474
        %v476 = vrot.slane %v437, %v475
        %v477 = vadd.f32 %v471, %v476
        %v478 = vadd.f32 %v472, %v476
        %v479 = vld [vmem:[%s401] sm:$0xff]
        %v480 = vld [vmem:[%s401 + $0x8] sm:$0xff]
        %v481 = vld [vmem:[%s401 + $0x10] sm:$0xff]
        %v482 = vld [vmem:[%s401 + $0x18] sm:$0xff]
        %v484 = vsel %vm439, %v477, 0
        %v487 = vsel %vm439, %v478, 0
        %489 = vmatprep.subr.mxu0 0.0
        %490 = vmatpush1.msra.mxu0 %v479
        %491 = vmatprep.subr.mxu0 0.0
        %492 = vmatpush1.msra.mxu0 %v480
        %493 = vmatprep.subr.mxu0 0.0
        %494 = vmatpush1.msra.mxu0 %v481
        %495 = vmatprep.subr.mxu0 0.0
        %496 = vmatpush1.msra.mxu0 %v482
        %497 = vmatprep.subr.mxu0 0.0
        %498 = vmatpush1.msra.mxu0 0.0
        %499 = vmatprep.subr.mxu0 0.0
        %500 = vmatpush1.msra.mxu0 0.0
        %501 = vmatprep.subr.mxu0 0.0
        %502 = vmatpush1.msra.mxu0 0.0
        %503 = vmatprep.subr.mxu0 0.0
        %504 = vmatpush1.msra.mxu0 0.0
        %505 = vmatprep.subr.mxu0 0.0
        %506 = vmatpush1.msra.mxu0 0.0
        %507 = vmatprep.subr.mxu0 0.0
        %508 = vmatpush1.msra.mxu0 0.0
        %509 = vmatprep.subr.mxu0 0.0
        %510 = vmatpush1.msra.mxu0 0.0
        %511 = vmatprep.subr.mxu0 0.0
        %512 = vmatpush1.msra.mxu0 0.0
        %513 = vmatprep.subr.mxu0 0.0
        %514 = vmatpush1.msra.mxu0 0.0
        %515 = vmatprep.subr.mxu0 0.0
        %516 = vmatpush1.msra.mxu0 0.0
        %517 = vmatprep.subr.mxu0 0.0
        %518 = vmatpush1.msra.mxu0 0.0
        %519 = vmatprep.subr.mxu0 0.0
        %520 = vmatpush1.msra.mxu0 0.0
        %521 = vmatprep.subr.mxu0 0.0
        %522 = vmatpush1.msra.mxu0 0.0
        %523 = vmatprep.subr.mxu0 0.0
        %524 = vmatpush1.msra.mxu0 0.0
        %525 = vmatprep.subr.mxu0 0.0
        %526 = vmatpush1.msra.mxu0 0.0
        %527 = vmatprep.subr.mxu0 0.0
        %528 = vmatpush1.msra.mxu0 0.0
        %529 = vmatprep.subr.mxu0 0.0
        %530 = vmatpush1.msra.mxu0 0.0
        %531 = vmatprep.subr.mxu0 0.0
        %532 = vmatpush1.msra.mxu0 0.0
        %533 = vmatprep.subr.mxu0 0.0
        %534 = vmatpush1.msra.mxu0 0.0
        %535 = vmatprep.subr.mxu0 0.0
        %536 = vmatpush1.msra.mxu0 0.0
        %537 = vmatprep.subr.mxu0 0.0
        %538 = vmatpush1.msra.mxu0 0.0
        %539 = vmatprep.subr.mxu0 0.0
        %540 = vmatpush1.msra.mxu0 0.0
        %541 = vmatprep.subr.mxu0 0.0
        %542 = vmatpush1.msra.mxu0 0.0
        %543 = vmatprep.subr.mxu0 0.0
        %544 = vmatpush1.msra.mxu0 0.0
        %545 = vmatprep.subr.mxu0 0.0
        %546 = vmatpush1.msra.mxu0 0.0
        %547 = vmatprep.subr.mxu0 0.0
        %548 = vmatpush1.msra.mxu0 0.0
        %549 = vmatprep.subr.mxu0 0.0
        %550 = vmatpush1.msra.mxu0 0.0
        %551 = vmatprep.subr.mxu0 0.0
        %552 = vmatpush1.msra.mxu0 0.0
        %553 = vmatprep.mubr.f32.mxu0 0.0
        %554 = vmatmul.mubr.f32.gmra.mrb[0].mxu0 %v484
        %v555 = vpop.f32.mrb[0].mxu0
        %v556 = vadd.f32 0.0, %v555
        %v557 = vpop.f32.mrb[0].mxu0
        %558 = vmatprep.mubr.f32.mxu0 0.0
        %559 = vmatmul.mubr.f32.gmra.mrb[0].mxu0 %v487
        %v560 = vpop.f32.mrb[0].mxu0
        %v561 = vadd.f32 0.0, %v560
        %v562 = vpop.f32.mrb[0].mxu0
        %563 = vdwg.mxu0
        %v564 = vlaneseq
        %v565 = vshrl.u32 %v564, 7
        %v566 = vsub.s32 2, %v565
        %v567 = vrot.slane %v437, %v566
        %v568 = vadd.f32 %v556, %v567
        %v569 = vadd.f32 %v561, %v567
        %570 = vxpose.xlu0.b32.start [1/16] %v568, 128
        %571 = vxpose.xlu0.b32.cont [2/16] 0.0, 128
        %572 = vxpose.xlu0.b32.cont [3/16] 0.0, 128
        %573 = vxpose.xlu0.b32.cont [4/16] 0.0, 128
        %574 = vxpose.xlu0.b32.cont [5/16] 0.0, 128
        %575 = vxpose.xlu0.b32.cont [6/16] 0.0, 128
        %576 = vxpose.xlu0.b32.cont [7/16] 0.0, 128
        %577 = vxpose.xlu0.b32.cont [8/16] 0.0, 128
        %578 = vxpose.xlu0.b32.cont [9/16] 0.0, 128
        %579 = vxpose.xlu0.b32.cont [10/16] 0.0, 128
        %580 = vxpose.xlu0.b32.cont [11/16] 0.0, 128
        %581 = vxpose.xlu0.b32.cont [12/16] 0.0, 128
        %582 = vxpose.xlu0.b32.cont [13/16] 0.0, 128
        %583 = vxpose.xlu0.b32.cont [14/16] 0.0, 128
        %584 = vxpose.xlu0.b32.cont [15/16] 0.0, 128
        %585 = vxpose.xlu0.b32.end [16/16] 0.0, 128
        %v586 = vpop.trf.xlu0
        %v587 = vpop.trf.xlu0
        %v588 = vpop.trf.xlu0
        %v589 = vpop.trf.xlu0
        %v590 = vpop.trf.xlu0
        %v591 = vpop.trf.xlu0
        %v592 = vpop.trf.xlu0
        %v593 = vpop.trf.xlu0
        %v594 = vpop.trf.xlu0
        %v595 = vpop.trf.xlu0
        %v596 = vpop.trf.xlu0
        %v597 = vpop.trf.xlu0
        %v598 = vpop.trf.xlu0
        %v599 = vpop.trf.xlu0
        %v600 = vpop.trf.xlu0
        %v601 = vpop.trf.xlu0
        %602 = vxpose.xlu0.b32.start [1/16] %v569, 128
        %603 = vxpose.xlu0.b32.cont [2/16] 0.0, 128
        %604 = vxpose.xlu0.b32.cont [3/16] 0.0, 128
        %605 = vxpose.xlu0.b32.cont [4/16] 0.0, 128
        %606 = vxpose.xlu0.b32.cont [5/16] 0.0, 128
        %607 = vxpose.xlu0.b32.cont [6/16] 0.0, 128
        %608 = vxpose.xlu0.b32.cont [7/16] 0.0, 128
        %609 = vxpose.xlu0.b32.cont [8/16] 0.0, 128
        %610 = vxpose.xlu0.b32.cont [9/16] 0.0, 128
        %611 = vxpose.xlu0.b32.cont [10/16] 0.0, 128
        %612 = vxpose.xlu0.b32.cont [11/16] 0.0, 128
        %613 = vxpose.xlu0.b32.cont [12/16] 0.0, 128
        %614 = vxpose.xlu0.b32.cont [13/16] 0.0, 128
        %615 = vxpose.xlu0.b32.cont [14/16] 0.0, 128
        %616 = vxpose.xlu0.b32.cont [15/16] 0.0, 128
        %617 = vxpose.xlu0.b32.end [16/16] 0.0, 128
        %v618 = vpop.trf.xlu0
        %v619 = vpop.trf.xlu0
        %v620 = vpop.trf.xlu0
        %v621 = vpop.trf.xlu0
        %v622 = vpop.trf.xlu0
        %v623 = vpop.trf.xlu0
        %v624 = vpop.trf.xlu0
        %v625 = vpop.trf.xlu0
        %v626 = vpop.trf.xlu0
        %v627 = vpop.trf.xlu0
        %v628 = vpop.trf.xlu0
        %v629 = vpop.trf.xlu0
        %v630 = vpop.trf.xlu0
        %v631 = vpop.trf.xlu0
        %v632 = vpop.trf.xlu0
        %v633 = vpop.trf.xlu0
        %v634 = vlaneseq
        %v635 = vshrl.u32 %v634, 7
        %v636 = vsub.s32 3, %v635
        %v637 = vrot.slane %v437, %v636
        %639 = vrot.lane.b32.xlu0 %v637, 32
        %v640 = vpop.permute.xlu0 %639
        %v642 = vadd.f32 %v556, %v640
        %v643 = vadd.f32 %v561, %v640
        %646 = vrot.lane.b32.xlu0 %v642, 96
        %v647 = vpop.permute.xlu0 %646
        %648 = vrot.lane.b32.xlu0 %v643, 96
        %v649 = vpop.permute.xlu0 %648
        %652 = vxpose.xlu0.b32.start [1/16] %v647, 128
        %653 = vxpose.xlu0.b32.cont [2/16] 0.0, 128
        %654 = vxpose.xlu0.b32.cont [3/16] 0.0, 128
        %655 = vxpose.xlu0.b32.cont [4/16] 0.0, 128
        %656 = vxpose.xlu0.b32.cont [5/16] 0.0, 128
        %657 = vxpose.xlu0.b32.cont [6/16] 0.0, 128
        %658 = vxpose.xlu0.b32.cont [7/16] 0.0, 128
        %659 = vxpose.xlu0.b32.cont [8/16] 0.0, 128
        %660 = vxpose.xlu0.b32.cont [9/16] 0.0, 128
        %661 = vxpose.xlu0.b32.cont [10/16] 0.0, 128
        %662 = vxpose.xlu0.b32.cont [11/16] 0.0, 128
        %663 = vxpose.xlu0.b32.cont [12/16] 0.0, 128
        %664 = vxpose.xlu0.b32.cont [13/16] 0.0, 128
        %665 = vxpose.xlu0.b32.cont [14/16] 0.0, 128
        %666 = vxpose.xlu0.b32.cont [15/16] 0.0, 128
        %667 = vxpose.xlu0.b32.end [16/16] 0.0, 128
        %v668 = vpop.trf.xlu0
        %v669 = vpop.trf.xlu0
        %v670 = vpop.trf.xlu0
        %v671 = vpop.trf.xlu0
        %v672 = vpop.trf.xlu0
        %v673 = vpop.trf.xlu0
        %v674 = vpop.trf.xlu0
        %v675 = vpop.trf.xlu0
        %v676 = vpop.trf.xlu0
        %v677 = vpop.trf.xlu0
        %v678 = vpop.trf.xlu0
        %v679 = vpop.trf.xlu0
        %v680 = vpop.trf.xlu0
        %v681 = vpop.trf.xlu0
        %v682 = vpop.trf.xlu0
        %v683 = vpop.trf.xlu0
        %684 = vxpose.xlu0.b32.start [1/16] %v649, 128
        %685 = vxpose.xlu0.b32.cont [2/16] 0.0, 128
        %686 = vxpose.xlu0.b32.cont [3/16] 0.0, 128
        %687 = vxpose.xlu0.b32.cont [4/16] 0.0, 128
        %688 = vxpose.xlu0.b32.cont [5/16] 0.0, 128
        %689 = vxpose.xlu0.b32.cont [6/16] 0.0, 128
        %690 = vxpose.xlu0.b32.cont [7/16] 0.0, 128
        %691 = vxpose.xlu0.b32.cont [8/16] 0.0, 128
        %692 = vxpose.xlu0.b32.cont [9/16] 0.0, 128
        %693 = vxpose.xlu0.b32.cont [10/16] 0.0, 128
        %694 = vxpose.xlu0.b32.cont [11/16] 0.0, 128
        %695 = vxpose.xlu0.b32.cont [12/16] 0.0, 128
        %696 = vxpose.xlu0.b32.cont [13/16] 0.0, 128
        %697 = vxpose.xlu0.b32.cont [14/16] 0.0, 128
        %698 = vxpose.xlu0.b32.cont [15/16] 0.0, 128
        %699 = vxpose.xlu0.b32.end [16/16] 0.0, 128
        %v700 = vpop.trf.xlu0
        %v701 = vpop.trf.xlu0
        %v702 = vpop.trf.xlu0
        %v703 = vpop.trf.xlu0
        %v704 = vpop.trf.xlu0
        %v705 = vpop.trf.xlu0
        %v706 = vpop.trf.xlu0
        %v707 = vpop.trf.xlu0
        %v708 = vpop.trf.xlu0
        %v709 = vpop.trf.xlu0
        %v710 = vpop.trf.xlu0
        %v711 = vpop.trf.xlu0
        %v712 = vpop.trf.xlu0
        %v713 = vpop.trf.xlu0
        %v714 = vpop.trf.xlu0
        %v715 = vpop.trf.xlu0
        %v716 = vlaneseq
        %v717 = vshrl.u32 %v716, 7
        %v718 = vsub.s32 4, %v717
        %v719 = vrot.slane %v437, %v718
        %721 = vrot.lane.b32.xlu0 %v719, 64
        %v722 = vpop.permute.xlu0 %721
        %v724 = vadd.f32 %v556, %v722
        %v725 = vadd.f32 %v561, %v722
        %728 = vrot.lane.b32.xlu0 %v724, 64
        %v729 = vpop.permute.xlu0 %728
        %730 = vrot.lane.b32.xlu0 %v725, 64
        %v731 = vpop.permute.xlu0 %730
        %734 = vxpose.xlu0.b32.start [1/16] %v729, 128
        %735 = vxpose.xlu0.b32.cont [2/16] 0.0, 128
        %736 = vxpose.xlu0.b32.cont [3/16] 0.0, 128
        %737 = vxpose.xlu0.b32.cont [4/16] 0.0, 128
        %738 = vxpose.xlu0.b32.cont [5/16] 0.0, 128
        %739 = vxpose.xlu0.b32.cont [6/16] 0.0, 128
        %740 = vxpose.xlu0.b32.cont [7/16] 0.0, 128
        %741 = vxpose.xlu0.b32.cont [8/16] 0.0, 128
        %742 = vxpose.xlu0.b32.cont [9/16] 0.0, 128
        %743 = vxpose.xlu0.b32.cont [10/16] 0.0, 128
        %744 = vxpose.xlu0.b32.cont [11/16] 0.0, 128
        %745 = vxpose.xlu0.b32.cont [12/16] 0.0, 128
        %746 = vxpose.xlu0.b32.cont [13/16] 0.0, 128
        %747 = vxpose.xlu0.b32.cont [14/16] 0.0, 128
        %748 = vxpose.xlu0.b32.cont [15/16] 0.0, 128
        %749 = vxpose.xlu0.b32.end [16/16] 0.0, 128
        %v750 = vpop.trf.xlu0
        %v751 = vpop.trf.xlu0
        %v752 = vpop.trf.xlu0
        %v753 = vpop.trf.xlu0
        %v754 = vpop.trf.xlu0
        %v755 = vpop.trf.xlu0
        %v756 = vpop.trf.xlu0
        %v757 = vpop.trf.xlu0
        %v758 = vpop.trf.xlu0
        %v759 = vpop.trf.xlu0
        %v760 = vpop.trf.xlu0
        %v761 = vpop.trf.xlu0
        %v762 = vpop.trf.xlu0
        %v763 = vpop.trf.xlu0
        %v764 = vpop.trf.xlu0
        %v765 = vpop.trf.xlu0
        %766 = vxpose.xlu0.b32.start [1/16] %v731, 128
        %767 = vxpose.xlu0.b32.cont [2/16] 0.0, 128
        %768 = vxpose.xlu0.b32.cont [3/16] 0.0, 128
        %769 = vxpose.xlu0.b32.cont [4/16] 0.0, 128
        %770 = vxpose.xlu0.b32.cont [5/16] 0.0, 128
        %771 = vxpose.xlu0.b32.cont [6/16] 0.0, 128
        %772 = vxpose.xlu0.b32.cont [7/16] 0.0, 128
        %773 = vxpose.xlu0.b32.cont [8/16] 0.0, 128
        %774 = vxpose.xlu0.b32.cont [9/16] 0.0, 128
        %775 = vxpose.xlu0.b32.cont [10/16] 0.0, 128
        %776 = vxpose.xlu0.b32.cont [11/16] 0.0, 128
        %777 = vxpose.xlu0.b32.cont [12/16] 0.0, 128
        %778 = vxpose.xlu0.b32.cont [13/16] 0.0, 128
        %779 = vxpose.xlu0.b32.cont [14/16] 0.0, 128
        %780 = vxpose.xlu0.b32.cont [15/16] 0.0, 128
        %781 = vxpose.xlu0.b32.end [16/16] 0.0, 128
        %v782 = vpop.trf.xlu0
        %v783 = vpop.trf.xlu0
        %v784 = vpop.trf.xlu0
        %v785 = vpop.trf.xlu0
        %v786 = vpop.trf.xlu0
        %v787 = vpop.trf.xlu0
        %v788 = vpop.trf.xlu0
        %v789 = vpop.trf.xlu0
        %v790 = vpop.trf.xlu0
        %v791 = vpop.trf.xlu0
        %v792 = vpop.trf.xlu0
        %v793 = vpop.trf.xlu0
        %v794 = vpop.trf.xlu0
        %v795 = vpop.trf.xlu0
        %v796 = vpop.trf.xlu0
        %v797 = vpop.trf.xlu0
        %798 = vxpose.xlu0.b32.start [1/16] %v586, 128
        %799 = vxpose.xlu0.b32.cont [2/16] 0.0, 128
        %800 = vxpose.xlu0.b32.cont [3/16] 0.0, 128
        %801 = vxpose.xlu0.b32.cont [4/16] 0.0, 128
        %802 = vxpose.xlu0.b32.cont [5/16] 0.0, 128
        %803 = vxpose.xlu0.b32.cont [6/16] 0.0, 128
        %804 = vxpose.xlu0.b32.cont [7/16] 0.0, 128
        %805 = vxpose.xlu0.b32.cont [8/16] 0.0, 128
        %806 = vxpose.xlu0.b32.cont [9/16] 0.0, 128
        %807 = vxpose.xlu0.b32.cont [10/16] 0.0, 128
        %808 = vxpose.xlu0.b32.cont [11/16] 0.0, 128
        %809 = vxpose.xlu0.b32.cont [12/16] 0.0, 128
        %810 = vxpose.xlu0.b32.cont [13/16] 0.0, 128
        %811 = vxpose.xlu0.b32.cont [14/16] 0.0, 128
        %812 = vxpose.xlu0.b32.cont [15/16] 0.0, 128
        %813 = vxpose.xlu0.b32.end [16/16] 0.0, 128
        %v814 = vpop.trf.xlu0
        %v815 = vpop.trf.xlu0
        %v816 = vpop.trf.xlu0
        %v817 = vpop.trf.xlu0
        %v818 = vpop.trf.xlu0
        %v819 = vpop.trf.xlu0
        %v820 = vpop.trf.xlu0
        %v821 = vpop.trf.xlu0
        %v822 = vpop.trf.xlu0
        %v823 = vpop.trf.xlu0
        %v824 = vpop.trf.xlu0
        %v825 = vpop.trf.xlu0
        %v826 = vpop.trf.xlu0
        %v827 = vpop.trf.xlu0
        %v828 = vpop.trf.xlu0
        %v829 = vpop.trf.xlu0
        %830 = vxpose.xlu0.b32.start [1/16] %v587, 128
        %831 = vxpose.xlu0.b32.cont [2/16] 0.0, 128
        %832 = vxpose.xlu0.b32.cont [3/16] 0.0, 128
        %833 = vxpose.xlu0.b32.cont [4/16] 0.0, 128
        %834 = vxpose.xlu0.b32.cont [5/16] 0.0, 128
        %835 = vxpose.xlu0.b32.cont [6/16] 0.0, 128
        %836 = vxpose.xlu0.b32.cont [7/16] 0.0, 128
        %837 = vxpose.xlu0.b32.cont [8/16] 0.0, 128
        %838 = vxpose.xlu0.b32.cont [9/16] 0.0, 128
        %839 = vxpose.xlu0.b32.cont [10/16] 0.0, 128
        %840 = vxpose.xlu0.b32.cont [11/16] 0.0, 128
        %841 = vxpose.xlu0.b32.cont [12/16] 0.0, 128
        %842 = vxpose.xlu0.b32.cont [13/16] 0.0, 128
        %843 = vxpose.xlu0.b32.cont [14/16] 0.0, 128
        %844 = vxpose.xlu0.b32.cont [15/16] 0.0, 128
        %845 = vxpose.xlu0.b32.end [16/16] 0.0, 128
        %v846 = vpop.trf.xlu0
        %v847 = vpop.trf.xlu0
        %v848 = vpop.trf.xlu0
        %v849 = vpop.trf.xlu0
        %v850 = vpop.trf.xlu0
        %v851 = vpop.trf.xlu0
        %v852 = vpop.trf.xlu0
        %v853 = vpop.trf.xlu0
        %v854 = vpop.trf.xlu0
        %v855 = vpop.trf.xlu0
        %v856 = vpop.trf.xlu0
        %v857 = vpop.trf.xlu0
        %v858 = vpop.trf.xlu0
        %v859 = vpop.trf.xlu0
        %v860 = vpop.trf.xlu0
        %v861 = vpop.trf.xlu0
        %862 = vxpose.xlu0.b32.start [1/16] %v588, 128
        %863 = vxpose.xlu0.b32.cont [2/16] 0.0, 128
        %864 = vxpose.xlu0.b32.cont [3/16] 0.0, 128
        %865 = vxpose.xlu0.b32.cont [4/16] 0.0, 128
        %866 = vxpose.xlu0.b32.cont [5/16] 0.0, 128
        %867 = vxpose.xlu0.b32.cont [6/16] 0.0, 128
        %868 = vxpose.xlu0.b32.cont [7/16] 0.0, 128
        %869 = vxpose.xlu0.b32.cont [8/16] 0.0, 128
        %870 = vxpose.xlu0.b32.cont [9/16] 0.0, 128
        %871 = vxpose.xlu0.b32.cont [10/16] 0.0, 128
        %872 = vxpose.xlu0.b32.cont [11/16] 0.0, 128
        %873 = vxpose.xlu0.b32.cont [12/16] 0.0, 128
        %874 = vxpose.xlu0.b32.cont [13/16] 0.0, 128
        %875 = vxpose.xlu0.b32.cont [14/16] 0.0, 128
        %876 = vxpose.xlu0.b32.cont [15/16] 0.0, 128
        %877 = vxpose.xlu0.b32.end [16/16] 0.0, 128
        %v878 = vpop.trf.xlu0
        %v879 = vpop.trf.xlu0
        %v880 = vpop.trf.xlu0
        %v881 = vpop.trf.xlu0
        %v882 = vpop.trf.xlu0
        %v883 = vpop.trf.xlu0
        %v884 = vpop.trf.xlu0
        %v885 = vpop.trf.xlu0
        %v886 = vpop.trf.xlu0
        %v887 = vpop.trf.xlu0
        %v888 = vpop.trf.xlu0
        %v889 = vpop.trf.xlu0
        %v890 = vpop.trf.xlu0
        %v891 = vpop.trf.xlu0
        %v892 = vpop.trf.xlu0
        %v893 = vpop.trf.xlu0
        %894 = vxpose.xlu0.b32.start [1/16] %v589, 128
        %895 = vxpose.xlu0.b32.cont [2/16] 0.0, 128
        %896 = vxpose.xlu0.b32.cont [3/16] 0.0, 128
        %897 = vxpose.xlu0.b32.cont [4/16] 0.0, 128
        %898 = vxpose.xlu0.b32.cont [5/16] 0.0, 128
        %899 = vxpose.xlu0.b32.cont [6/16] 0.0, 128
        %900 = vxpose.xlu0.b32.cont [7/16] 0.0, 128
        %901 = vxpose.xlu0.b32.cont [8/16] 0.0, 128
        %902 = vxpose.xlu0.b32.cont [9/16] 0.0, 128
        %903 = vxpose.xlu0.b32.cont [10/16] 0.0, 128
        %904 = vxpose.xlu0.b32.cont [11/16] 0.0, 128
        %905 = vxpose.xlu0.b32.cont [12/16] 0.0, 128
        %906 = vxpose.xlu0.b32.cont [13/16] 0.0, 128
        %907 = vxpose.xlu0.b32.cont [14/16] 0.0, 128
        %908 = vxpose.xlu0.b32.cont [15/16] 0.0, 128
        %909 = vxpose.xlu0.b32.end [16/16] 0.0, 128
        %v910 = vpop.trf.xlu0
        %v911 = vpop.trf.xlu0
        %v912 = vpop.trf.xlu0
        %v913 = vpop.trf.xlu0
        %v914 = vpop.trf.xlu0
        %v915 = vpop.trf.xlu0
        %v916 = vpop.trf.xlu0
        %v917 = vpop.trf.xlu0
        %v918 = vpop.trf.xlu0
        %v919 = vpop.trf.xlu0
        %v920 = vpop.trf.xlu0
        %v921 = vpop.trf.xlu0
        %v922 = vpop.trf.xlu0
        %v923 = vpop.trf.xlu0
        %v924 = vpop.trf.xlu0
        %v925 = vpop.trf.xlu0
        %926 = vxpose.xlu0.b32.start [1/16] %v618, 128
        %927 = vxpose.xlu0.b32.cont [2/16] 0.0, 128
        %928 = vxpose.xlu0.b32.cont [3/16] 0.0, 128
        %929 = vxpose.xlu0.b32.cont [4/16] 0.0, 128
        %930 = vxpose.xlu0.b32.cont [5/16] 0.0, 128
        %931 = vxpose.xlu0.b32.cont [6/16] 0.0, 128
        %932 = vxpose.xlu0.b32.cont [7/16] 0.0, 128
        %933 = vxpose.xlu0.b32.cont [8/16] 0.0, 128
        %934 = vxpose.xlu0.b32.cont [9/16] 0.0, 128
        %935 = vxpose.xlu0.b32.cont [10/16] 0.0, 128
        %936 = vxpose.xlu0.b32.cont [11/16] 0.0, 128
        %937 = vxpose.xlu0.b32.cont [12/16] 0.0, 128
        %938 = vxpose.xlu0.b32.cont [13/16] 0.0, 128
        %939 = vxpose.xlu0.b32.cont [14/16] 0.0, 128
        %940 = vxpose.xlu0.b32.cont [15/16] 0.0, 128
        %941 = vxpose.xlu0.b32.end [16/16] 0.0, 128
        %v942 = vpop.trf.xlu0
        %v943 = vpop.trf.xlu0
        %v944 = vpop.trf.xlu0
        %v945 = vpop.trf.xlu0
        %v946 = vpop.trf.xlu0
        %v947 = vpop.trf.xlu0
        %v948 = vpop.trf.xlu0
        %v949 = vpop.trf.xlu0
        %v950 = vpop.trf.xlu0
        %v951 = vpop.trf.xlu0
        %v952 = vpop.trf.xlu0
        %v953 = vpop.trf.xlu0
        %v954 = vpop.trf.xlu0
        %v955 = vpop.trf.xlu0
        %v956 = vpop.trf.xlu0
        %v957 = vpop.trf.xlu0
        %958 = vxpose.xlu0.b32.start [1/16] %v619, 128
        %959 = vxpose.xlu0.b32.cont [2/16] 0.0, 128
        %960 = vxpose.xlu0.b32.cont [3/16] 0.0, 128
        %961 = vxpose.xlu0.b32.cont [4/16] 0.0, 128
        %962 = vxpose.xlu0.b32.cont [5/16] 0.0, 128
        %963 = vxpose.xlu0.b32.cont [6/16] 0.0, 128
        %964 = vxpose.xlu0.b32.cont [7/16] 0.0, 128
        %965 = vxpose.xlu0.b32.cont [8/16] 0.0, 128
        %966 = vxpose.xlu0.b32.cont [9/16] 0.0, 128
        %967 = vxpose.xlu0.b32.cont [10/16] 0.0, 128
        %968 = vxpose.xlu0.b32.cont [11/16] 0.0, 128
        %969 = vxpose.xlu0.b32.cont [12/16] 0.0, 128
        %970 = vxpose.xlu0.b32.cont [13/16] 0.0, 128
        %971 = vxpose.xlu0.b32.cont [14/16] 0.0, 128
        %972 = vxpose.xlu0.b32.cont [15/16] 0.0, 128
        %973 = vxpose.xlu0.b32.end [16/16] 0.0, 128
        %v974 = vpop.trf.xlu0
        %v975 = vpop.trf.xlu0
        %v976 = vpop.trf.xlu0
        %v977 = vpop.trf.xlu0
        %v978 = vpop.trf.xlu0
        %v979 = vpop.trf.xlu0
        %v980 = vpop.trf.xlu0
        %v981 = vpop.trf.xlu0
        %v982 = vpop.trf.xlu0
        %v983 = vpop.trf.xlu0
        %v984 = vpop.trf.xlu0
        %v985 = vpop.trf.xlu0
        %v986 = vpop.trf.xlu0
        %v987 = vpop.trf.xlu0
        %v988 = vpop.trf.xlu0
        %v989 = vpop.trf.xlu0
        %990 = vxpose.xlu0.b32.start [1/16] %v620, 128
        %991 = vxpose.xlu0.b32.cont [2/16] 0.0, 128
        %992 = vxpose.xlu0.b32.cont [3/16] 0.0, 128
        %993 = vxpose.xlu0.b32.cont [4/16] 0.0, 128
        %994 = vxpose.xlu0.b32.cont [5/16] 0.0, 128
        %995 = vxpose.xlu0.b32.cont [6/16] 0.0, 128
        %996 = vxpose.xlu0.b32.cont [7/16] 0.0, 128
        %997 = vxpose.xlu0.b32.cont [8/16] 0.0, 128
        %998 = vxpose.xlu0.b32.cont [9/16] 0.0, 128
        %999 = vxpose.xlu0.b32.cont [10/16] 0.0, 128
        %1000 = vxpose.xlu0.b32.cont [11/16] 0.0, 128
        %1001 = vxpose.xlu0.b32.cont [12/16] 0.0, 128
        %1002 = vxpose.xlu0.b32.cont [13/16] 0.0, 128
        %1003 = vxpose.xlu0.b32.cont [14/16] 0.0, 128
        %1004 = vxpose.xlu0.b32.cont [15/16] 0.0, 128
        %1005 = vxpose.xlu0.b32.end [16/16] 0.0, 128
        %v1006 = vpop.trf.xlu0
        %v1007 = vpop.trf.xlu0
        %v1008 = vpop.trf.xlu0
        %v1009 = vpop.trf.xlu0
        %v1010 = vpop.trf.xlu0
        %v1011 = vpop.trf.xlu0
        %v1012 = vpop.trf.xlu0
        %v1013 = vpop.trf.xlu0
        %v1014 = vpop.trf.xlu0
        %v1015 = vpop.trf.xlu0
        %v1016 = vpop.trf.xlu0
        %v1017 = vpop.trf.xlu0
        %v1018 = vpop.trf.xlu0
        %v1019 = vpop.trf.xlu0
        %v1020 = vpop.trf.xlu0
        %v1021 = vpop.trf.xlu0
        %1022 = vxpose.xlu0.b32.start [1/16] %v621, 128
        %1023 = vxpose.xlu0.b32.cont [2/16] 0.0, 128
        %1024 = vxpose.xlu0.b32.cont [3/16] 0.0, 128
        %1025 = vxpose.xlu0.b32.cont [4/16] 0.0, 128
        %1026 = vxpose.xlu0.b32.cont [5/16] 0.0, 128
        %1027 = vxpose.xlu0.b32.cont [6/16] 0.0, 128
        %1028 = vxpose.xlu0.b32.cont [7/16] 0.0, 128
        %1029 = vxpose.xlu0.b32.cont [8/16] 0.0, 128
        %1030 = vxpose.xlu0.b32.cont [9/16] 0.0, 128
        %1031 = vxpose.xlu0.b32.cont [10/16] 0.0, 128
        %1032 = vxpose.xlu0.b32.cont [11/16] 0.0, 128
        %1033 = vxpose.xlu0.b32.cont [12/16] 0.0, 128
        %1034 = vxpose.xlu0.b32.cont [13/16] 0.0, 128
        %1035 = vxpose.xlu0.b32.cont [14/16] 0.0, 128
        %1036 = vxpose.xlu0.b32.cont [15/16] 0.0, 128
        %1037 = vxpose.xlu0.b32.end [16/16] 0.0, 128
        %v1038 = vpop.trf.xlu0
        %v1039 = vpop.trf.xlu0
        %v1040 = vpop.trf.xlu0
        %v1041 = vpop.trf.xlu0
        %v1042 = vpop.trf.xlu0
        %v1043 = vpop.trf.xlu0
        %v1044 = vpop.trf.xlu0
        %v1045 = vpop.trf.xlu0
        %v1046 = vpop.trf.xlu0
        %v1047 = vpop.trf.xlu0
        %v1048 = vpop.trf.xlu0
        %v1049 = vpop.trf.xlu0
        %v1050 = vpop.trf.xlu0
        %v1051 = vpop.trf.xlu0
        %v1052 = vpop.trf.xlu0
        %v1053 = vpop.trf.xlu0
        %vm1054 = vcmask 64512
        %v1056 = vsel %vm1054, %v814, 0
        %1058 = vmatprep.subr.mxu0 0.0
        %1059 = vmatpush1.msra.mxu0 %v668
        %1060 = vmatprep.subr.mxu0 0.0
        %1061 = vmatpush1.msra.mxu0 0.0
        %1062 = vmatprep.subr.mxu0 0.0
        %1063 = vmatpush1.msra.mxu0 0.0
        %1064 = vmatprep.subr.mxu0 0.0
        %1065 = vmatpush1.msra.mxu0 0.0
        %1066 = vmatprep.subr.mxu0 0.0
        %1067 = vmatpush1.msra.mxu0 0.0
        %1068 = vmatprep.subr.mxu0 0.0
        %1069 = vmatpush1.msra.mxu0 0.0
        %1070 = vmatprep.subr.mxu0 0.0
        %1071 = vmatpush1.msra.mxu0 0.0
        %1072 = vmatprep.subr.mxu0 0.0
        %1073 = vmatpush1.msra.mxu0 0.0
        %1074 = vmatprep.subr.mxu0 0.0
        %1075 = vmatpush1.msra.mxu0 0.0
        %1076 = vmatprep.subr.mxu0 0.0
        %1077 = vmatpush1.msra.mxu0 0.0
        %1078 = vmatprep.subr.mxu0 0.0
        %1079 = vmatpush1.msra.mxu0 0.0
        %1080 = vmatprep.subr.mxu0 0.0
        %1081 = vmatpush1.msra.mxu0 0.0
        %1082 = vmatprep.subr.mxu0 0.0
        %1083 = vmatpush1.msra.mxu0 0.0
        %1084 = vmatprep.subr.mxu0 0.0
        %1085 = vmatpush1.msra.mxu0 0.0
        %1086 = vmatprep.subr.mxu0 0.0
        %1087 = vmatpush1.msra.mxu0 0.0
        %1088 = vmatprep.subr.mxu0 0.0
        %1089 = vmatpush1.msra.mxu0 0.0
        %1090 = vmatprep.subr.mxu0 0.0
        %1091 = vmatpush1.msra.mxu0 0.0
        %1092 = vmatprep.subr.mxu0 0.0
        %1093 = vmatpush1.msra.mxu0 0.0
        %1094 = vmatprep.subr.mxu0 0.0
        %1095 = vmatpush1.msra.mxu0 0.0
        %1096 = vmatprep.subr.mxu0 0.0
        %1097 = vmatpush1.msra.mxu0 0.0
        %1098 = vmatprep.subr.mxu0 0.0
        %1099 = vmatpush1.msra.mxu0 0.0
        %1100 = vmatprep.subr.mxu0 0.0
        %1101 = vmatpush1.msra.mxu0 0.0
        %1102 = vmatprep.subr.mxu0 0.0
        %1103 = vmatpush1.msra.mxu0 0.0
        %1104 = vmatprep.subr.mxu0 0.0
        %1105 = vmatpush1.msra.mxu0 0.0
        %1106 = vmatprep.subr.mxu0 0.0
        %1107 = vmatpush1.msra.mxu0 0.0
        %1108 = vmatprep.subr.mxu0 0.0
        %1109 = vmatpush1.msra.mxu0 0.0
        %1110 = vmatprep.subr.mxu0 0.0
        %1111 = vmatpush1.msra.mxu0 0.0
        %1112 = vmatprep.subr.mxu0 0.0
        %1113 = vmatpush1.msra.mxu0 0.0
        %1114 = vmatprep.subr.mxu0 0.0
        %1115 = vmatpush1.msra.mxu0 0.0
        %1116 = vmatprep.subr.mxu0 0.0
        %1117 = vmatpush1.msra.mxu0 0.0
        %1118 = vmatprep.subr.mxu0 0.0
        %1119 = vmatpush1.msra.mxu0 0.0
        %1120 = vmatprep.subr.mxu0 0.0
        %1121 = vmatpush1.msra.mxu0 0.0
        %1122 = vmatprep.mubr.f32.mxu0 0.0
        %1123 = vmatmul.mubr.f32.gmra.mrb[0].mxu0 %v1056
        %v1124 = vpop.f32.mrb[0].mxu0
        %v1125 = vadd.f32 0.0, %v1124
        %v1126 = vpop.f32.mrb[0].mxu0
        %1127 = vdwg.mxu0
        %v1129 = vsel %vm1054, %v846, 0
        %1131 = vmatprep.subr.mxu0 0.0
        %1132 = vmatpush1.msra.mxu0 %v669
        %1133 = vmatprep.subr.mxu0 0.0
        %1134 = vmatpush1.msra.mxu0 0.0
        %1135 = vmatprep.subr.mxu0 0.0
        %1136 = vmatpush1.msra.mxu0 0.0
        %1137 = vmatprep.subr.mxu0 0.0
        %1138 = vmatpush1.msra.mxu0 0.0
        %1139 = vmatprep.subr.mxu0 0.0
        %1140 = vmatpush1.msra.mxu0 0.0
        %1141 = vmatprep.subr.mxu0 0.0
        %1142 = vmatpush1.msra.mxu0 0.0
        %1143 = vmatprep.subr.mxu0 0.0
        %1144 = vmatpush1.msra.mxu0 0.0
        %1145 = vmatprep.subr.mxu0 0.0
        %1146 = vmatpush1.msra.mxu0 0.0
        %1147 = vmatprep.subr.mxu0 0.0
        %1148 = vmatpush1.msra.mxu0 0.0
        %1149 = vmatprep.subr.mxu0 0.0
        %1150 = vmatpush1.msra.mxu0 0.0
        %1151 = vmatprep.subr.mxu0 0.0
        %1152 = vmatpush1.msra.mxu0 0.0
        %1153 = vmatprep.subr.mxu0 0.0
        %1154 = vmatpush1.msra.mxu0 0.0
        %1155 = vmatprep.subr.mxu0 0.0
        %1156 = vmatpush1.msra.mxu0 0.0
        %1157 = vmatprep.subr.mxu0 0.0
        %1158 = vmatpush1.msra.mxu0 0.0
        %1159 = vmatprep.subr.mxu0 0.0
        %1160 = vmatpush1.msra.mxu0 0.0
        %1161 = vmatprep.subr.mxu0 0.0
        %1162 = vmatpush1.msra.mxu0 0.0
        %1163 = vmatprep.subr.mxu0 0.0
        %1164 = vmatpush1.msra.mxu0 0.0
        %1165 = vmatprep.subr.mxu0 0.0
        %1166 = vmatpush1.msra.mxu0 0.0
        %1167 = vmatprep.subr.mxu0 0.0
        %1168 = vmatpush1.msra.mxu0 0.0
        %1169 = vmatprep.subr.mxu0 0.0
        %1170 = vmatpush1.msra.mxu0 0.0
        %1171 = vmatprep.subr.mxu0 0.0
        %1172 = vmatpush1.msra.mxu0 0.0
        %1173 = vmatprep.subr.mxu0 0.0
        %1174 = vmatpush1.msra.mxu0 0.0
        %1175 = vmatprep.subr.mxu0 0.0
        %1176 = vmatpush1.msra.mxu0 0.0
        %1177 = vmatprep.subr.mxu0 0.0
        %1178 = vmatpush1.msra.mxu0 0.0
        %1179 = vmatprep.subr.mxu0 0.0
        %1180 = vmatpush1.msra.mxu0 0.0
        %1181 = vmatprep.subr.mxu0 0.0
        %1182 = vmatpush1.msra.mxu0 0.0
        %1183 = vmatprep.subr.mxu0 0.0
        %1184 = vmatpush1.msra.mxu0 0.0
        %1185 = vmatprep.subr.mxu0 0.0
        %1186 = vmatpush1.msra.mxu0 0.0
        %1187 = vmatprep.subr.mxu0 0.0
        %1188 = vmatpush1.msra.mxu0 0.0
        %1189 = vmatprep.subr.mxu0 0.0
        %1190 = vmatpush1.msra.mxu0 0.0
        %1191 = vmatprep.subr.mxu0 0.0
        %1192 = vmatpush1.msra.mxu0 0.0
        %1193 = vmatprep.subr.mxu0 0.0
        %1194 = vmatpush1.msra.mxu0 0.0
        %1195 = vmatprep.mubr.f32.mxu0 0.0
        %1196 = vmatmul.mubr.f32.gmra.mrb[0].mxu0 %v1129
        %v1197 = vpop.f32.mrb[0].mxu0
        %v1198 = vadd.f32 0.0, %v1197
        %v1199 = vpop.f32.mrb[0].mxu0
        %1200 = vdwg.mxu0
        %v1202 = vsel %vm1054, %v878, 0
        %1204 = vmatprep.subr.mxu0 0.0
        %1205 = vmatpush1.msra.mxu0 %v670
        %1206 = vmatprep.subr.mxu0 0.0
        %1207 = vmatpush1.msra.mxu0 0.0
        %1208 = vmatprep.subr.mxu0 0.0
        %1209 = vmatpush1.msra.mxu0 0.0
        %1210 = vmatprep.subr.mxu0 0.0
        %1211 = vmatpush1.msra.mxu0 0.0
        %1212 = vmatprep.subr.mxu0 0.0
        %1213 = vmatpush1.msra.mxu0 0.0
        %1214 = vmatprep.subr.mxu0 0.0
        %1215 = vmatpush1.msra.mxu0 0.0
        %1216 = vmatprep.subr.mxu0 0.0
        %1217 = vmatpush1.msra.mxu0 0.0
        %1218 = vmatprep.subr.mxu0 0.0
        %1219 = vmatpush1.msra.mxu0 0.0
        %1220 = vmatprep.subr.mxu0 0.0
        %1221 = vmatpush1.msra.mxu0 0.0
        %1222 = vmatprep.subr.mxu0 0.0
        %1223 = vmatpush1.msra.mxu0 0.0
        %1224 = vmatprep.subr.mxu0 0.0
        %1225 = vmatpush1.msra.mxu0 0.0
        %1226 = vmatprep.subr.mxu0 0.0
        %1227 = vmatpush1.msra.mxu0 0.0
        %1228 = vmatprep.subr.mxu0 0.0
        %1229 = vmatpush1.msra.mxu0 0.0
        %1230 = vmatprep.subr.mxu0 0.0
        %1231 = vmatpush1.msra.mxu0 0.0
        %1232 = vmatprep.subr.mxu0 0.0
        %1233 = vmatpush1.msra.mxu0 0.0
        %1234 = vmatprep.subr.mxu0 0.0
        %1235 = vmatpush1.msra.mxu0 0.0
        %1236 = vmatprep.subr.mxu0 0.0
        %1237 = vmatpush1.msra.mxu0 0.0
        %1238 = vmatprep.subr.mxu0 0.0
        %1239 = vmatpush1.msra.mxu0 0.0
        %1240 = vmatprep.subr.mxu0 0.0
        %1241 = vmatpush1.msra.mxu0 0.0
        %1242 = vmatprep.subr.mxu0 0.0
        %1243 = vmatpush1.msra.mxu0 0.0
        %1244 = vmatprep.subr.mxu0 0.0
        %1245 = vmatpush1.msra.mxu0 0.0
        %1246 = vmatprep.subr.mxu0 0.0
        %1247 = vmatpush1.msra.mxu0 0.0
        %1248 = vmatprep.subr.mxu0 0.0
        %1249 = vmatpush1.msra.mxu0 0.0
        %1250 = vmatprep.subr.mxu0 0.0
        %1251 = vmatpush1.msra.mxu0 0.0
        %1252 = vmatprep.subr.mxu0 0.0
        %1253 = vmatpush1.msra.mxu0 0.0
        %1254 = vmatprep.subr.mxu0 0.0
        %1255 = vmatpush1.msra.mxu0 0.0
        %1256 = vmatprep.subr.mxu0 0.0
        %1257 = vmatpush1.msra.mxu0 0.0
        %1258 = vmatprep.subr.mxu0 0.0
        %1259 = vmatpush1.msra.mxu0 0.0
        %1260 = vmatprep.subr.mxu0 0.0
        %1261 = vmatpush1.msra.mxu0 0.0
        %1262 = vmatprep.subr.mxu0 0.0
        %1263 = vmatpush1.msra.mxu0 0.0
        %1264 = vmatprep.subr.mxu0 0.0
        %1265 = vmatpush1.msra.mxu0 0.0
        %1266 = vmatprep.subr.mxu0 0.0
        %1267 = vmatpush1.msra.mxu0 0.0
        %1268 = vmatprep.mubr.f32.mxu0 0.0
        %1269 = vmatmul.mubr.f32.gmra.mrb[0].mxu0 %v1202
        %v1270 = vpop.f32.mrb[0].mxu0
        %v1271 = vadd.f32 0.0, %v1270
        %v1272 = vpop.f32.mrb[0].mxu0
        %1273 = vdwg.mxu0
        %v1275 = vsel %vm1054, %v910, 0
        %1277 = vmatprep.subr.mxu0 0.0
        %1278 = vmatpush1.msra.mxu0 %v671
        %1279 = vmatprep.subr.mxu0 0.0
        %1280 = vmatpush1.msra.mxu0 0.0
        %1281 = vmatprep.subr.mxu0 0.0
        %1282 = vmatpush1.msra.mxu0 0.0
        %1283 = vmatprep.subr.mxu0 0.0
        %1284 = vmatpush1.msra.mxu0 0.0
        %1285 = vmatprep.subr.mxu0 0.0
        %1286 = vmatpush1.msra.mxu0 0.0
        %1287 = vmatprep.subr.mxu0 0.0
        %1288 = vmatpush1.msra.mxu0 0.0
        %1289 = vmatprep.subr.mxu0 0.0
        %1290 = vmatpush1.msra.mxu0 0.0
        %1291 = vmatprep.subr.mxu0 0.0
        %1292 = vmatpush1.msra.mxu0 0.0
        %1293 = vmatprep.subr.mxu0 0.0
        %1294 = vmatpush1.msra.mxu0 0.0
        %1295 = vmatprep.subr.mxu0 0.0
        %1296 = vmatpush1.msra.mxu0 0.0
        %1297 = vmatprep.subr.mxu0 0.0
        %1298 = vmatpush1.msra.mxu0 0.0
        %1299 = vmatprep.subr.mxu0 0.0
        %1300 = vmatpush1.msra.mxu0 0.0
        %1301 = vmatprep.subr.mxu0 0.0
        %1302 = vmatpush1.msra.mxu0 0.0
        %1303 = vmatprep.subr.mxu0 0.0
        %1304 = vmatpush1.msra.mxu0 0.0
        %1305 = vmatprep.subr.mxu0 0.0
        %1306 = vmatpush1.msra.mxu0 0.0
        %1307 = vmatprep.subr.mxu0 0.0
        %1308 = vmatpush1.msra.mxu0 0.0
        %1309 = vmatprep.subr.mxu0 0.0
        %1310 = vmatpush1.msra.mxu0 0.0
        %1311 = vmatprep.subr.mxu0 0.0
        %1312 = vmatpush1.msra.mxu0 0.0
        %1313 = vmatprep.subr.mxu0 0.0
        %1314 = vmatpush1.msra.mxu0 0.0
        %1315 = vmatprep.subr.mxu0 0.0
        %1316 = vmatpush1.msra.mxu0 0.0
        %1317 = vmatprep.subr.mxu0 0.0
        %1318 = vmatpush1.msra.mxu0 0.0
        %1319 = vmatprep.subr.mxu0 0.0
        %1320 = vmatpush1.msra.mxu0 0.0
        %1321 = vmatprep.subr.mxu0 0.0
        %1322 = vmatpush1.msra.mxu0 0.0
        %1323 = vmatprep.subr.mxu0 0.0
        %1324 = vmatpush1.msra.mxu0 0.0
        %1325 = vmatprep.subr.mxu0 0.0
        %1326 = vmatpush1.msra.mxu0 0.0
        %1327 = vmatprep.subr.mxu0 0.0
        %1328 = vmatpush1.msra.mxu0 0.0
        %1329 = vmatprep.subr.mxu0 0.0
        %1330 = vmatpush1.msra.mxu0 0.0
        %1331 = vmatprep.subr.mxu0 0.0
        %1332 = vmatpush1.msra.mxu0 0.0
        %1333 = vmatprep.subr.mxu0 0.0
        %1334 = vmatpush1.msra.mxu0 0.0
        %1335 = vmatprep.subr.mxu0 0.0
        %1336 = vmatpush1.msra.mxu0 0.0
        %1337 = vmatprep.subr.mxu0 0.0
        %1338 = vmatpush1.msra.mxu0 0.0
        %1339 = vmatprep.subr.mxu0 0.0
        %1340 = vmatpush1.msra.mxu0 0.0
        %1341 = vmatprep.mubr.f32.mxu0 0.0
        %1342 = vmatmul.mubr.f32.gmra.mrb[0].mxu0 %v1275
        %v1343 = vpop.f32.mrb[0].mxu0
        %v1344 = vadd.f32 0.0, %v1343
        %v1345 = vpop.f32.mrb[0].mxu0
        %1346 = vdwg.mxu0
        %v1348 = vsel %vm1054, %v942, 0
        %1350 = vmatprep.subr.mxu0 0.0
        %1351 = vmatpush1.msra.mxu0 %v700
        %1352 = vmatprep.subr.mxu0 0.0
        %1353 = vmatpush1.msra.mxu0 0.0
        %1354 = vmatprep.subr.mxu0 0.0
        %1355 = vmatpush1.msra.mxu0 0.0
        %1356 = vmatprep.subr.mxu0 0.0
        %1357 = vmatpush1.msra.mxu0 0.0
        %1358 = vmatprep.subr.mxu0 0.0
        %1359 = vmatpush1.msra.mxu0 0.0
        %1360 = vmatprep.subr.mxu0 0.0
        %1361 = vmatpush1.msra.mxu0 0.0
        %1362 = vmatprep.subr.mxu0 0.0
        %1363 = vmatpush1.msra.mxu0 0.0
        %1364 = vmatprep.subr.mxu0 0.0
        %1365 = vmatpush1.msra.mxu0 0.0
        %1366 = vmatprep.subr.mxu0 0.0
        %1367 = vmatpush1.msra.mxu0 0.0
        %1368 = vmatprep.subr.mxu0 0.0
        %1369 = vmatpush1.msra.mxu0 0.0
        %1370 = vmatprep.subr.mxu0 0.0
        %1371 = vmatpush1.msra.mxu0 0.0
        %1372 = vmatprep.subr.mxu0 0.0
        %1373 = vmatpush1.msra.mxu0 0.0
        %1374 = vmatprep.subr.mxu0 0.0
        %1375 = vmatpush1.msra.mxu0 0.0
        %1376 = vmatprep.subr.mxu0 0.0
        %1377 = vmatpush1.msra.mxu0 0.0
        %1378 = vmatprep.subr.mxu0 0.0
        %1379 = vmatpush1.msra.mxu0 0.0
        %1380 = vmatprep.subr.mxu0 0.0
        %1381 = vmatpush1.msra.mxu0 0.0
        %1382 = vmatprep.subr.mxu0 0.0
        %1383 = vmatpush1.msra.mxu0 0.0
        %1384 = vmatprep.subr.mxu0 0.0
        %1385 = vmatpush1.msra.mxu0 0.0
        %1386 = vmatprep.subr.mxu0 0.0
        %1387 = vmatpush1.msra.mxu0 0.0
        %1388 = vmatprep.subr.mxu0 0.0
        %1389 = vmatpush1.msra.mxu0 0.0
        %1390 = vmatprep.subr.mxu0 0.0
        %1391 = vmatpush1.msra.mxu0 0.0
        %1392 = vmatprep.subr.mxu0 0.0
        %1393 = vmatpush1.msra.mxu0 0.0
        %1394 = vmatprep.subr.mxu0 0.0
        %1395 = vmatpush1.msra.mxu0 0.0
        %1396 = vmatprep.subr.mxu0 0.0
        %1397 = vmatpush1.msra.mxu0 0.0
        %1398 = vmatprep.subr.mxu0 0.0
        %1399 = vmatpush1.msra.mxu0 0.0
        %1400 = vmatprep.subr.mxu0 0.0
        %1401 = vmatpush1.msra.mxu0 0.0
        %1402 = vmatprep.subr.mxu0 0.0
        %1403 = vmatpush1.msra.mxu0 0.0
        %1404 = vmatprep.subr.mxu0 0.0
        %1405 = vmatpush1.msra.mxu0 0.0
        %1406 = vmatprep.subr.mxu0 0.0
        %1407 = vmatpush1.msra.mxu0 0.0
        %1408 = vmatprep.subr.mxu0 0.0
        %1409 = vmatpush1.msra.mxu0 0.0
        %1410 = vmatprep.subr.mxu0 0.0
        %1411 = vmatpush1.msra.mxu0 0.0
        %1412 = vmatprep.subr.mxu0 0.0
        %1413 = vmatpush1.msra.mxu0 0.0
        %1414 = vmatprep.mubr.f32.mxu0 0.0
        %1415 = vmatmul.mubr.f32.gmra.mrb[0].mxu0 %v1348
        %v1416 = vpop.f32.mrb[0].mxu0
        %v1417 = vadd.f32 0.0, %v1416
        %v1418 = vpop.f32.mrb[0].mxu0
        %1419 = vdwg.mxu0
        %v1421 = vsel %vm1054, %v974, 0
        %1423 = vmatprep.subr.mxu0 0.0
        %1424 = vmatpush1.msra.mxu0 %v701
        %1425 = vmatprep.subr.mxu0 0.0
        %1426 = vmatpush1.msra.mxu0 0.0
        %1427 = vmatprep.subr.mxu0 0.0
        %1428 = vmatpush1.msra.mxu0 0.0
        %1429 = vmatprep.subr.mxu0 0.0
        %1430 = vmatpush1.msra.mxu0 0.0
        %1431 = vmatprep.subr.mxu0 0.0
        %1432 = vmatpush1.msra.mxu0 0.0
        %1433 = vmatprep.subr.mxu0 0.0
        %1434 = vmatpush1.msra.mxu0 0.0
        %1435 = vmatprep.subr.mxu0 0.0
        %1436 = vmatpush1.msra.mxu0 0.0
        %1437 = vmatprep.subr.mxu0 0.0
        %1438 = vmatpush1.msra.mxu0 0.0
        %1439 = vmatprep.subr.mxu0 0.0
        %1440 = vmatpush1.msra.mxu0 0.0
        %1441 = vmatprep.subr.mxu0 0.0
        %1442 = vmatpush1.msra.mxu0 0.0
        %1443 = vmatprep.subr.mxu0 0.0
        %1444 = vmatpush1.msra.mxu0 0.0
        %1445 = vmatprep.subr.mxu0 0.0
        %1446 = vmatpush1.msra.mxu0 0.0
        %1447 = vmatprep.subr.mxu0 0.0
        %1448 = vmatpush1.msra.mxu0 0.0
        %1449 = vmatprep.subr.mxu0 0.0
        %1450 = vmatpush1.msra.mxu0 0.0
        %1451 = vmatprep.subr.mxu0 0.0
        %1452 = vmatpush1.msra.mxu0 0.0
        %1453 = vmatprep.subr.mxu0 0.0
        %1454 = vmatpush1.msra.mxu0 0.0
        %1455 = vmatprep.subr.mxu0 0.0
        %1456 = vmatpush1.msra.mxu0 0.0
        %1457 = vmatprep.subr.mxu0 0.0
        %1458 = vmatpush1.msra.mxu0 0.0
        %1459 = vmatprep.subr.mxu0 0.0
        %1460 = vmatpush1.msra.mxu0 0.0
        %1461 = vmatprep.subr.mxu0 0.0
        %1462 = vmatpush1.msra.mxu0 0.0
        %1463 = vmatprep.subr.mxu0 0.0
        %1464 = vmatpush1.msra.mxu0 0.0
        %1465 = vmatprep.subr.mxu0 0.0
        %1466 = vmatpush1.msra.mxu0 0.0
        %1467 = vmatprep.subr.mxu0 0.0
        %1468 = vmatpush1.msra.mxu0 0.0
        %1469 = vmatprep.subr.mxu0 0.0
        %1470 = vmatpush1.msra.mxu0 0.0
        %1471 = vmatprep.subr.mxu0 0.0
        %1472 = vmatpush1.msra.mxu0 0.0
        %1473 = vmatprep.subr.mxu0 0.0
        %1474 = vmatpush1.msra.mxu0 0.0
        %1475 = vmatprep.subr.mxu0 0.0
        %1476 = vmatpush1.msra.mxu0 0.0
        %1477 = vmatprep.subr.mxu0 0.0
        %1478 = vmatpush1.msra.mxu0 0.0
        %1479 = vmatprep.subr.mxu0 0.0
        %1480 = vmatpush1.msra.mxu0 0.0
        %1481 = vmatprep.subr.mxu0 0.0
        %1482 = vmatpush1.msra.mxu0 0.0
        %1483 = vmatprep.subr.mxu0 0.0
        %1484 = vmatpush1.msra.mxu0 0.0
        %1485 = vmatprep.subr.mxu0 0.0
        %1486 = vmatpush1.msra.mxu0 0.0
        %1487 = vmatprep.mubr.f32.mxu0 0.0
        %1488 = vmatmul.mubr.f32.gmra.mrb[0].mxu0 %v1421
        %v1489 = vpop.f32.mrb[0].mxu0
        %v1490 = vadd.f32 0.0, %v1489
        %v1491 = vpop.f32.mrb[0].mxu0
        %1492 = vdwg.mxu0
        %v1494 = vsel %vm1054, %v1006, 0
        %1496 = vmatprep.subr.mxu0 0.0
        %1497 = vmatpush1.msra.mxu0 %v702
        %1498 = vmatprep.subr.mxu0 0.0
        %1499 = vmatpush1.msra.mxu0 0.0
        %1500 = vmatprep.subr.mxu0 0.0
        %1501 = vmatpush1.msra.mxu0 0.0
        %1502 = vmatprep.subr.mxu0 0.0
        %1503 = vmatpush1.msra.mxu0 0.0
        %1504 = vmatprep.subr.mxu0 0.0
        %1505 = vmatpush1.msra.mxu0 0.0
        %1506 = vmatprep.subr.mxu0 0.0
        %1507 = vmatpush1.msra.mxu0 0.0
        %1508 = vmatprep.subr.mxu0 0.0
        %1509 = vmatpush1.msra.mxu0 0.0
        %1510 = vmatprep.subr.mxu0 0.0
        %1511 = vmatpush1.msra.mxu0 0.0
        %1512 = vmatprep.subr.mxu0 0.0
        %1513 = vmatpush1.msra.mxu0 0.0
        %1514 = vmatprep.subr.mxu0 0.0
        %1515 = vmatpush1.msra.mxu0 0.0
        %1516 = vmatprep.subr.mxu0 0.0
        %1517 = vmatpush1.msra.mxu0 0.0
        %1518 = vmatprep.subr.mxu0 0.0
        %1519 = vmatpush1.msra.mxu0 0.0
        %1520 = vmatprep.subr.mxu0 0.0
        %1521 = vmatpush1.msra.mxu0 0.0
        %1522 = vmatprep.subr.mxu0 0.0
        %1523 = vmatpush1.msra.mxu0 0.0
        %1524 = vmatprep.subr.mxu0 0.0
        %1525 = vmatpush1.msra.mxu0 0.0
        %1526 = vmatprep.subr.mxu0 0.0
        %1527 = vmatpush1.msra.mxu0 0.0
        %1528 = vmatprep.subr.mxu0 0.0
        %1529 = vmatpush1.msra.mxu0 0.0
        %1530 = vmatprep.subr.mxu0 0.0
        %1531 = vmatpush1.msra.mxu0 0.0
        %1532 = vmatprep.subr.mxu0 0.0
        %1533 = vmatpush1.msra.mxu0 0.0
        %1534 = vmatprep.subr.mxu0 0.0
        %1535 = vmatpush1.msra.mxu0 0.0
        %1536 = vmatprep.subr.mxu0 0.0
        %1537 = vmatpush1.msra.mxu0 0.0
        %1538 = vmatprep.subr.mxu0 0.0
        %1539 = vmatpush1.msra.mxu0 0.0
        %1540 = vmatprep.subr.mxu0 0.0
        %1541 = vmatpush1.msra.mxu0 0.0
        %1542 = vmatprep.subr.mxu0 0.0
        %1543 = vmatpush1.msra.mxu0 0.0
        %1544 = vmatprep.subr.mxu0 0.0
        %1545 = vmatpush1.msra.mxu0 0.0
        %1546 = vmatprep.subr.mxu0 0.0
        %1547 = vmatpush1.msra.mxu0 0.0
        %1548 = vmatprep.subr.mxu0 0.0
        %1549 = vmatpush1.msra.mxu0 0.0
        %1550 = vmatprep.subr.mxu0 0.0
        %1551 = vmatpush1.msra.mxu0 0.0
        %1552 = vmatprep.subr.mxu0 0.0
        %1553 = vmatpush1.msra.mxu0 0.0
        %1554 = vmatprep.subr.mxu0 0.0
        %1555 = vmatpush1.msra.mxu0 0.0
        %1556 = vmatprep.subr.mxu0 0.0
        %1557 = vmatpush1.msra.mxu0 0.0
        %1558 = vmatprep.subr.mxu0 0.0
        %1559 = vmatpush1.msra.mxu0 0.0
        %1560 = vmatprep.mubr.f32.mxu0 0.0
        %1561 = vmatmul.mubr.f32.gmra.mrb[0].mxu0 %v1494
        %v1562 = vpop.f32.mrb[0].mxu0
        %v1563 = vadd.f32 0.0, %v1562
        %v1564 = vpop.f32.mrb[0].mxu0
        %1565 = vdwg.mxu0
        %v1567 = vsel %vm1054, %v1038, 0
        %1569 = vmatprep.subr.mxu0 0.0
        %1570 = vmatpush1.msra.mxu0 %v703
        %1571 = vmatprep.subr.mxu0 0.0
        %1572 = vmatpush1.msra.mxu0 0.0
        %1573 = vmatprep.subr.mxu0 0.0
        %1574 = vmatpush1.msra.mxu0 0.0
        %1575 = vmatprep.subr.mxu0 0.0
        %1576 = vmatpush1.msra.mxu0 0.0
        %1577 = vmatprep.subr.mxu0 0.0
        %1578 = vmatpush1.msra.mxu0 0.0
        %1579 = vmatprep.subr.mxu0 0.0
        %1580 = vmatpush1.msra.mxu0 0.0
        %1581 = vmatprep.subr.mxu0 0.0
        %1582 = vmatpush1.msra.mxu0 0.0
        %1583 = vmatprep.subr.mxu0 0.0
        %1584 = vmatpush1.msra.mxu0 0.0
        %1585 = vmatprep.subr.mxu0 0.0
        %1586 = vmatpush1.msra.mxu0 0.0
        %1587 = vmatprep.subr.mxu0 0.0
        %1588 = vmatpush1.msra.mxu0 0.0
        %1589 = vmatprep.subr.mxu0 0.0
        %1590 = vmatpush1.msra.mxu0 0.0
        %1591 = vmatprep.subr.mxu0 0.0
        %1592 = vmatpush1.msra.mxu0 0.0
        %1593 = vmatprep.subr.mxu0 0.0
        %1594 = vmatpush1.msra.mxu0 0.0
        %1595 = vmatprep.subr.mxu0 0.0
        %1596 = vmatpush1.msra.mxu0 0.0
        %1597 = vmatprep.subr.mxu0 0.0
        %1598 = vmatpush1.msra.mxu0 0.0
        %1599 = vmatprep.subr.mxu0 0.0
        %1600 = vmatpush1.msra.mxu0 0.0
        %1601 = vmatprep.subr.mxu0 0.0
        %1602 = vmatpush1.msra.mxu0 0.0
        %1603 = vmatprep.subr.mxu0 0.0
        %1604 = vmatpush1.msra.mxu0 0.0
        %1605 = vmatprep.subr.mxu0 0.0
        %1606 = vmatpush1.msra.mxu0 0.0
        %1607 = vmatprep.subr.mxu0 0.0
        %1608 = vmatpush1.msra.mxu0 0.0
        %1609 = vmatprep.subr.mxu0 0.0
        %1610 = vmatpush1.msra.mxu0 0.0
        %1611 = vmatprep.subr.mxu0 0.0
        %1612 = vmatpush1.msra.mxu0 0.0
        %1613 = vmatprep.subr.mxu0 0.0
        %1614 = vmatpush1.msra.mxu0 0.0
        %1615 = vmatprep.subr.mxu0 0.0
        %1616 = vmatpush1.msra.mxu0 0.0
        %1617 = vmatprep.subr.mxu0 0.0
        %1618 = vmatpush1.msra.mxu0 0.0
        %1619 = vmatprep.subr.mxu0 0.0
        %1620 = vmatpush1.msra.mxu0 0.0
        %1621 = vmatprep.subr.mxu0 0.0
        %1622 = vmatpush1.msra.mxu0 0.0
        %1623 = vmatprep.subr.mxu0 0.0
        %1624 = vmatpush1.msra.mxu0 0.0
        %1625 = vmatprep.subr.mxu0 0.0
        %1626 = vmatpush1.msra.mxu0 0.0
        %1627 = vmatprep.subr.mxu0 0.0
        %1628 = vmatpush1.msra.mxu0 0.0
        %1629 = vmatprep.subr.mxu0 0.0
        %1630 = vmatpush1.msra.mxu0 0.0
        %1631 = vmatprep.subr.mxu0 0.0
        %1632 = vmatpush1.msra.mxu0 0.0
        %1633 = vmatprep.mubr.f32.mxu0 0.0
        %1634 = vmatmul.mubr.f32.gmra.mrb[0].mxu0 %v1567
        %v1635 = vpop.f32.mrb[0].mxu0
        %v1636 = vadd.f32 0.0, %v1635
        %v1637 = vpop.f32.mrb[0].mxu0
        %1638 = vdwg.mxu0
        %v1639 = vlaneseq
        %v1640 = vshrl.u32 %v1639, 7
        %v1641 = vlaneseq
        %v1642 = vand.u32 %v1641, 127
        %vm1643 = vcmp.le.s32.totalorder %v1642, %v1640
        %v1644 = vsel %vm1643, 1, 0
        %vm1645 = vcmp.eq.s32.totalorder %v1644, 1
        %v1646 = vsel %vm1645, %v1125, -1e+09
        %v1647 = vsel %vm1645, %v1198, -1e+09
        %v1648 = vsel %vm1645, %v1271, -1e+09
        %v1649 = vsel %vm1645, %v1344, -1e+09
        %v1650 = vsel %vm1645, %v1417, -1e+09
        %v1651 = vsel %vm1645, %v1490, -1e+09
        %v1652 = vsel %vm1645, %v1563, -1e+09
        %v1653 = vsel %vm1645, %v1636, -1e+09
        %v1654 = vsel %vm1054, %v1646, -inf
        %1655 = vmax.xlane.f32.xlu0 %v1654
        %v1656 = vpop.xlane.xlu0 %1655
        %v1657 = vsel %vm1054, %v1647, -inf
        %1658 = vmax.xlane.f32.xlu0 %v1657
        %v1659 = vpop.xlane.xlu0 %1658
        %v1660 = vsel %vm1054, %v1648, -inf
        %1661 = vmax.xlane.f32.xlu0 %v1660
        %v1662 = vpop.xlane.xlu0 %1661
        %v1663 = vsel %vm1054, %v1649, -inf
        %1664 = vmax.xlane.f32.xlu0 %v1663
        %v1665 = vpop.xlane.xlu0 %1664
        %v1666 = vsel %vm1054, %v1650, -inf
        %1667 = vmax.xlane.f32.xlu0 %v1666
        %v1668 = vpop.xlane.xlu0 %1667
        %v1669 = vsel %vm1054, %v1651, -inf
        %1670 = vmax.xlane.f32.xlu0 %v1669
        %v1671 = vpop.xlane.xlu0 %1670
        %v1672 = vsel %vm1054, %v1652, -inf
        %1673 = vmax.xlane.f32.xlu0 %v1672
        %v1674 = vpop.xlane.xlu0 %1673
        %v1675 = vsel %vm1054, %v1653, -inf
        %1676 = vmax.xlane.f32.xlu0 %v1675
        %v1677 = vpop.xlane.xlu0 %1676
        %v1678 = vsub.f32 %v1646, %v1656
        %v1679 = vsub.f32 %v1647, %v1659
        %v1680 = vsub.f32 %v1648, %v1662
        %v1681 = vsub.f32 %v1649, %v1665
        %v1682 = vsub.f32 %v1650, %v1668
        %v1683 = vsub.f32 %v1651, %v1671
        %v1684 = vsub.f32 %v1652, %v1674
        %v1685 = vsub.f32 %v1653, %v1677
        %v1686 = vmul.f32 %v1678, 1.442695
        %v1687 = vpow.pop %v1686
        %v1688 = vmul.f32 %v1679, 1.442695
        %v1689 = vpow.pop %v1688
        %v1690 = vmul.f32 %v1680, 1.442695
        %v1691 = vpow.pop %v1690
        %v1692 = vmul.f32 %v1681, 1.442695
        %v1693 = vpow.pop %v1692
        %v1694 = vmul.f32 %v1682, 1.442695
        %v1695 = vpow.pop %v1694
        %v1696 = vmul.f32 %v1683, 1.442695
        %v1697 = vpow.pop %v1696
        %v1698 = vmul.f32 %v1684, 1.442695
        %v1699 = vpow.pop %v1698
        %v1700 = vmul.f32 %v1685, 1.442695
        %v1701 = vpow.pop %v1700
        %v1702 = vsel %vm1054, %v1687, 0.0
        %1703 = vadd.xlane.f32.xlu0 %v1702
        %v1704 = vpop.xlane.xlu0 %1703
        %v1705 = vsel %vm1054, %v1689, 0.0
        %1706 = vadd.xlane.f32.xlu0 %v1705
        %v1707 = vpop.xlane.xlu0 %1706
        %v1708 = vsel %vm1054, %v1691, 0.0
        %1709 = vadd.xlane.f32.xlu0 %v1708
        %v1710 = vpop.xlane.xlu0 %1709
        %v1711 = vsel %vm1054, %v1693, 0.0
        %1712 = vadd.xlane.f32.xlu0 %v1711
        %v1713 = vpop.xlane.xlu0 %1712
        %v1714 = vsel %vm1054, %v1695, 0.0
        %1715 = vadd.xlane.f32.xlu0 %v1714
        %v1716 = vpop.xlane.xlu0 %1715
        %v1717 = vsel %vm1054, %v1697, 0.0
        %1718 = vadd.xlane.f32.xlu0 %v1717
        %v1719 = vpop.xlane.xlu0 %1718
        %v1720 = vsel %vm1054, %v1699, 0.0
        %1721 = vadd.xlane.f32.xlu0 %v1720
        %v1722 = vpop.xlane.xlu0 %1721
        %v1723 = vsel %vm1054, %v1701, 0.0
        %1724 = vadd.xlane.f32.xlu0 %v1723
        %v1725 = vpop.xlane.xlu0 %1724
        %v1726 = vrcp.pop %v1704
        %v1727 = vrcp.pop %v1707
        %v1728 = vrcp.pop %v1710
        %v1729 = vrcp.pop %v1713
        %v1730 = vrcp.pop %v1716
        %v1731 = vrcp.pop %v1719
        %v1732 = vrcp.pop %v1722
        %v1733 = vrcp.pop %v1725
        %v1734 = vmul.f32 %v1687, %v1726
        %v1735 = vmul.f32 %v1689, %v1727
        %v1736 = vmul.f32 %v1691, %v1728
        %v1737 = vmul.f32 %v1693, %v1729
        %v1738 = vmul.f32 %v1695, %v1730
        %v1739 = vmul.f32 %v1697, %v1731
        %v1740 = vmul.f32 %v1699, %v1732
        %v1741 = vmul.f32 %v1701, %v1733
        %v1743 = vsel %vm1054, %v750, 0
        %v1746 = vsel %vm1054, %v1734, 0
        %1748 = vmatprep.subr.mxu0 0.0
        %1749 = vmatpush1.xpose.msra.mxu0 %v1746
        %1750 = vmatprep.subr.mxu0 0.0
        %1751 = vmatpush1.xpose.msra.mxu0 0.0
        %1752 = vmatprep.subr.mxu0 0.0
        %1753 = vmatpush1.xpose.msra.mxu0 0.0
        %1754 = vmatprep.subr.mxu0 0.0
        %1755 = vmatpush1.xpose.msra.mxu0 0.0
        %1756 = vmatprep.subr.mxu0 0.0
        %1757 = vmatpush1.xpose.msra.mxu0 0.0
        %1758 = vmatprep.subr.mxu0 0.0
        %1759 = vmatpush1.xpose.msra.mxu0 0.0
        %1760 = vmatprep.subr.mxu0 0.0
        %1761 = vmatpush1.xpose.msra.mxu0 0.0
        %1762 = vmatprep.subr.mxu0 0.0
        %1763 = vmatpush1.xpose.msra.mxu0 0.0
        %1764 = vmatprep.subr.mxu0 0.0
        %1765 = vmatpush1.xpose.msra.mxu0 0.0
        %1766 = vmatprep.subr.mxu0 0.0
        %1767 = vmatpush1.xpose.msra.mxu0 0.0
        %1768 = vmatprep.subr.mxu0 0.0
        %1769 = vmatpush1.xpose.msra.mxu0 0.0
        %1770 = vmatprep.subr.mxu0 0.0
        %1771 = vmatpush1.xpose.msra.mxu0 0.0
        %1772 = vmatprep.subr.mxu0 0.0
        %1773 = vmatpush1.xpose.msra.mxu0 0.0
        %1774 = vmatprep.subr.mxu0 0.0
        %1775 = vmatpush1.xpose.msra.mxu0 0.0
        %1776 = vmatprep.subr.mxu0 0.0
        %1777 = vmatpush1.xpose.msra.mxu0 0.0
        %1778 = vmatprep.subr.mxu0 0.0
        %1779 = vmatpush1.xpose.msra.mxu0 0.0
        %1780 = vmatprep.subr.mxu0 0.0
        %1781 = vmatpush1.xpose.msra.mxu0 0.0
        %1782 = vmatprep.subr.mxu0 0.0
        %1783 = vmatpush1.xpose.msra.mxu0 0.0
        %1784 = vmatprep.subr.mxu0 0.0
        %1785 = vmatpush1.xpose.msra.mxu0 0.0
        %1786 = vmatprep.subr.mxu0 0.0
        %1787 = vmatpush1.xpose.msra.mxu0 0.0
        %1788 = vmatprep.subr.mxu0 0.0
        %1789 = vmatpush1.xpose.msra.mxu0 0.0
        %1790 = vmatprep.subr.mxu0 0.0
        %1791 = vmatpush1.xpose.msra.mxu0 0.0
        %1792 = vmatprep.subr.mxu0 0.0
        %1793 = vmatpush1.xpose.msra.mxu0 0.0
        %1794 = vmatprep.subr.mxu0 0.0
        %1795 = vmatpush1.xpose.msra.mxu0 0.0
        %1796 = vmatprep.subr.mxu0 0.0
        %1797 = vmatpush1.xpose.msra.mxu0 0.0
        %1798 = vmatprep.subr.mxu0 0.0
        %1799 = vmatpush1.xpose.msra.mxu0 0.0
        %1800 = vmatprep.subr.mxu0 0.0
        %1801 = vmatpush1.xpose.msra.mxu0 0.0
        %1802 = vmatprep.subr.mxu0 0.0
        %1803 = vmatpush1.xpose.msra.mxu0 0.0
        %1804 = vmatprep.subr.mxu0 0.0
        %1805 = vmatpush1.xpose.msra.mxu0 0.0
        %1806 = vmatprep.subr.mxu0 0.0
        %1807 = vmatpush1.xpose.msra.mxu0 0.0
        %1808 = vmatprep.subr.mxu0 0.0
        %1809 = vmatpush1.xpose.msra.mxu0 0.0
        %1810 = vmatprep.subr.mxu0 0.0
        %1811 = vmatpush1.xpose.msra.mxu0 0.0
        %1812 = vmatprep.mubr.f32.mxu0 0.0
        %1813 = vmatmul.mubr.f32.gmra.mrb[0].mxu0 %v1743
        %v1814 = vpop.f32.mrb[0].mxu0
        %v1815 = vadd.f32 0.0, %v1814
        %v1816 = vpop.f32.mrb[0].mxu0
        %1817 = vdwg.mxu0
        %v1819 = vsel %vm1054, %v751, 0
        %v1822 = vsel %vm1054, %v1735, 0
        %1824 = vmatprep.subr.mxu0 0.0
        %1825 = vmatpush1.xpose.msra.mxu0 %v1822
        %1826 = vmatprep.subr.mxu0 0.0
        %1827 = vmatpush1.xpose.msra.mxu0 0.0
        %1828 = vmatprep.subr.mxu0 0.0
        %1829 = vmatpush1.xpose.msra.mxu0 0.0
        %1830 = vmatprep.subr.mxu0 0.0
        %1831 = vmatpush1.xpose.msra.mxu0 0.0
        %1832 = vmatprep.subr.mxu0 0.0
        %1833 = vmatpush1.xpose.msra.mxu0 0.0
        %1834 = vmatprep.subr.mxu0 0.0
        %1835 = vmatpush1.xpose.msra.mxu0 0.0
        %1836 = vmatprep.subr.mxu0 0.0
        %1837 = vmatpush1.xpose.msra.mxu0 0.0
        %1838 = vmatprep.subr.mxu0 0.0
        %1839 = vmatpush1.xpose.msra.mxu0 0.0
        %1840 = vmatprep.subr.mxu0 0.0
        %1841 = vmatpush1.xpose.msra.mxu0 0.0
        %1842 = vmatprep.subr.mxu0 0.0
        %1843 = vmatpush1.xpose.msra.mxu0 0.0
        %1844 = vmatprep.subr.mxu0 0.0
        %1845 = vmatpush1.xpose.msra.mxu0 0.0
        %1846 = vmatprep.subr.mxu0 0.0
        %1847 = vmatpush1.xpose.msra.mxu0 0.0
        %1848 = vmatprep.subr.mxu0 0.0
        %1849 = vmatpush1.xpose.msra.mxu0 0.0
        %1850 = vmatprep.subr.mxu0 0.0
        %1851 = vmatpush1.xpose.msra.mxu0 0.0
        %1852 = vmatprep.subr.mxu0 0.0
        %1853 = vmatpush1.xpose.msra.mxu0 0.0
        %1854 = vmatprep.subr.mxu0 0.0
        %1855 = vmatpush1.xpose.msra.mxu0 0.0
        %1856 = vmatprep.subr.mxu0 0.0
        %1857 = vmatpush1.xpose.msra.mxu0 0.0
        %1858 = vmatprep.subr.mxu0 0.0
        %1859 = vmatpush1.xpose.msra.mxu0 0.0
        %1860 = vmatprep.subr.mxu0 0.0
        %1861 = vmatpush1.xpose.msra.mxu0 0.0
        %1862 = vmatprep.subr.mxu0 0.0
        %1863 = vmatpush1.xpose.msra.mxu0 0.0
        %1864 = vmatprep.subr.mxu0 0.0
        %1865 = vmatpush1.xpose.msra.mxu0 0.0
        %1866 = vmatprep.subr.mxu0 0.0
        %1867 = vmatpush1.xpose.msra.mxu0 0.0
        %1868 = vmatprep.subr.mxu0 0.0
        %1869 = vmatpush1.xpose.msra.mxu0 0.0
        %1870 = vmatprep.subr.mxu0 0.0
        %1871 = vmatpush1.xpose.msra.mxu0 0.0
        %1872 = vmatprep.subr.mxu0 0.0
        %1873 = vmatpush1.xpose.msra.mxu0 0.0
        %1874 = vmatprep.subr.mxu0 0.0
        %1875 = vmatpush1.xpose.msra.mxu0 0.0
        %1876 = vmatprep.subr.mxu0 0.0
        %1877 = vmatpush1.xpose.msra.mxu0 0.0
        %1878 = vmatprep.subr.mxu0 0.0
        %1879 = vmatpush1.xpose.msra.mxu0 0.0
        %1880 = vmatprep.subr.mxu0 0.0
        %1881 = vmatpush1.xpose.msra.mxu0 0.0
        %1882 = vmatprep.subr.mxu0 0.0
        %1883 = vmatpush1.xpose.msra.mxu0 0.0
        %1884 = vmatprep.subr.mxu0 0.0
        %1885 = vmatpush1.xpose.msra.mxu0 0.0
        %1886 = vmatprep.subr.mxu0 0.0
        %1887 = vmatpush1.xpose.msra.mxu0 0.0
        %1888 = vmatprep.mubr.f32.mxu0 0.0
        %1889 = vmatmul.mubr.f32.gmra.mrb[0].mxu0 %v1819
        %v1890 = vpop.f32.mrb[0].mxu0
        %v1891 = vadd.f32 0.0, %v1890
        %v1892 = vpop.f32.mrb[0].mxu0
        %1893 = vdwg.mxu0
        %v1895 = vsel %vm1054, %v752, 0
        %v1898 = vsel %vm1054, %v1736, 0
        %1900 = vmatprep.subr.mxu0 0.0
        %1901 = vmatpush1.xpose.msra.mxu0 %v1898
        %1902 = vmatprep.subr.mxu0 0.0
        %1903 = vmatpush1.xpose.msra.mxu0 0.0
        %1904 = vmatprep.subr.mxu0 0.0
        %1905 = vmatpush1.xpose.msra.mxu0 0.0
        %1906 = vmatprep.subr.mxu0 0.0
        %1907 = vmatpush1.xpose.msra.mxu0 0.0
        %1908 = vmatprep.subr.mxu0 0.0
        %1909 = vmatpush1.xpose.msra.mxu0 0.0
        %1910 = vmatprep.subr.mxu0 0.0
        %1911 = vmatpush1.xpose.msra.mxu0 0.0
        %1912 = vmatprep.subr.mxu0 0.0
        %1913 = vmatpush1.xpose.msra.mxu0 0.0
        %1914 = vmatprep.subr.mxu0 0.0
        %1915 = vmatpush1.xpose.msra.mxu0 0.0
        %1916 = vmatprep.subr.mxu0 0.0
        %1917 = vmatpush1.xpose.msra.mxu0 0.0
        %1918 = vmatprep.subr.mxu0 0.0
        %1919 = vmatpush1.xpose.msra.mxu0 0.0
        %1920 = vmatprep.subr.mxu0 0.0
        %1921 = vmatpush1.xpose.msra.mxu0 0.0
        %1922 = vmatprep.subr.mxu0 0.0
        %1923 = vmatpush1.xpose.msra.mxu0 0.0
        %1924 = vmatprep.subr.mxu0 0.0
        %1925 = vmatpush1.xpose.msra.mxu0 0.0
        %1926 = vmatprep.subr.mxu0 0.0
        %1927 = vmatpush1.xpose.msra.mxu0 0.0
        %1928 = vmatprep.subr.mxu0 0.0
        %1929 = vmatpush1.xpose.msra.mxu0 0.0
        %1930 = vmatprep.subr.mxu0 0.0
        %1931 = vmatpush1.xpose.msra.mxu0 0.0
        %1932 = vmatprep.subr.mxu0 0.0
        %1933 = vmatpush1.xpose.msra.mxu0 0.0
        %1934 = vmatprep.subr.mxu0 0.0
        %1935 = vmatpush1.xpose.msra.mxu0 0.0
        %1936 = vmatprep.subr.mxu0 0.0
        %1937 = vmatpush1.xpose.msra.mxu0 0.0
        %1938 = vmatprep.subr.mxu0 0.0
        %1939 = vmatpush1.xpose.msra.mxu0 0.0
        %1940 = vmatprep.subr.mxu0 0.0
        %1941 = vmatpush1.xpose.msra.mxu0 0.0
        %1942 = vmatprep.subr.mxu0 0.0
        %1943 = vmatpush1.xpose.msra.mxu0 0.0
        %1944 = vmatprep.subr.mxu0 0.0
        %1945 = vmatpush1.xpose.msra.mxu0 0.0
        %1946 = vmatprep.subr.mxu0 0.0
        %1947 = vmatpush1.xpose.msra.mxu0 0.0
        %1948 = vmatprep.subr.mxu0 0.0
        %1949 = vmatpush1.xpose.msra.mxu0 0.0
        %1950 = vmatprep.subr.mxu0 0.0
        %1951 = vmatpush1.xpose.msra.mxu0 0.0
        %1952 = vmatprep.subr.mxu0 0.0
        %1953 = vmatpush1.xpose.msra.mxu0 0.0
        %1954 = vmatprep.subr.mxu0 0.0
        %1955 = vmatpush1.xpose.msra.mxu0 0.0
        %1956 = vmatprep.subr.mxu0 0.0
        %1957 = vmatpush1.xpose.msra.mxu0 0.0
        %1958 = vmatprep.subr.mxu0 0.0
        %1959 = vmatpush1.xpose.msra.mxu0 0.0
        %1960 = vmatprep.subr.mxu0 0.0
        %1961 = vmatpush1.xpose.msra.mxu0 0.0
        %1962 = vmatprep.subr.mxu0 0.0
        %1963 = vmatpush1.xpose.msra.mxu0 0.0
        %1964 = vmatprep.mubr.f32.mxu0 0.0
        %1965 = vmatmul.mubr.f32.gmra.mrb[0].mxu0 %v1895
        %v1966 = vpop.f32.mrb[0].mxu0
        %v1967 = vadd.f32 0.0, %v1966
        %v1968 = vpop.f32.mrb[0].mxu0
        %1969 = vdwg.mxu0
        %v1971 = vsel %vm1054, %v753, 0
        %v1974 = vsel %vm1054, %v1737, 0
        %1976 = vmatprep.subr.mxu0 0.0
        %1977 = vmatpush1.xpose.msra.mxu0 %v1974
        %1978 = vmatprep.subr.mxu0 0.0
        %1979 = vmatpush1.xpose.msra.mxu0 0.0
        %1980 = vmatprep.subr.mxu0 0.0
        %1981 = vmatpush1.xpose.msra.mxu0 0.0
        %1982 = vmatprep.subr.mxu0 0.0
        %1983 = vmatpush1.xpose.msra.mxu0 0.0
        %1984 = vmatprep.subr.mxu0 0.0
        %1985 = vmatpush1.xpose.msra.mxu0 0.0
        %1986 = vmatprep.subr.mxu0 0.0
        %1987 = vmatpush1.xpose.msra.mxu0 0.0
        %1988 = vmatprep.subr.mxu0 0.0
        %1989 = vmatpush1.xpose.msra.mxu0 0.0
        %1990 = vmatprep.subr.mxu0 0.0
        %1991 = vmatpush1.xpose.msra.mxu0 0.0
        %1992 = vmatprep.subr.mxu0 0.0
        %1993 = vmatpush1.xpose.msra.mxu0 0.0
        %1994 = vmatprep.subr.mxu0 0.0
        %1995 = vmatpush1.xpose.msra.mxu0 0.0
        %1996 = vmatprep.subr.mxu0 0.0
        %1997 = vmatpush1.xpose.msra.mxu0 0.0
        %1998 = vmatprep.subr.mxu0 0.0
        %1999 = vmatpush1.xpose.msra.mxu0 0.0
        %2000 = vmatprep.subr.mxu0 0.0
        %2001 = vmatpush1.xpose.msra.mxu0 0.0
        %2002 = vmatprep.subr.mxu0 0.0
        %2003 = vmatpush1.xpose.msra.mxu0 0.0
        %2004 = vmatprep.subr.mxu0 0.0
        %2005 = vmatpush1.xpose.msra.mxu0 0.0
        %2006 = vmatprep.subr.mxu0 0.0
        %2007 = vmatpush1.xpose.msra.mxu0 0.0
        %2008 = vmatprep.subr.mxu0 0.0
        %2009 = vmatpush1.xpose.msra.mxu0 0.0
        %2010 = vmatprep.subr.mxu0 0.0
        %2011 = vmatpush1.xpose.msra.mxu0 0.0
        %2012 = vmatprep.subr.mxu0 0.0
        %2013 = vmatpush1.xpose.msra.mxu0 0.0
        %2014 = vmatprep.subr.mxu0 0.0
        %2015 = vmatpush1.xpose.msra.mxu0 0.0
        %2016 = vmatprep.subr.mxu0 0.0
        %2017 = vmatpush1.xpose.msra.mxu0 0.0
        %2018 = vmatprep.subr.mxu0 0.0
        %2019 = vmatpush1.xpose.msra.mxu0 0.0
        %2020 = vmatprep.subr.mxu0 0.0
        %2021 = vmatpush1.xpose.msra.mxu0 0.0
        %2022 = vmatprep.subr.mxu0 0.0
        %2023 = vmatpush1.xpose.msra.mxu0 0.0
        %2024 = vmatprep.subr.mxu0 0.0
        %2025 = vmatpush1.xpose.msra.mxu0 0.0
        %2026 = vmatprep.subr.mxu0 0.0
        %2027 = vmatpush1.xpose.msra.mxu0 0.0
        %2028 = vmatprep.subr.mxu0 0.0
        %2029 = vmatpush1.xpose.msra.mxu0 0.0
        %2030 = vmatprep.subr.mxu0 0.0
        %2031 = vmatpush1.xpose.msra.mxu0 0.0
        %2032 = vmatprep.subr.mxu0 0.0
        %2033 = vmatpush1.xpose.msra.mxu0 0.0
        %2034 = vmatprep.subr.mxu0 0.0
        %2035 = vmatpush1.xpose.msra.mxu0 0.0
        %2036 = vmatprep.subr.mxu0 0.0
        %2037 = vmatpush1.xpose.msra.mxu0 0.0
        %2038 = vmatprep.subr.mxu0 0.0
        %2039 = vmatpush1.xpose.msra.mxu0 0.0
        %2040 = vmatprep.mubr.f32.mxu0 0.0
        %2041 = vmatmul.mubr.f32.gmra.mrb[0].mxu0 %v1971
        %v2042 = vpop.f32.mrb[0].mxu0
        %v2043 = vadd.f32 0.0, %v2042
        %v2044 = vpop.f32.mrb[0].mxu0
        %2045 = vdwg.mxu0
        %v2047 = vsel %vm1054, %v782, 0
        %v2050 = vsel %vm1054, %v1738, 0
        %2052 = vmatprep.subr.mxu0 0.0
        %2053 = vmatpush1.xpose.msra.mxu0 %v2050
        %2054 = vmatprep.subr.mxu0 0.0
        %2055 = vmatpush1.xpose.msra.mxu0 0.0
        %2056 = vmatprep.subr.mxu0 0.0
        %2057 = vmatpush1.xpose.msra.mxu0 0.0
        %2058 = vmatprep.subr.mxu0 0.0
        %2059 = vmatpush1.xpose.msra.mxu0 0.0
        %2060 = vmatprep.subr.mxu0 0.0
        %2061 = vmatpush1.xpose.msra.mxu0 0.0
        %2062 = vmatprep.subr.mxu0 0.0
        %2063 = vmatpush1.xpose.msra.mxu0 0.0
        %2064 = vmatprep.subr.mxu0 0.0
        %2065 = vmatpush1.xpose.msra.mxu0 0.0
        %2066 = vmatprep.subr.mxu0 0.0
        %2067 = vmatpush1.xpose.msra.mxu0 0.0
        %2068 = vmatprep.subr.mxu0 0.0
        %2069 = vmatpush1.xpose.msra.mxu0 0.0
        %2070 = vmatprep.subr.mxu0 0.0
        %2071 = vmatpush1.xpose.msra.mxu0 0.0
        %2072 = vmatprep.subr.mxu0 0.0
        %2073 = vmatpush1.xpose.msra.mxu0 0.0
        %2074 = vmatprep.subr.mxu0 0.0
        %2075 = vmatpush1.xpose.msra.mxu0 0.0
        %2076 = vmatprep.subr.mxu0 0.0
        %2077 = vmatpush1.xpose.msra.mxu0 0.0
        %2078 = vmatprep.subr.mxu0 0.0
        %2079 = vmatpush1.xpose.msra.mxu0 0.0
        %2080 = vmatprep.subr.mxu0 0.0
        %2081 = vmatpush1.xpose.msra.mxu0 0.0
        %2082 = vmatprep.subr.mxu0 0.0
        %2083 = vmatpush1.xpose.msra.mxu0 0.0
        %2084 = vmatprep.subr.mxu0 0.0
        %2085 = vmatpush1.xpose.msra.mxu0 0.0
        %2086 = vmatprep.subr.mxu0 0.0
        %2087 = vmatpush1.xpose.msra.mxu0 0.0
        %2088 = vmatprep.subr.mxu0 0.0
        %2089 = vmatpush1.xpose.msra.mxu0 0.0
        %2090 = vmatprep.subr.mxu0 0.0
        %2091 = vmatpush1.xpose.msra.mxu0 0.0
        %2092 = vmatprep.subr.mxu0 0.0
        %2093 = vmatpush1.xpose.msra.mxu0 0.0
        %2094 = vmatprep.subr.mxu0 0.0
        %2095 = vmatpush1.xpose.msra.mxu0 0.0
        %2096 = vmatprep.subr.mxu0 0.0
        %2097 = vmatpush1.xpose.msra.mxu0 0.0
        %2098 = vmatprep.subr.mxu0 0.0
        %2099 = vmatpush1.xpose.msra.mxu0 0.0
        %2100 = vmatprep.subr.mxu0 0.0
        %2101 = vmatpush1.xpose.msra.mxu0 0.0
        %2102 = vmatprep.subr.mxu0 0.0
        %2103 = vmatpush1.xpose.msra.mxu0 0.0
        %2104 = vmatprep.subr.mxu0 0.0
        %2105 = vmatpush1.xpose.msra.mxu0 0.0
        %2106 = vmatprep.subr.mxu0 0.0
        %2107 = vmatpush1.xpose.msra.mxu0 0.0
        %2108 = vmatprep.subr.mxu0 0.0
        %2109 = vmatpush1.xpose.msra.mxu0 0.0
        %2110 = vmatprep.subr.mxu0 0.0
        %2111 = vmatpush1.xpose.msra.mxu0 0.0
        %2112 = vmatprep.subr.mxu0 0.0
        %2113 = vmatpush1.xpose.msra.mxu0 0.0
        %2114 = vmatprep.subr.mxu0 0.0
        %2115 = vmatpush1.xpose.msra.mxu0 0.0
        %2116 = vmatprep.mubr.f32.mxu0 0.0
        %2117 = vmatmul.mubr.f32.gmra.mrb[0].mxu0 %v2047
        %v2118 = vpop.f32.mrb[0].mxu0
        %v2119 = vadd.f32 0.0, %v2118
        %v2120 = vpop.f32.mrb[0].mxu0
        %2121 = vdwg.mxu0
        %v2123 = vsel %vm1054, %v783, 0
        %v2126 = vsel %vm1054, %v1739, 0
        %2128 = vmatprep.subr.mxu0 0.0
        %2129 = vmatpush1.xpose.msra.mxu0 %v2126
        %2130 = vmatprep.subr.mxu0 0.0
        %2131 = vmatpush1.xpose.msra.mxu0 0.0
        %2132 = vmatprep.subr.mxu0 0.0
        %2133 = vmatpush1.xpose.msra.mxu0 0.0
        %2134 = vmatprep.subr.mxu0 0.0
        %2135 = vmatpush1.xpose.msra.mxu0 0.0
        %2136 = vmatprep.subr.mxu0 0.0
        %2137 = vmatpush1.xpose.msra.mxu0 0.0
        %2138 = vmatprep.subr.mxu0 0.0
        %2139 = vmatpush1.xpose.msra.mxu0 0.0
        %2140 = vmatprep.subr.mxu0 0.0
        %2141 = vmatpush1.xpose.msra.mxu0 0.0
        %2142 = vmatprep.subr.mxu0 0.0
        %2143 = vmatpush1.xpose.msra.mxu0 0.0
        %2144 = vmatprep.subr.mxu0 0.0
        %2145 = vmatpush1.xpose.msra.mxu0 0.0
        %2146 = vmatprep.subr.mxu0 0.0
        %2147 = vmatpush1.xpose.msra.mxu0 0.0
        %2148 = vmatprep.subr.mxu0 0.0
        %2149 = vmatpush1.xpose.msra.mxu0 0.0
        %2150 = vmatprep.subr.mxu0 0.0
        %2151 = vmatpush1.xpose.msra.mxu0 0.0
        %2152 = vmatprep.subr.mxu0 0.0
        %2153 = vmatpush1.xpose.msra.mxu0 0.0
        %2154 = vmatprep.subr.mxu0 0.0
        %2155 = vmatpush1.xpose.msra.mxu0 0.0
        %2156 = vmatprep.subr.mxu0 0.0
        %2157 = vmatpush1.xpose.msra.mxu0 0.0
        %2158 = vmatprep.subr.mxu0 0.0
        %2159 = vmatpush1.xpose.msra.mxu0 0.0
        %2160 = vmatprep.subr.mxu0 0.0
        %2161 = vmatpush1.xpose.msra.mxu0 0.0
        %2162 = vmatprep.subr.mxu0 0.0
        %2163 = vmatpush1.xpose.msra.mxu0 0.0
        %2164 = vmatprep.subr.mxu0 0.0
        %2165 = vmatpush1.xpose.msra.mxu0 0.0
        %2166 = vmatprep.subr.mxu0 0.0
        %2167 = vmatpush1.xpose.msra.mxu0 0.0
        %2168 = vmatprep.subr.mxu0 0.0
        %2169 = vmatpush1.xpose.msra.mxu0 0.0
        %2170 = vmatprep.subr.mxu0 0.0
        %2171 = vmatpush1.xpose.msra.mxu0 0.0
        %2172 = vmatprep.subr.mxu0 0.0
        %2173 = vmatpush1.xpose.msra.mxu0 0.0
        %2174 = vmatprep.subr.mxu0 0.0
        %2175 = vmatpush1.xpose.msra.mxu0 0.0
        %2176 = vmatprep.subr.mxu0 0.0
        %2177 = vmatpush1.xpose.msra.mxu0 0.0
        %2178 = vmatprep.subr.mxu0 0.0
        %2179 = vmatpush1.xpose.msra.mxu0 0.0
        %2180 = vmatprep.subr.mxu0 0.0
        %2181 = vmatpush1.xpose.msra.mxu0 0.0
        %2182 = vmatprep.subr.mxu0 0.0
        %2183 = vmatpush1.xpose.msra.mxu0 0.0
        %2184 = vmatprep.subr.mxu0 0.0
        %2185 = vmatpush1.xpose.msra.mxu0 0.0
        %2186 = vmatprep.subr.mxu0 0.0
        %2187 = vmatpush1.xpose.msra.mxu0 0.0
        %2188 = vmatprep.subr.mxu0 0.0
        %2189 = vmatpush1.xpose.msra.mxu0 0.0
        %2190 = vmatprep.subr.mxu0 0.0
        %2191 = vmatpush1.xpose.msra.mxu0 0.0
        %2192 = vmatprep.mubr.f32.mxu0 0.0
        %2193 = vmatmul.mubr.f32.gmra.mrb[0].mxu0 %v2123
        %v2194 = vpop.f32.mrb[0].mxu0
        %v2195 = vadd.f32 0.0, %v2194
        %v2196 = vpop.f32.mrb[0].mxu0
        %2197 = vdwg.mxu0
        %v2199 = vsel %vm1054, %v784, 0
        %v2202 = vsel %vm1054, %v1740, 0
        %2204 = vmatprep.subr.mxu0 0.0
        %2205 = vmatpush1.xpose.msra.mxu0 %v2202
        %2206 = vmatprep.subr.mxu0 0.0
        %2207 = vmatpush1.xpose.msra.mxu0 0.0
        %2208 = vmatprep.subr.mxu0 0.0
        %2209 = vmatpush1.xpose.msra.mxu0 0.0
        %2210 = vmatprep.subr.mxu0 0.0
        %2211 = vmatpush1.xpose.msra.mxu0 0.0
        %2212 = vmatprep.subr.mxu0 0.0
        %2213 = vmatpush1.xpose.msra.mxu0 0.0
        %2214 = vmatprep.subr.mxu0 0.0
        %2215 = vmatpush1.xpose.msra.mxu0 0.0
        %2216 = vmatprep.subr.mxu0 0.0
        %2217 = vmatpush1.xpose.msra.mxu0 0.0
        %2218 = vmatprep.subr.mxu0 0.0
        %2219 = vmatpush1.xpose.msra.mxu0 0.0
        %2220 = vmatprep.subr.mxu0 0.0
        %2221 = vmatpush1.xpose.msra.mxu0 0.0
        %2222 = vmatprep.subr.mxu0 0.0
        %2223 = vmatpush1.xpose.msra.mxu0 0.0
        %2224 = vmatprep.subr.mxu0 0.0
        %2225 = vmatpush1.xpose.msra.mxu0 0.0
        %2226 = vmatprep.subr.mxu0 0.0
        %2227 = vmatpush1.xpose.msra.mxu0 0.0
        %2228 = vmatprep.subr.mxu0 0.0
        %2229 = vmatpush1.xpose.msra.mxu0 0.0
        %2230 = vmatprep.subr.mxu0 0.0
        %2231 = vmatpush1.xpose.msra.mxu0 0.0
        %2232 = vmatprep.subr.mxu0 0.0
        %2233 = vmatpush1.xpose.msra.mxu0 0.0
        %2234 = vmatprep.subr.mxu0 0.0
        %2235 = vmatpush1.xpose.msra.mxu0 0.0
        %2236 = vmatprep.subr.mxu0 0.0
        %2237 = vmatpush1.xpose.msra.mxu0 0.0
        %2238 = vmatprep.subr.mxu0 0.0
        %2239 = vmatpush1.xpose.msra.mxu0 0.0
        %2240 = vmatprep.subr.mxu0 0.0
        %2241 = vmatpush1.xpose.msra.mxu0 0.0
        %2242 = vmatprep.subr.mxu0 0.0
        %2243 = vmatpush1.xpose.msra.mxu0 0.0
        %2244 = vmatprep.subr.mxu0 0.0
        %2245 = vmatpush1.xpose.msra.mxu0 0.0
        %2246 = vmatprep.subr.mxu0 0.0
        %2247 = vmatpush1.xpose.msra.mxu0 0.0
        %2248 = vmatprep.subr.mxu0 0.0
        %2249 = vmatpush1.xpose.msra.mxu0 0.0
        %2250 = vmatprep.subr.mxu0 0.0
        %2251 = vmatpush1.xpose.msra.mxu0 0.0
        %2252 = vmatprep.subr.mxu0 0.0
        %2253 = vmatpush1.xpose.msra.mxu0 0.0
        %2254 = vmatprep.subr.mxu0 0.0
        %2255 = vmatpush1.xpose.msra.mxu0 0.0
        %2256 = vmatprep.subr.mxu0 0.0
        %2257 = vmatpush1.xpose.msra.mxu0 0.0
        %2258 = vmatprep.subr.mxu0 0.0
        %2259 = vmatpush1.xpose.msra.mxu0 0.0
        %2260 = vmatprep.subr.mxu0 0.0
        %2261 = vmatpush1.xpose.msra.mxu0 0.0
        %2262 = vmatprep.subr.mxu0 0.0
        %2263 = vmatpush1.xpose.msra.mxu0 0.0
        %2264 = vmatprep.subr.mxu0 0.0
        %2265 = vmatpush1.xpose.msra.mxu0 0.0
        %2266 = vmatprep.subr.mxu0 0.0
        %2267 = vmatpush1.xpose.msra.mxu0 0.0
        %2268 = vmatprep.mubr.f32.mxu0 0.0
        %2269 = vmatmul.mubr.f32.gmra.mrb[0].mxu0 %v2199
        %v2270 = vpop.f32.mrb[0].mxu0
        %v2271 = vadd.f32 0.0, %v2270
        %v2272 = vpop.f32.mrb[0].mxu0
        %2273 = vdwg.mxu0
        %v2275 = vsel %vm1054, %v785, 0
        %v2278 = vsel %vm1054, %v1741, 0
        %2280 = vmatprep.subr.mxu0 0.0
        %2281 = vmatpush1.xpose.msra.mxu0 %v2278
        %2282 = vmatprep.subr.mxu0 0.0
        %2283 = vmatpush1.xpose.msra.mxu0 0.0
        %2284 = vmatprep.subr.mxu0 0.0
        %2285 = vmatpush1.xpose.msra.mxu0 0.0
        %2286 = vmatprep.subr.mxu0 0.0
        %2287 = vmatpush1.xpose.msra.mxu0 0.0
        %2288 = vmatprep.subr.mxu0 0.0
        %2289 = vmatpush1.xpose.msra.mxu0 0.0
        %2290 = vmatprep.subr.mxu0 0.0
        %2291 = vmatpush1.xpose.msra.mxu0 0.0
        %2292 = vmatprep.subr.mxu0 0.0
        %2293 = vmatpush1.xpose.msra.mxu0 0.0
        %2294 = vmatprep.subr.mxu0 0.0
        %2295 = vmatpush1.xpose.msra.mxu0 0.0
        %2296 = vmatprep.subr.mxu0 0.0
        %2297 = vmatpush1.xpose.msra.mxu0 0.0
        %2298 = vmatprep.subr.mxu0 0.0
        %2299 = vmatpush1.xpose.msra.mxu0 0.0
        %2300 = vmatprep.subr.mxu0 0.0
        %2301 = vmatpush1.xpose.msra.mxu0 0.0
        %2302 = vmatprep.subr.mxu0 0.0
        %2303 = vmatpush1.xpose.msra.mxu0 0.0
        %2304 = vmatprep.subr.mxu0 0.0
        %2305 = vmatpush1.xpose.msra.mxu0 0.0
        %2306 = vmatprep.subr.mxu0 0.0
        %2307 = vmatpush1.xpose.msra.mxu0 0.0
        %2308 = vmatprep.subr.mxu0 0.0
        %2309 = vmatpush1.xpose.msra.mxu0 0.0
        %2310 = vmatprep.subr.mxu0 0.0
        %2311 = vmatpush1.xpose.msra.mxu0 0.0
        %2312 = vmatprep.subr.mxu0 0.0
        %2313 = vmatpush1.xpose.msra.mxu0 0.0
        %2314 = vmatprep.subr.mxu0 0.0
        %2315 = vmatpush1.xpose.msra.mxu0 0.0
        %2316 = vmatprep.subr.mxu0 0.0
        %2317 = vmatpush1.xpose.msra.mxu0 0.0
        %2318 = vmatprep.subr.mxu0 0.0
        %2319 = vmatpush1.xpose.msra.mxu0 0.0
        %2320 = vmatprep.subr.mxu0 0.0
        %2321 = vmatpush1.xpose.msra.mxu0 0.0
        %2322 = vmatprep.subr.mxu0 0.0
        %2323 = vmatpush1.xpose.msra.mxu0 0.0
        %2324 = vmatprep.subr.mxu0 0.0
        %2325 = vmatpush1.xpose.msra.mxu0 0.0
        %2326 = vmatprep.subr.mxu0 0.0
        %2327 = vmatpush1.xpose.msra.mxu0 0.0
        %2328 = vmatprep.subr.mxu0 0.0
        %2329 = vmatpush1.xpose.msra.mxu0 0.0
        %2330 = vmatprep.subr.mxu0 0.0
        %2331 = vmatpush1.xpose.msra.mxu0 0.0
        %2332 = vmatprep.subr.mxu0 0.0
        %2333 = vmatpush1.xpose.msra.mxu0 0.0
        %2334 = vmatprep.subr.mxu0 0.0
        %2335 = vmatpush1.xpose.msra.mxu0 0.0
        %2336 = vmatprep.subr.mxu0 0.0
        %2337 = vmatpush1.xpose.msra.mxu0 0.0
        %2338 = vmatprep.subr.mxu0 0.0
        %2339 = vmatpush1.xpose.msra.mxu0 0.0
        %2340 = vmatprep.subr.mxu0 0.0
        %2341 = vmatpush1.xpose.msra.mxu0 0.0
        %2342 = vmatprep.subr.mxu0 0.0
        %2343 = vmatpush1.xpose.msra.mxu0 0.0
        %2344 = vmatprep.mubr.f32.mxu0 0.0
        %2345 = vmatmul.mubr.f32.gmra.mrb[0].mxu0 %v2275
        %v2346 = vpop.f32.mrb[0].mxu0
        %v2347 = vadd.f32 0.0, %v2346
        %v2348 = vpop.f32.mrb[0].mxu0
        %2349 = vdwg.mxu0
        %2350 = vxpose.xlu0.b32.start [1/16] %v1815, 128
        %2351 = vxpose.xlu0.b32.cont [2/16] %v1891, 128
        %2352 = vxpose.xlu0.b32.cont [3/16] %v1967, 128
        %2353 = vxpose.xlu0.b32.cont [4/16] %v2043, 128
        %2354 = vxpose.xlu0.b32.cont [5/16] 0.0, 128
        %2355 = vxpose.xlu0.b32.cont [6/16] 0.0, 128
        %2356 = vxpose.xlu0.b32.cont [7/16] 0.0, 128
        %2357 = vxpose.xlu0.b32.cont [8/16] 0.0, 128
        %2358 = vxpose.xlu0.b32.cont [9/16] 0.0, 128
        %2359 = vxpose.xlu0.b32.cont [10/16] 0.0, 128
        %2360 = vxpose.xlu0.b32.cont [11/16] 0.0, 128
        %2361 = vxpose.xlu0.b32.cont [12/16] 0.0, 128
        %2362 = vxpose.xlu0.b32.cont [13/16] 0.0, 128
        %2363 = vxpose.xlu0.b32.cont [14/16] 0.0, 128
        %2364 = vxpose.xlu0.b32.cont [15/16] 0.0, 128
        %2365 = vxpose.xlu0.b32.end [16/16] 0.0, 128
        %v2366 = vpop.trf.xlu0
        %v2367 = vpop.trf.xlu0
        %v2368 = vpop.trf.xlu0
        %v2369 = vpop.trf.xlu0
        %v2370 = vpop.trf.xlu0
        %v2371 = vpop.trf.xlu0
        %v2372 = vpop.trf.xlu0
        %v2373 = vpop.trf.xlu0
        %v2374 = vpop.trf.xlu0
        %v2375 = vpop.trf.xlu0
        %v2376 = vpop.trf.xlu0
        %v2377 = vpop.trf.xlu0
        %v2378 = vpop.trf.xlu0
        %v2379 = vpop.trf.xlu0
        %v2380 = vpop.trf.xlu0
        %v2381 = vpop.trf.xlu0
        %2382 = vxpose.xlu0.b32.start [1/16] %v2119, 128
        %2383 = vxpose.xlu0.b32.cont [2/16] %v2195, 128
        %2384 = vxpose.xlu0.b32.cont [3/16] %v2271, 128
        %2385 = vxpose.xlu0.b32.cont [4/16] %v2347, 128
        %2386 = vxpose.xlu0.b32.cont [5/16] 0.0, 128
        %2387 = vxpose.xlu0.b32.cont [6/16] 0.0, 128
        %2388 = vxpose.xlu0.b32.cont [7/16] 0.0, 128
        %2389 = vxpose.xlu0.b32.cont [8/16] 0.0, 128
        %2390 = vxpose.xlu0.b32.cont [9/16] 0.0, 128
        %2391 = vxpose.xlu0.b32.cont [10/16] 0.0, 128
        %2392 = vxpose.xlu0.b32.cont [11/16] 0.0, 128
        %2393 = vxpose.xlu0.b32.cont [12/16] 0.0, 128
        %2394 = vxpose.xlu0.b32.cont [13/16] 0.0, 128
        %2395 = vxpose.xlu0.b32.cont [14/16] 0.0, 128
        %2396 = vxpose.xlu0.b32.cont [15/16] 0.0, 128
        %2397 = vxpose.xlu0.b32.end [16/16] 0.0, 128
        %v2398 = vpop.trf.xlu0
        %v2399 = vpop.trf.xlu0
        %v2400 = vpop.trf.xlu0
        %v2401 = vpop.trf.xlu0
        %v2402 = vpop.trf.xlu0
        %v2403 = vpop.trf.xlu0
        %v2404 = vpop.trf.xlu0
        %v2405 = vpop.trf.xlu0
        %v2406 = vpop.trf.xlu0
        %v2407 = vpop.trf.xlu0
        %v2408 = vpop.trf.xlu0
        %v2409 = vpop.trf.xlu0
        %v2410 = vpop.trf.xlu0
        %v2411 = vpop.trf.xlu0
        %v2412 = vpop.trf.xlu0
        %v2413 = vpop.trf.xlu0
        %v2414 = vld [vmem:[%s406] sm:$0xff]
        %v2415 = vld [vmem:[%s406 + $0x8] sm:$0xff]
        %v2416 = vld [vmem:[%s406 + $0x10] sm:$0xff]
        %v2417 = vld [vmem:[%s406 + $0x18] sm:$0xff]
        %v2418 = vlaneseq
        %v2419 = vshrl.u32 %v2418, 7
        %v2420 = vsub.s32 5, %v2419
        %v2421 = vrot.slane %v437, %v2420
        %v2423 = vsel %vm439, %v2366, 0
        %v2426 = vsel %vm439, %v2398, 0
        %2428 = vmatprep.subr.mxu0 0.0
        %2429 = vmatpush1.msra.mxu0 %v2414
        %2430 = vmatprep.subr.mxu0 0.0
        %2431 = vmatpush1.msra.mxu0 %v2415
        %2432 = vmatprep.subr.mxu0 0.0
        %2433 = vmatpush1.msra.mxu0 %v2416
        %2434 = vmatprep.subr.mxu0 0.0
        %2435 = vmatpush1.msra.mxu0 %v2417
        %2436 = vmatprep.subr.mxu0 0.0
        %2437 = vmatpush1.msra.mxu0 0.0
        %2438 = vmatprep.subr.mxu0 0.0
        %2439 = vmatpush1.msra.mxu0 0.0
        %2440 = vmatprep.subr.mxu0 0.0
        %2441 = vmatpush1.msra.mxu0 0.0
        %2442 = vmatprep.subr.mxu0 0.0
        %2443 = vmatpush1.msra.mxu0 0.0
        %2444 = vmatprep.subr.mxu0 0.0
        %2445 = vmatpush1.msra.mxu0 0.0
        %2446 = vmatprep.subr.mxu0 0.0
        %2447 = vmatpush1.msra.mxu0 0.0
        %2448 = vmatprep.subr.mxu0 0.0
        %2449 = vmatpush1.msra.mxu0 0.0
        %2450 = vmatprep.subr.mxu0 0.0
        %2451 = vmatpush1.msra.mxu0 0.0
        %2452 = vmatprep.subr.mxu0 0.0
        %2453 = vmatpush1.msra.mxu0 0.0
        %2454 = vmatprep.subr.mxu0 0.0
        %2455 = vmatpush1.msra.mxu0 0.0
        %2456 = vmatprep.subr.mxu0 0.0
        %2457 = vmatpush1.msra.mxu0 0.0
        %2458 = vmatprep.subr.mxu0 0.0
        %2459 = vmatpush1.msra.mxu0 0.0
        %2460 = vmatprep.subr.mxu0 0.0
        %2461 = vmatpush1.msra.mxu0 0.0
        %2462 = vmatprep.subr.mxu0 0.0
        %2463 = vmatpush1.msra.mxu0 0.0
        %2464 = vmatprep.subr.mxu0 0.0
        %2465 = vmatpush1.msra.mxu0 0.0
        %2466 = vmatprep.subr.mxu0 0.0
        %2467 = vmatpush1.msra.mxu0 0.0
        %2468 = vmatprep.subr.mxu0 0.0
        %2469 = vmatpush1.msra.mxu0 0.0
        %2470 = vmatprep.subr.mxu0 0.0
        %2471 = vmatpush1.msra.mxu0 0.0
        %2472 = vmatprep.subr.mxu0 0.0
        %2473 = vmatpush1.msra.mxu0 0.0
        %2474 = vmatprep.subr.mxu0 0.0
        %2475 = vmatpush1.msra.mxu0 0.0
        %2476 = vmatprep.subr.mxu0 0.0
        %2477 = vmatpush1.msra.mxu0 0.0
        %2478 = vmatprep.subr.mxu0 0.0
        %2479 = vmatpush1.msra.mxu0 0.0
        %2480 = vmatprep.subr.mxu0 0.0
        %2481 = vmatpush1.msra.mxu0 0.0
        %2482 = vmatprep.subr.mxu0 0.0
        %2483 = vmatpush1.msra.mxu0 0.0
        %2484 = vmatprep.subr.mxu0 0.0
        %2485 = vmatpush1.msra.mxu0 0.0
        %2486 = vmatprep.subr.mxu0 0.0
        %2487 = vmatpush1.msra.mxu0 0.0
        %2488 = vmatprep.subr.mxu0 0.0
        %2489 = vmatpush1.msra.mxu0 0.0
        %2490 = vmatprep.subr.mxu0 0.0
        %2491 = vmatpush1.msra.mxu0 0.0
        %2492 = vmatprep.mubr.f32.mxu0 0.0
        %2493 = vmatmul.mubr.f32.gmra.mrb[0].mxu0 %v2423
        %v2494 = vpop.f32.mrb[0].mxu0
        %v2495 = vadd.f32 %v2421, %v2494
        %v2496 = vpop.f32.mrb[0].mxu0
        %2497 = vmatprep.mubr.f32.mxu0 0.0
        %2498 = vmatmul.mubr.f32.gmra.mrb[0].mxu0 %v2426
        %v2499 = vpop.f32.mrb[0].mxu0
        %v2500 = vadd.f32 %v2421, %v2499
        %v2501 = vpop.f32.mrb[0].mxu0
        %2502 = vdwg.mxu0
        %v2503 = vadd.f32 %v435, %v2495
        %v2504 = vadd.f32 %v436, %v2500
        %v2505 = vsel %vm439, %v2503, 0.0
        %2506 = vadd.xlane.f32.xlu0 %v2505
        %v2507 = vpop.xlane.xlu0 %2506
        %v2508 = vsel %vm439, %v2504, 0.0
        %2509 = vadd.xlane.f32.xlu0 %v2508
        %v2510 = vpop.xlane.xlu0 %2509
        %v2511 = vmul.f32 %v2507, %v446
        %v2512 = vmul.f32 %v2510, %v446
        %v2513 = vsub.f32 %v2503, %v2511
        %v2514 = vsub.f32 %v2504, %v2512
        %v2515 = vmul.f32 %v2513, %v2513
        %v2516 = vmul.f32 %v2514, %v2514
        %v2517 = vsel %vm439, %v2515, 0.0
        %2518 = vadd.xlane.f32.xlu0 %v2517
        %v2519 = vpop.xlane.xlu0 %2518
        %v2520 = vsel %vm439, %v2516, 0.0
        %2521 = vadd.xlane.f32.xlu0 %v2520
        %v2522 = vpop.xlane.xlu0 %2521
        %v2523 = vmul.f32 %v2519, %v446
        %v2524 = vmul.f32 %v2522, %v446
        %v2525 = vadd.f32 %v2523, 1e-05
        %v2526 = vadd.f32 %v2524, 1e-05
        %v2527 = vrsqrt.pop %v2525
        %v2528 = vrsqrt.pop %v2526
        %v2529 = vmul.f32 %v2513, %v2527
        %v2530 = vmul.f32 %v2514, %v2528
        %v2531 = vlaneseq
        %v2532 = vshrl.u32 %v2531, 7
        %v2533 = vsub.s32 6, %v2532
        %v2534 = vrot.slane %v437, %v2533
        %v2535 = vmul.f32 %v2529, %v2534
        %v2536 = vmul.f32 %v2530, %v2534
        %v2537 = vlaneseq
        %v2538 = vshrl.u32 %v2537, 7
        %v2539 = vsub.s32 7, %v2538
        %v2540 = vrot.slane %v437, %v2539
        %v2541 = vadd.f32 %v2535, %v2540
        %v2542 = vadd.f32 %v2536, %v2540
        %v2543 = vld [vmem:[%s411] sm:$0xff]
        %v2544 = vld [vmem:[%s411 + $0x8] sm:$0xff]
        %v2545 = vld [vmem:[%s411 + $0x10] sm:$0xff]
        %v2546 = vld [vmem:[%s411 + $0x18] sm:$0xff]
        %v2547 = vld [vmem:[%s424] sm:$0x1]
        %v2549 = vlaneseq
        %v2550 = vshrl.u32 %v2549, 7
        %v2551 = vsub.s32 0, %v2550
        %v2552 = vrot.slane %v2547, %v2551
        %v2555 = vsel %vm439, %v2541, 0
        %v2558 = vsel %vm439, %v2542, 0
        %2560 = vmatprep.subr.mxu0 0.0
        %2561 = vmatpush1.msra.mxu0 %v2543
        %2562 = vmatprep.subr.mxu0 0.0
        %2563 = vmatpush1.msra.mxu0 %v2544
        %2564 = vmatprep.subr.mxu0 0.0
        %2565 = vmatpush1.msra.mxu0 %v2545
        %2566 = vmatprep.subr.mxu0 0.0
        %2567 = vmatpush1.msra.mxu0 %v2546
        %2568 = vmatprep.subr.mxu0 0.0
        %2569 = vmatpush1.msra.mxu0 0.0
        %2570 = vmatprep.subr.mxu0 0.0
        %2571 = vmatpush1.msra.mxu0 0.0
        %2572 = vmatprep.subr.mxu0 0.0
        %2573 = vmatpush1.msra.mxu0 0.0
        %2574 = vmatprep.subr.mxu0 0.0
        %2575 = vmatpush1.msra.mxu0 0.0
        %2576 = vmatprep.subr.mxu0 0.0
        %2577 = vmatpush1.msra.mxu0 0.0
        %2578 = vmatprep.subr.mxu0 0.0
        %2579 = vmatpush1.msra.mxu0 0.0
        %2580 = vmatprep.subr.mxu0 0.0
        %2581 = vmatpush1.msra.mxu0 0.0
        %2582 = vmatprep.subr.mxu0 0.0
        %2583 = vmatpush1.msra.mxu0 0.0
        %2584 = vmatprep.subr.mxu0 0.0
        %2585 = vmatpush1.msra.mxu0 0.0
        %2586 = vmatprep.subr.mxu0 0.0
        %2587 = vmatpush1.msra.mxu0 0.0
        %2588 = vmatprep.subr.mxu0 0.0
        %2589 = vmatpush1.msra.mxu0 0.0
        %2590 = vmatprep.subr.mxu0 0.0
        %2591 = vmatpush1.msra.mxu0 0.0
        %2592 = vmatprep.subr.mxu0 0.0
        %2593 = vmatpush1.msra.mxu0 0.0
        %2594 = vmatprep.subr.mxu0 0.0
        %2595 = vmatpush1.msra.mxu0 0.0
        %2596 = vmatprep.subr.mxu0 0.0
        %2597 = vmatpush1.msra.mxu0 0.0
        %2598 = vmatprep.subr.mxu0 0.0
        %2599 = vmatpush1.msra.mxu0 0.0
        %2600 = vmatprep.subr.mxu0 0.0
        %2601 = vmatpush1.msra.mxu0 0.0
        %2602 = vmatprep.subr.mxu0 0.0
        %2603 = vmatpush1.msra.mxu0 0.0
        %2604 = vmatprep.subr.mxu0 0.0
        %2605 = vmatpush1.msra.mxu0 0.0
        %2606 = vmatprep.subr.mxu0 0.0
        %2607 = vmatpush1.msra.mxu0 0.0
        %2608 = vmatprep.subr.mxu0 0.0
        %2609 = vmatpush1.msra.mxu0 0.0
        %2610 = vmatprep.subr.mxu0 0.0
        %2611 = vmatpush1.msra.mxu0 0.0
        %2612 = vmatprep.subr.mxu0 0.0
        %2613 = vmatpush1.msra.mxu0 0.0
        %2614 = vmatprep.subr.mxu0 0.0
        %2615 = vmatpush1.msra.mxu0 0.0
        %2616 = vmatprep.subr.mxu0 0.0
        %2617 = vmatpush1.msra.mxu0 0.0
        %2618 = vmatprep.subr.mxu0 0.0
        %2619 = vmatpush1.msra.mxu0 0.0
        %2620 = vmatprep.subr.mxu0 0.0
        %2621 = vmatpush1.msra.mxu0 0.0
        %2622 = vmatprep.subr.mxu0 0.0
        %2623 = vmatpush1.msra.mxu0 0.0
        %2624 = vmatprep.mubr.f32.mxu0 0.0
        %2625 = vmatmul.mubr.f32.gmra.mrb[0].mxu0 %v2555
        %v2626 = vpop.f32.mrb[0].mxu0
        %v2627 = vadd.f32 %v2552, %v2626
        %v2628 = vpop.f32.mrb[0].mxu0
        %2629 = vmatprep.mubr.f32.mxu0 0.0
        %2630 = vmatmul.mubr.f32.gmra.mrb[0].mxu0 %v2558
        %v2631 = vpop.f32.mrb[0].mxu0
        %v2632 = vadd.f32 %v2552, %v2631
        %v2633 = vpop.f32.mrb[0].mxu0
        %2634 = vdwg.mxu0
        %v2635 = vmul.f32 %v2627, 1.702
        %v2636 = vmul.f32 %v2632, 1.702
        %v2637 = vxor.u32 %v2635, 2147483648
        %v2638 = vxor.u32 %v2636, 2147483648
        %v2639 = vmul.f32 %v2637, 1.442695
        %v2640 = vpow.pop %v2639
        %v2641 = vmul.f32 %v2638, 1.442695
        %v2642 = vpow.pop %v2641
        %v2643 = vadd.f32 %v2640, 1.0
        %v2644 = vadd.f32 %v2642, 1.0
        %v2645 = vrcp.pop %v2643
        %v2646 = vmul.f32 1.0, %v2645
        %v2647 = vrcp.pop %v2644
        %v2648 = vmul.f32 1.0, %v2647
        %v2649 = vmul.f32 %v2627, %v2646
        %v2650 = vmul.f32 %v2632, %v2648
        %v2651 = vld [vmem:[%s416] sm:$0xff]
        %v2652 = vld [vmem:[%s416 + $0x8] sm:$0xff]
        %v2653 = vld [vmem:[%s416 + $0x10] sm:$0xff]
        %v2654 = vld [vmem:[%s416 + $0x18] sm:$0xff]
        %v2655 = vld [vmem:[%s416 + $0x20] sm:$0xff]
        %v2656 = vld [vmem:[%s416 + $0x28] sm:$0xff]
        %v2657 = vld [vmem:[%s416 + $0x30] sm:$0xff]
        %v2658 = vld [vmem:[%s416 + $0x38] sm:$0xff]
        %v2659 = vld [vmem:[%s416 + $0x40] sm:$0xff]
        %v2660 = vld [vmem:[%s416 + $0x48] sm:$0xff]
        %v2661 = vld [vmem:[%s416 + $0x50] sm:$0xff]
        %v2662 = vld [vmem:[%s416 + $0x58] sm:$0xff]
        %v2663 = vld [vmem:[%s416 + $0x60] sm:$0xff]
        %v2664 = vld [vmem:[%s416 + $0x68] sm:$0xff]
        %v2665 = vld [vmem:[%s416 + $0x70] sm:$0xff]
        %v2666 = vld [vmem:[%s416 + $0x78] sm:$0xff]
        %v2667 = vlaneseq
        %v2668 = vshrl.u32 %v2667, 7
        %v2669 = vsub.s32 0, %v2668
        %v2670 = vrot.slane %v438, %v2669
        %2671 = vmatprep.subr.mxu0 0.0
        %2672 = vmatpush1.msra.mxu0 %v2651
        %2673 = vmatprep.subr.mxu0 0.0
        %2674 = vmatpush1.msra.mxu0 %v2652
        %2675 = vmatprep.subr.mxu0 0.0
        %2676 = vmatpush1.msra.mxu0 %v2653
        %2677 = vmatprep.subr.mxu0 0.0
        %2678 = vmatpush1.msra.mxu0 %v2654
        %2679 = vmatprep.subr.mxu0 0.0
        %2680 = vmatpush1.msra.mxu0 %v2655
        %2681 = vmatprep.subr.mxu0 0.0
        %2682 = vmatpush1.msra.mxu0 %v2656
        %2683 = vmatprep.subr.mxu0 0.0
        %2684 = vmatpush1.msra.mxu0 %v2657
        %2685 = vmatprep.subr.mxu0 0.0
        %2686 = vmatpush1.msra.mxu0 %v2658
        %2687 = vmatprep.subr.mxu0 0.0
        %2688 = vmatpush1.msra.mxu0 %v2659
        %2689 = vmatprep.subr.mxu0 0.0
        %2690 = vmatpush1.msra.mxu0 %v2660
        %2691 = vmatprep.subr.mxu0 0.0
        %2692 = vmatpush1.msra.mxu0 %v2661
        %2693 = vmatprep.subr.mxu0 0.0
        %2694 = vmatpush1.msra.mxu0 %v2662
        %2695 = vmatprep.subr.mxu0 0.0
        %2696 = vmatpush1.msra.mxu0 %v2663
        %2697 = vmatprep.subr.mxu0 0.0
        %2698 = vmatpush1.msra.mxu0 %v2664
        %2699 = vmatprep.subr.mxu0 0.0
        %2700 = vmatpush1.msra.mxu0 %v2665
        %2701 = vmatprep.subr.mxu0 0.0
        %2702 = vmatpush1.msra.mxu0 %v2666
        %2703 = vmatprep.subr.mxu0 0.0
        %2704 = vmatpush1.msra.mxu0 0.0
        %2705 = vmatprep.subr.mxu0 0.0
        %2706 = vmatpush1.msra.mxu0 0.0
        %2707 = vmatprep.subr.mxu0 0.0
        %2708 = vmatpush1.msra.mxu0 0.0
        %2709 = vmatprep.subr.mxu0 0.0
        %2710 = vmatpush1.msra.mxu0 0.0
        %2711 = vmatprep.subr.mxu0 0.0
        %2712 = vmatpush1.msra.mxu0 0.0
        %2713 = vmatprep.subr.mxu0 0.0
        %2714 = vmatpush1.msra.mxu0 0.0
        %2715 = vmatprep.subr.mxu0 0.0
        %2716 = vmatpush1.msra.mxu0 0.0
        %2717 = vmatprep.subr.mxu0 0.0
        %2718 = vmatpush1.msra.mxu0 0.0
        %2719 = vmatprep.subr.mxu0 0.0
        %2720 = vmatpush1.msra.mxu0 0.0
        %2721 = vmatprep.subr.mxu0 0.0
        %2722 = vmatpush1.msra.mxu0 0.0
        %2723 = vmatprep.subr.mxu0 0.0
        %2724 = vmatpush1.msra.mxu0 0.0
        %2725 = vmatprep.subr.mxu0 0.0
        %2726 = vmatpush1.msra.mxu0 0.0
        %2727 = vmatprep.subr.mxu0 0.0
        %2728 = vmatpush1.msra.mxu0 0.0
        %2729 = vmatprep.subr.mxu0 0.0
        %2730 = vmatpush1.msra.mxu0 0.0
        %2731 = vmatprep.subr.mxu0 0.0
        %2732 = vmatpush1.msra.mxu0 0.0
        %2733 = vmatprep.subr.mxu0 0.0
        %2734 = vmatpush1.msra.mxu0 0.0
        %2735 = vmatprep.mubr.f32.mxu0 0.0
        %2736 = vmatmul.mubr.f32.gmra.mrb[0].mxu0 %v2649
        %v2737 = vpop.f32.mrb[0].mxu0
        %v2738 = vadd.f32 %v2670, %v2737
        %v2739 = vpop.f32.mrb[0].mxu0
        %2740 = vmatprep.mubr.f32.mxu0 0.0
        %2741 = vmatmul.mubr.f32.gmra.mrb[0].mxu0 %v2650
        %v2742 = vpop.f32.mrb[0].mxu0
        %v2743 = vadd.f32 %v2670, %v2742
        %v2744 = vpop.f32.mrb[0].mxu0
        %2745 = vdwg.mxu0
        %v2746 = vadd.f32 %v2503, %v2738
        %v2747 = vadd.f32 %v2504, %v2743
        %p2748 = scmp.lt.s32.totalorder %s25, 1
        // Predicated region
        $region57: #{tpu_custom_call.1} parent=51 // pred_check
          %p2749 = pneg %p2748
        $region58: #{tpu_custom_call.1} parent=51 // pred_check_branch
          %2751 = sbr.rel (%p2749) target = $region60
        $region59: #{tpu_custom_call.1} parent=51 // pred_region
          %2752 = vst.msk [vmem:[#allocation2] sm:$0xff] %vm439, %v2746
          %2753 = vst.msk [vmem:[#allocation2 + $0x8] sm:$0xff] %vm439, %v2747
        $region60: #{tpu_custom_call.1} parent=51 // pred_fallthru
          _
        %p2754 = scmp.eq.s32.totalorder %s25, 1
        // Predicated region
        $region61: #{tpu_custom_call.1} parent=51 // pred_check
          %p2755 = pneg %p2754
        $region62: #{tpu_custom_call.1} parent=51 // pred_check_branch
          %2757 = sbr.rel (%p2755) target = $region64
        $region63: #{tpu_custom_call.1} parent=51 // pred_region
          %v2758 = vld [vmem:[%s7] sm:$0x1]
          %v2759 = vld [vmem:[%s7 + $0x1] sm:$0x1]
          %v2760 = vsel %vm439, %v2746, 0.0
          %2761 = vadd.xlane.f32.xlu0 %v2760
          %v2762 = vpop.xlane.xlu0 %2761
          %v2763 = vsel %vm439, %v2747, 0.0
          %2764 = vadd.xlane.f32.xlu0 %v2763
          %v2765 = vpop.xlane.xlu0 %2764
          %v2766 = vmul.f32 %v2762, %v446
          %v2767 = vmul.f32 %v2765, %v446
          %v2768 = vsub.f32 %v2746, %v2766
          %v2769 = vsub.f32 %v2747, %v2767
          %v2770 = vmul.f32 %v2768, %v2768
          %v2771 = vmul.f32 %v2769, %v2769
          %v2772 = vsel %vm439, %v2770, 0.0
          %2773 = vadd.xlane.f32.xlu0 %v2772
          %v2774 = vpop.xlane.xlu0 %2773
          %v2775 = vsel %vm439, %v2771, 0.0
          %2776 = vadd.xlane.f32.xlu0 %v2775
          %v2777 = vpop.xlane.xlu0 %2776
          %v2778 = vmul.f32 %v2774, %v446
          %v2779 = vmul.f32 %v2777, %v446
          %v2780 = vadd.f32 %v2778, 1e-05
          %v2781 = vadd.f32 %v2779, 1e-05
          %v2782 = vrsqrt.pop %v2780
          %v2783 = vrsqrt.pop %v2781
          %v2784 = vmul.f32 %v2768, %v2782
          %v2785 = vmul.f32 %v2769, %v2783
          %v2786 = vlaneseq
          %v2787 = vshrl.u32 %v2786, 7
          %v2788 = vsub.s32 0, %v2787
          %v2789 = vrot.slane %v2758, %v2788
          %v2790 = vmul.f32 %v2784, %v2789
          %v2791 = vmul.f32 %v2785, %v2789
          %v2792 = vlaneseq
          %v2793 = vshrl.u32 %v2792, 7
          %v2794 = vsub.s32 0, %v2793
          %v2795 = vrot.slane %v2759, %v2794
          %v2796 = vadd.f32 %v2790, %v2795
          %v2797 = vadd.f32 %v2791, %v2795
          %2798 = vst.msk [vmem:[#allocation2] sm:$0xff] %vm439, %v2796
          %2799 = vst.msk [vmem:[#allocation2 + $0x8] sm:$0xff] %vm439, %v2797
        $region64: #{tpu_custom_call.1} parent=51 // pred_fallthru
          _
        // Predicated region
        $region65: #{tpu_custom_call.1} parent=51 // pred_check
          %p2800 = pneg %p253
        $region66: #{tpu_custom_call.1} parent=51 // pred_check_branch
          %2802 = sbr.rel (%p2800) target = $region68
        $region67: #{tpu_custom_call.1} parent=51 // pred_region
          %s2803 = smul.u32 2, %s24
          %s2805 = ssub.s32 256, 256
          %2806 = vsyncadd [#allocation3], %s2805
          %s2807 = smul.addr %s2803, 128
          %s2808 = scalar_lea.hbm %s8, %s2807
          %s2809 = sshll.u32 [#allocation2], 4
          %s2810 = int_to_ptr.vmem [resolvable:$true] %s2809
          %2815 = dma.vmem_to_hbm [thread:$0]  %s2810, 256, %s2808, [#allocation3], 128, 128, 8
        $region68: #{tpu_custom_call.1} parent=51 // pred_fallthru
          _
        // Predicated region
        $region69: #{tpu_custom_call.1} parent=51 // pred_check
          %p2816 = pneg %p253
        $region70: #{tpu_custom_call.1} parent=51 // pred_check_branch
          %2818 = sbr.rel (%p2816) target = $region72
        $region71: #{tpu_custom_call.1} parent=51 // pred_region
          %2819 = dma.done [#allocation3], 256
        $region72: #{tpu_custom_call.1} parent=51 // pred_fallthru
          _
      $region52: #{tpu_custom_call.1} parent=5 // pred_fallthru
        _
      %p2820 = scmp.le.s32.totalorder 2, %s15
      // Predicated region
      $region73: #{tpu_custom_call.1} parent=5 // pred_check
        %p2821 = pneg %p2820
      $region74: #{tpu_custom_call.1} parent=5 // pred_check_branch
        %2823 = sbr.rel (%p2821) target = $region76
      $region75: #{tpu_custom_call.1} parent=5 // pred_region
        %s2824 = ssub.s32 %s15, 2
      $region76: #{tpu_custom_call.1} parent=5 // pred_fallthru
        _
    $region6: #{tpu_custom_call.1} parent=1 // loop_footer
      %s19 = sadd.s32 1, %s15
    $region7: #{tpu_custom_call.1} parent=1 // loop_footer_branch
      %14 = sbr.rel target = $region3
    $region8: #{tpu_custom_call.1} parent=1 // loop_exit
      _
    %2825 = vsyncpa [#allocation3], 1
    %s2826 = scalar_lea.sflag [#allocation3], 1
    %2827 = vsyncpa %s2826, 1

</llo_original>
